<compile_context>
chip_gen: v6e
topology: v6e:2x2x1
jax: 0.10.0
libtpu: 0.0.40
codegen_flags: <defaults>
</compile_context>

<pallas_src>
import jax
import jax.numpy as jnp
from jax.experimental import pallas as pl
from jax.experimental.pallas import tpu as pltpu


PAD = 128   # lane-dense width for input / hidden (32) / classes (10)
HID = 512   # internal-classifier & end hidden width (already lane-dense)


# ----------------------------------------------------------------------------
# Parameter construction (deterministic, matches module __init__ / init_weights)
# ----------------------------------------------------------------------------
def init_params(key, input_size, in_channels, num_classes, add_ic):
    eps = 1e-5

    def linear(k, f_in, f_out):
        # initialize_weights: weight ~ N(0, 0.01), bias = 0. Stored (f_in, f_out).
        w = 0.01 * jax.random.normal(k, (f_in, f_out), jnp.float32)
        b = jnp.zeros((f_out,), jnp.float32)
        return w, b

    keys = iter(jax.random.split(key, 64))
    layers = []
    for layer_id, add_output in enumerate(add_ic):
        f_in = input_size if layer_id == 0 else in_channels
        w, b = linear(next(keys), f_in, in_channels)
        # BatchNorm1d eval-mode, default parameters (not touched by init_weights)
        gamma = jnp.ones((in_channels,), jnp.float32)
        beta = jnp.zeros((in_channels,), jnp.float32)
        running_mean = jnp.zeros((in_channels,), jnp.float32)
        running_var = jnp.ones((in_channels,), jnp.float32)
        bn_scale = gamma / jnp.sqrt(running_var + eps)
        bn_shift = beta - running_mean * bn_scale
        w_f = w * bn_scale[None, :]            # folded weight
        s_f = b * bn_scale + bn_shift          # folded shift (C,)
        ic = None
        if add_output:
            w1, b1 = linear(next(keys), in_channels, HID)
            w2, b2 = linear(next(keys), HID, num_classes)
            ic = dict(w1=w1, b1=b1, w2=w2, b2=b2)
        layers.append(dict(w=w, b=b, bn_scale=bn_scale, bn_shift=bn_shift,
                           w_f=w_f, s_f=s_f, ic=ic))

    ew1, eb1 = linear(next(keys), in_channels, in_channels)
    ew2, eb2 = linear(next(keys), in_channels, HID)
    ew3, eb3 = linear(next(keys), HID, num_classes)
    end = dict(w1=ew1, b1=eb1, w2=ew2, b2=eb2, w3=ew3, b3=eb3)
    return dict(layers=layers, end=end)


# ----------------------------------------------------------------------------
# Fused forward pass: one pallas_call, batch-gridded, weights VMEM-resident
# ----------------------------------------------------------------------------
def _pad2(a, rows, cols):
    out = jnp.zeros((rows, cols), jnp.float32)
    return out.at[: a.shape[0], : a.shape[1]].set(a)


def _pad1(v, n):
    return jnp.zeros((n,), jnp.float32).at[: v.shape[0]].set(v)


def build_fused_forward(params, num_classes, tb=256):
    assert num_classes <= PAD

    wblk_list, b128_list, w512_list, b512_list, whead_list = [], [], [], [], []
    plan = []                                   # static per-block schedule
    for layer in params["layers"]:
        wi = len(wblk_list); wblk_list.append(_pad2(layer["w_f"], PAD, PAD))
        bi = len(b128_list); b128_list.append(_pad1(layer["s_f"], PAD))
        ic_idx = None
        if layer["ic"] is not None:
            ic = layer["ic"]
            i1 = len(w512_list); w512_list.append(_pad2(ic["w1"], PAD, HID))
            j1 = len(b512_list); b512_list.append(_pad1(ic["b1"], HID))
            i2 = len(whead_list); whead_list.append(_pad2(ic["w2"], HID, PAD))
            j2 = len(b128_list); b128_list.append(_pad1(ic["b2"], PAD))
            ic_idx = (i1, j1, i2, j2)
        plan.append((wi, bi, ic_idx))

    e = params["end"]
    ew1 = len(wblk_list); wblk_list.append(_pad2(e["w1"], PAD, PAD))
    eb1 = len(b128_list); b128_list.append(_pad1(e["b1"], PAD))
    ew2 = len(w512_list); w512_list.append(_pad2(e["w2"], PAD, HID))
    eb2 = len(b512_list); b512_list.append(_pad1(e["b2"], HID))
    ew3 = len(whead_list); whead_list.append(_pad2(e["w3"], HID, PAD))
    eb3 = len(b128_list); b128_list.append(_pad1(e["b3"], PAD))
    end_idx = (ew1, eb1, ew2, eb2, ew3, eb3)

    # Consolidated, stacked operands (bf16 for MXU inputs, f32 biases/shifts).
    wblk = jnp.stack(wblk_list).astype(jnp.bfloat16)    # (L+1, 128, 128)
    b128 = jnp.stack(b128_list).astype(jnp.float32)     # (N128, 128)
    w512 = jnp.stack(w512_list).astype(jnp.bfloat16)    # (K1, 128, 512)
    b512 = jnp.stack(b512_list).astype(jnp.float32)     # (K1, 512)
    whead = jnp.stack(whead_list).astype(jnp.bfloat16)  # (K2, 512, 128)

    num_outputs = sum(1 for p in plan if p[2] is not None) + 1

    def kernel(x_ref, wblk_ref, b128_ref, w512_ref, b512_ref, whead_ref, out_ref):
        # mm: bf16 MXU matmul, f32 accumulation, f32 bias-add (+ optional ReLU).
        def mm(x_bf, w_bf, bias, relu=False):
            y = jnp.dot(x_bf, w_bf, preferred_element_type=jnp.float32)
            y = y + bias
            if relu:
                y = jnp.maximum(y, 0.0)
            return y

        fwd = x_ref[...]                                    # (TB, 128) bf16
        slot = 0
        # Static Python unroll over the whole network.
        for wi, bi, ic_idx in plan:
            # Linear + folded BatchNorm1d + ReLU
            fwd = mm(fwd, wblk_ref[wi], b128_ref[pl.ds(bi, 1), :],
                     relu=True).astype(jnp.bfloat16)
            if ic_idx is not None:
                # internal classifier: Linear -> Dropout(identity) -> Linear
                i1, j1, i2, j2 = ic_idx
                h = mm(fwd, w512_ref[i1], b512_ref[pl.ds(j1, 1), :]
                       ).astype(jnp.bfloat16)
                out_ref[slot] = mm(h, whead_ref[i2],
                                   b128_ref[pl.ds(j2, 1), :]).astype(out_ref.dtype)
                slot += 1
        # end layers: Linear -> Dropout -> Linear -> Dropout -> Linear
        h = mm(fwd, wblk_ref[end_idx[0]],
               b128_ref[pl.ds(end_idx[1], 1), :]).astype(jnp.bfloat16)
        h = mm(h, w512_ref[end_idx[2]],
               b512_ref[pl.ds(end_idx[3], 1), :]).astype(jnp.bfloat16)
        out_ref[slot] = mm(h, whead_ref[end_idx[4]],
                           b128_ref[pl.ds(end_idx[5], 1), :]).astype(out_ref.dtype)

    def run(x):
        b, f_in = x.shape
        assert f_in <= PAD
        b_pad = ((b + tb - 1) // tb) * tb
        # Lane-dense, zero-padded, bf16 input tile stream.
        xp = jnp.zeros((b_pad, PAD), jnp.float32).at[:b, :f_in].set(x)
        xp = xp.astype(jnp.bfloat16)
        grid = (b_pad // tb,)

        # Advisory cost estimate (padded-dim flops, all operand bytes once).
        per_row_flops = 2 * (wblk.shape[0] * PAD * PAD
                             + w512.shape[0] * PAD * HID
                             + whead.shape[0] * HID * PAD)
        flops = per_row_flops * b_pad
        bytes_accessed = (xp.size * 2 + wblk.size * 2 + w512.size * 2
                          + whead.size * 2 + b128.size * 4 + b512.size * 4
                          + num_outputs * b_pad * PAD * 4)

        out = pl.pallas_call(
            kernel,
            out_shape=jax.ShapeDtypeStruct((num_outputs, b_pad, PAD),
                                           jnp.float32),
            grid_spec=pltpu.PrefetchScalarGridSpec(
                num_scalar_prefetch=0,
                grid=grid,
                in_specs=[
                    pl.BlockSpec((tb, PAD), lambda i: (i, 0)),       # x tile
                    pl.BlockSpec(wblk.shape, lambda i: (0, 0, 0)),   # resident
                    pl.BlockSpec(b128.shape, lambda i: (0, 0)),      # resident
                    pl.BlockSpec(w512.shape, lambda i: (0, 0, 0)),   # resident
                    pl.BlockSpec(b512.shape, lambda i: (0, 0)),      # resident
                    pl.BlockSpec(whead.shape, lambda i: (0, 0, 0)),  # resident
                ],
                out_specs=pl.BlockSpec((num_outputs, tb, PAD),
                                       lambda i: (0, i, 0)),
            ),
            compiler_params=pltpu.CompilerParams(
                dimension_semantics=("parallel",),     # megacore on v7x
                vmem_limit_bytes=32 * 1024 * 1024),
            cost_estimate=pl.CostEstimate(flops=int(flops), transcendentals=0,
                                          bytes_accessed=int(bytes_accessed)),
        )(xp, wblk, b128, w512, b512, whead)

        # Slice padded batch rows and lane-padded classifier slabs back.
        return [out[i, :b, :num_classes] for i in range(num_outputs)]

    return run


# ----------------------------------------------------------------------------
# Pure-JAX f32 reference (unfolded BN, unpadded) for verification
# ----------------------------------------------------------------------------
def fcn_sdn_reference(x, params):
    def lin(x, w, b, scale=None, shift=None, relu=False):
        y = x @ w + b
        if scale is not None:
            y = y * scale + shift
        if relu:
            y = jnp.maximum(y, 0.0)
        return y

    outputs = []
    fwd = x
    for layer in params["layers"]:
        fwd = lin(fwd, layer["w"], layer["b"],
                  layer["bn_scale"], layer["bn_shift"], relu=True)
        if layer["ic"] is not None:
            h = lin(fwd, layer["ic"]["w1"], layer["ic"]["b1"])
            outputs.append(lin(h, layer["ic"]["w2"], layer["ic"]["b2"]))
    e = params["end"]
    h = lin(fwd, e["w1"], e["b1"])
    h = lin(h, e["w2"], e["b2"])
    outputs.append(lin(h, e["w3"], e["b3"]))
    return outputs


if __name__ == "__main__":
    # Module-consistent sizes: x is (batch, input_size).
    batch = 512            # batch grid: 2 steps of TB=256 rows
    input_size = 32
    in_channels = 32       # params['in_channels'][0] (linear_channels)
    num_classes = 10
    add_ic = [0, 1, 0, 1]  # two internal classifiers -> 3 outputs total

    key = jax.random.PRNGKey(0)
    kx, kp = jax.random.split(key)
    x = jax.random.normal(kx, (batch, input_size), jnp.float32)
    params = init_params(kp, input_size, in_channels, num_classes, add_ic)

    forward = build_fused_forward(params, num_classes, tb=256)
    outs = forward(x)
    outs = [jax.block_until_ready(o) for o in outs]

    refs = fcn_sdn_reference(x, params)
    assert len(outs) == len(refs) == sum(add_ic) + 1
    for o, r in zip(outs, refs):
        assert o.shape == (batch, num_classes)
        # bf16 MXU inputs with f32 accumulation: compare with a relative
        # (max-normalized) tolerance instead of the old 1e-4 absolute one.
        scale = float(jnp.max(jnp.abs(r))) + 1e-8
        err = float(jnp.max(jnp.abs(o - r))) / scale
        assert err < 5e-2, f"relative error {err}"

    print("KERNEL_OK")
</pallas_src>

<mosaic_0001>
module attributes {stable_mosaic.version = 11 : i64} {
  func.func @kernel(%arg0: i32, %arg1: memref<256x128xbf16, #tpu.memory_space<vmem>>, %arg2: memref<5x128x128xbf16, #tpu.memory_space<vmem>>, %arg3: memref<8x128xf32, #tpu.memory_space<vmem>>, %arg4: memref<3x128x512xbf16, #tpu.memory_space<vmem>>, %arg5: memref<3x512xf32, #tpu.memory_space<vmem>>, %arg6: memref<3x512x128xbf16, #tpu.memory_space<vmem>>, %arg7: memref<3x256x128xf32, #tpu.memory_space<vmem>>) attributes {dimension_semantics = [#tpu.dimension_semantics<parallel>], iteration_bounds = array<i64: 2>, scalar_prefetch = 0 : i64, scratch_operands = 0 : i64, tpu.core_type = #tpu.core_type<tc>, window_params = [{transform_indices = @transform_0, window_bounds = array<i64: 256, 128>}, {pipeline_mode = #tpu.pipeline_mode<synchronous>, transform_indices = @transform_1, window_bounds = array<i64: 5, 128, 128>}, {pipeline_mode = #tpu.pipeline_mode<synchronous>, transform_indices = @transform_2, window_bounds = array<i64: 8, 128>}, {pipeline_mode = #tpu.pipeline_mode<synchronous>, transform_indices = @transform_3, window_bounds = array<i64: 3, 128, 512>}, {pipeline_mode = #tpu.pipeline_mode<synchronous>, transform_indices = @transform_4, window_bounds = array<i64: 3, 512>}, {pipeline_mode = #tpu.pipeline_mode<synchronous>, transform_indices = @transform_5, window_bounds = array<i64: 3, 512, 128>}, {transform_indices = @transform_6, window_bounds = array<i64: 3, 256, 128>}]} {
    %c0 = arith.constant 0 : index
    %c0_0 = arith.constant 0 : index
    %0 = vector.load %arg1[%c0, %c0_0] : memref<256x128xbf16, #tpu.memory_space<vmem>>, vector<256x128xbf16>
    %c0_1 = arith.constant 0 : index
    %c0_2 = arith.constant 0 : index
    %c0_3 = arith.constant 0 : index
    %1 = vector.load %arg2[%c0_1, %c0_2, %c0_3] : memref<5x128x128xbf16, #tpu.memory_space<vmem>>, vector<1x128x128xbf16>
    %2 = vector.shape_cast %1 : vector<1x128x128xbf16> to vector<128x128xbf16>
    %c0_4 = arith.constant 0 : index
    %c0_5 = arith.constant 0 : index
    %3 = vector.load %arg3[%c0_4, %c0_5] : memref<8x128xf32, #tpu.memory_space<vmem>>, vector<1x128xf32>
    %cst = arith.constant dense<0.000000e+00> : vector<256x128xf32>
    %4 = tpu.matmul %0, %2, %cst {dimension_numbers = #tpu.dot_dimension_numbers<[1], [0], [0], [1], [0, 0, 1, 1], [], []>} : vector<256x128xbf16>, vector<128x128xbf16>, vector<256x128xf32> -> vector<256x128xf32>
    %5 = vector.broadcast %3 : vector<1x128xf32> to vector<256x128xf32>
    %6 = arith.addf %4, %5 : vector<256x128xf32>
    %cst_6 = arith.constant 0.000000e+00 : f32
    %7 = vector.broadcast %cst_6 : f32 to vector<256x128xf32>
    %8 = arith.maximumf %6, %7 : vector<256x128xf32>
    %9 = arith.truncf %8 : vector<256x128xf32> to vector<256x128xbf16>
    %c1 = arith.constant 1 : index
    %c0_7 = arith.constant 0 : index
    %c0_8 = arith.constant 0 : index
    %10 = vector.load %arg2[%c1, %c0_7, %c0_8] : memref<5x128x128xbf16, #tpu.memory_space<vmem>>, vector<1x128x128xbf16>
    %11 = vector.shape_cast %10 : vector<1x128x128xbf16> to vector<128x128xbf16>
    %c1_9 = arith.constant 1 : index
    %c0_10 = arith.constant 0 : index
    %12 = vector.load %arg3[%c1_9, %c0_10] : memref<8x128xf32, #tpu.memory_space<vmem>>, vector<1x128xf32>
    %cst_11 = arith.constant dense<0.000000e+00> : vector<256x128xf32>
    %13 = tpu.matmul %9, %11, %cst_11 {dimension_numbers = #tpu.dot_dimension_numbers<[1], [0], [0], [1], [0, 0, 1, 1], [], []>} : vector<256x128xbf16>, vector<128x128xbf16>, vector<256x128xf32> -> vector<256x128xf32>
    %14 = vector.broadcast %12 : vector<1x128xf32> to vector<256x128xf32>
    %15 = arith.addf %13, %14 : vector<256x128xf32>
    %cst_12 = arith.constant 0.000000e+00 : f32
    %16 = vector.broadcast %cst_12 : f32 to vector<256x128xf32>
    %17 = arith.maximumf %15, %16 : vector<256x128xf32>
    %18 = arith.truncf %17 : vector<256x128xf32> to vector<256x128xbf16>
    %c0_13 = arith.constant 0 : index
    %c0_14 = arith.constant 0 : index
    %c0_15 = arith.constant 0 : index
    %19 = vector.load %arg4[%c0_13, %c0_14, %c0_15] : memref<3x128x512xbf16, #tpu.memory_space<vmem>>, vector<1x128x512xbf16>
    %20 = vector.shape_cast %19 : vector<1x128x512xbf16> to vector<128x512xbf16>
    %c0_16 = arith.constant 0 : index
    %c0_17 = arith.constant 0 : index
    %21 = vector.load %arg5[%c0_16, %c0_17] : memref<3x512xf32, #tpu.memory_space<vmem>>, vector<1x512xf32>
    %cst_18 = arith.constant dense<0.000000e+00> : vector<256x512xf32>
    %22 = tpu.matmul %18, %20, %cst_18 {dimension_numbers = #tpu.dot_dimension_numbers<[1], [0], [0], [1], [0, 0, 1, 1], [], []>} : vector<256x128xbf16>, vector<128x512xbf16>, vector<256x512xf32> -> vector<256x512xf32>
    %23 = vector.broadcast %21 : vector<1x512xf32> to vector<256x512xf32>
    %24 = arith.addf %22, %23 : vector<256x512xf32>
    %25 = arith.truncf %24 : vector<256x512xf32> to vector<256x512xbf16>
    %c0_19 = arith.constant 0 : index
    %c0_20 = arith.constant 0 : index
    %c0_21 = arith.constant 0 : index
    %26 = vector.load %arg6[%c0_19, %c0_20, %c0_21] : memref<3x512x128xbf16, #tpu.memory_space<vmem>>, vector<1x512x128xbf16>
    %27 = vector.shape_cast %26 : vector<1x512x128xbf16> to vector<512x128xbf16>
    %c2 = arith.constant 2 : index
    %c0_22 = arith.constant 0 : index
    %28 = vector.load %arg3[%c2, %c0_22] : memref<8x128xf32, #tpu.memory_space<vmem>>, vector<1x128xf32>
    %cst_23 = arith.constant dense<0.000000e+00> : vector<256x128xf32>
    %29 = tpu.matmul %25, %27, %cst_23 {dimension_numbers = #tpu.dot_dimension_numbers<[1], [0], [0], [1], [0, 0, 1, 1], [], []>} : vector<256x512xbf16>, vector<512x128xbf16>, vector<256x128xf32> -> vector<256x128xf32>
    %30 = vector.broadcast %28 : vector<1x128xf32> to vector<256x128xf32>
    %31 = arith.addf %29, %30 : vector<256x128xf32>
    %c0_24 = arith.constant 0 : index
    %c0_25 = arith.constant 0 : index
    %c0_26 = arith.constant 0 : index
    %32 = vector.load %arg7[%c0_24, %c0_25, %c0_26] : memref<3x256x128xf32, #tpu.memory_space<vmem>>, vector<1x256x128xf32>
    %33 = vector.shape_cast %32 : vector<1x256x128xf32> to vector<256x128xf32>
    %34 = vector.shape_cast %31 : vector<256x128xf32> to vector<1x256x128xf32>
    tpu.vector_store %arg7[%c0_24, %c0_25, %c0_26], %34 {strides = array<i32>} : memref<3x256x128xf32, #tpu.memory_space<vmem>>, vector<1x256x128xf32>,
    %c2_27 = arith.constant 2 : index
    %c0_28 = arith.constant 0 : index
    %c0_29 = arith.constant 0 : index
    %35 = vector.load %arg2[%c2_27, %c0_28, %c0_29] : memref<5x128x128xbf16, #tpu.memory_space<vmem>>, vector<1x128x128xbf16>
    %36 = vector.shape_cast %35 : vector<1x128x128xbf16> to vector<128x128xbf16>
    %c3 = arith.constant 3 : index
    %c0_30 = arith.constant 0 : index
    %37 = vector.load %arg3[%c3, %c0_30] : memref<8x128xf32, #tpu.memory_space<vmem>>, vector<1x128xf32>
    %cst_31 = arith.constant dense<0.000000e+00> : vector<256x128xf32>
    %38 = tpu.matmul %18, %36, %cst_31 {dimension_numbers = #tpu.dot_dimension_numbers<[1], [0], [0], [1], [0, 0, 1, 1], [], []>} : vector<256x128xbf16>, vector<128x128xbf16>, vector<256x128xf32> -> vector<256x128xf32>
    %39 = vector.broadcast %37 : vector<1x128xf32> to vector<256x128xf32>
    %40 = arith.addf %38, %39 : vector<256x128xf32>
    %cst_32 = arith.constant 0.000000e+00 : f32
    %41 = vector.broadcast %cst_32 : f32 to vector<256x128xf32>
    %42 = arith.maximumf %40, %41 : vector<256x128xf32>
    %43 = arith.truncf %42 : vector<256x128xf32> to vector<256x128xbf16>
    %c3_33 = arith.constant 3 : index
    %c0_34 = arith.constant 0 : index
    %c0_35 = arith.constant 0 : index
    %44 = vector.load %arg2[%c3_33, %c0_34, %c0_35] : memref<5x128x128xbf16, #tpu.memory_space<vmem>>, vector<1x128x128xbf16>
    %45 = vector.shape_cast %44 : vector<1x128x128xbf16> to vector<128x128xbf16>
    %c4 = arith.constant 4 : index
    %c0_36 = arith.constant 0 : index
    %46 = vector.load %arg3[%c4, %c0_36] : memref<8x128xf32, #tpu.memory_space<vmem>>, vector<1x128xf32>
    %cst_37 = arith.constant dense<0.000000e+00> : vector<256x128xf32>
    %47 = tpu.matmul %43, %45, %cst_37 {dimension_numbers = #tpu.dot_dimension_numbers<[1], [0], [0], [1], [0, 0, 1, 1], [], []>} : vector<256x128xbf16>, vector<128x128xbf16>, vector<256x128xf32> -> vector<256x128xf32>
    %48 = vector.broadcast %46 : vector<1x128xf32> to vector<256x128xf32>
    %49 = arith.addf %47, %48 : vector<256x128xf32>
    %cst_38 = arith.constant 0.000000e+00 : f32
    %50 = vector.broadcast %cst_38 : f32 to vector<256x128xf32>
    %51 = arith.maximumf %49, %50 : vector<256x128xf32>
    %52 = arith.truncf %51 : vector<256x128xf32> to vector<256x128xbf16>
    %c1_39 = arith.constant 1 : index
    %c0_40 = arith.constant 0 : index
    %c0_41 = arith.constant 0 : index
    %53 = vector.load %arg4[%c1_39, %c0_40, %c0_41] : memref<3x128x512xbf16, #tpu.memory_space<vmem>>, vector<1x128x512xbf16>
    %54 = vector.shape_cast %53 : vector<1x128x512xbf16> to vector<128x512xbf16>
    %c1_42 = arith.constant 1 : index
    %c0_43 = arith.constant 0 : index
    %55 = vector.load %arg5[%c1_42, %c0_43] : memref<3x512xf32, #tpu.memory_space<vmem>>, vector<1x512xf32>
    %cst_44 = arith.constant dense<0.000000e+00> : vector<256x512xf32>
    %56 = tpu.matmul %52, %54, %cst_44 {dimension_numbers = #tpu.dot_dimension_numbers<[1], [0], [0], [1], [0, 0, 1, 1], [], []>} : vector<256x128xbf16>, vector<128x512xbf16>, vector<256x512xf32> -> vector<256x512xf32>
    %57 = vector.broadcast %55 : vector<1x512xf32> to vector<256x512xf32>
    %58 = arith.addf %56, %57 : vector<256x512xf32>
    %59 = arith.truncf %58 : vector<256x512xf32> to vector<256x512xbf16>
    %c1_45 = arith.constant 1 : index
    %c0_46 = arith.constant 0 : index
    %c0_47 = arith.constant 0 : index
    %60 = vector.load %arg6[%c1_45, %c0_46, %c0_47] : memref<3x512x128xbf16, #tpu.memory_space<vmem>>, vector<1x512x128xbf16>
    %61 = vector.shape_cast %60 : vector<1x512x128xbf16> to vector<512x128xbf16>
    %c5 = arith.constant 5 : index
    %c0_48 = arith.constant 0 : index
    %62 = vector.load %arg3[%c5, %c0_48] : memref<8x128xf32, #tpu.memory_space<vmem>>, vector<1x128xf32>
    %cst_49 = arith.constant dense<0.000000e+00> : vector<256x128xf32>
    %63 = tpu.matmul %59, %61, %cst_49 {dimension_numbers = #tpu.dot_dimension_numbers<[1], [0], [0], [1], [0, 0, 1, 1], [], []>} : vector<256x512xbf16>, vector<512x128xbf16>, vector<256x128xf32> -> vector<256x128xf32>
    %64 = vector.broadcast %62 : vector<1x128xf32> to vector<256x128xf32>
    %65 = arith.addf %63, %64 : vector<256x128xf32>
    %c1_50 = arith.constant 1 : index
    %c0_51 = arith.constant 0 : index
    %c0_52 = arith.constant 0 : index
    %66 = vector.load %arg7[%c1_50, %c0_51, %c0_52] : memref<3x256x128xf32, #tpu.memory_space<vmem>>, vector<1x256x128xf32>
    %67 = vector.shape_cast %66 : vector<1x256x128xf32> to vector<256x128xf32>
    %68 = vector.shape_cast %65 : vector<256x128xf32> to vector<1x256x128xf32>
    tpu.vector_store %arg7[%c1_50, %c0_51, %c0_52], %68 {strides = array<i32>} : memref<3x256x128xf32, #tpu.memory_space<vmem>>, vector<1x256x128xf32>,
    %c4_53 = arith.constant 4 : index
    %c0_54 = arith.constant 0 : index
    %c0_55 = arith.constant 0 : index
    %69 = vector.load %arg2[%c4_53, %c0_54, %c0_55] : memref<5x128x128xbf16, #tpu.memory_space<vmem>>, vector<1x128x128xbf16>
    %70 = vector.shape_cast %69 : vector<1x128x128xbf16> to vector<128x128xbf16>
    %c6 = arith.constant 6 : index
    %c0_56 = arith.constant 0 : index
    %71 = vector.load %arg3[%c6, %c0_56] : memref<8x128xf32, #tpu.memory_space<vmem>>, vector<1x128xf32>
    %cst_57 = arith.constant dense<0.000000e+00> : vector<256x128xf32>
    %72 = tpu.matmul %52, %70, %cst_57 {dimension_numbers = #tpu.dot_dimension_numbers<[1], [0], [0], [1], [0, 0, 1, 1], [], []>} : vector<256x128xbf16>, vector<128x128xbf16>, vector<256x128xf32> -> vector<256x128xf32>
    %73 = vector.broadcast %71 : vector<1x128xf32> to vector<256x128xf32>
    %74 = arith.addf %72, %73 : vector<256x128xf32>
    %75 = arith.truncf %74 : vector<256x128xf32> to vector<256x128xbf16>
    %c2_58 = arith.constant 2 : index
    %c0_59 = arith.constant 0 : index
    %c0_60 = arith.constant 0 : index
    %76 = vector.load %arg4[%c2_58, %c0_59, %c0_60] : memref<3x128x512xbf16, #tpu.memory_space<vmem>>, vector<1x128x512xbf16>
    %77 = vector.shape_cast %76 : vector<1x128x512xbf16> to vector<128x512xbf16>
    %c2_61 = arith.constant 2 : index
    %c0_62 = arith.constant 0 : index
    %78 = vector.load %arg5[%c2_61, %c0_62] : memref<3x512xf32, #tpu.memory_space<vmem>>, vector<1x512xf32>
    %cst_63 = arith.constant dense<0.000000e+00> : vector<256x512xf32>
    %79 = tpu.matmul %75, %77, %cst_63 {dimension_numbers = #tpu.dot_dimension_numbers<[1], [0], [0], [1], [0, 0, 1, 1], [], []>} : vector<256x128xbf16>, vector<128x512xbf16>, vector<256x512xf32> -> vector<256x512xf32>
    %80 = vector.broadcast %78 : vector<1x512xf32> to vector<256x512xf32>
    %81 = arith.addf %79, %80 : vector<256x512xf32>
    %82 = arith.truncf %81 : vector<256x512xf32> to vector<256x512xbf16>
    %c2_64 = arith.constant 2 : index
    %c0_65 = arith.constant 0 : index
    %c0_66 = arith.constant 0 : index
    %83 = vector.load %arg6[%c2_64, %c0_65, %c0_66] : memref<3x512x128xbf16, #tpu.memory_space<vmem>>, vector<1x512x128xbf16>
    %84 = vector.shape_cast %83 : vector<1x512x128xbf16> to vector<512x128xbf16>
    %c7 = arith.constant 7 : index
    %c0_67 = arith.constant 0 : index
    %85 = vector.load %arg3[%c7, %c0_67] : memref<8x128xf32, #tpu.memory_space<vmem>>, vector<1x128xf32>
    %cst_68 = arith.constant dense<0.000000e+00> : vector<256x128xf32>
    %86 = tpu.matmul %82, %84, %cst_68 {dimension_numbers = #tpu.dot_dimension_numbers<[1], [0], [0], [1], [0, 0, 1, 1], [], []>} : vector<256x512xbf16>, vector<512x128xbf16>, vector<256x128xf32> -> vector<256x128xf32>
    %87 = vector.broadcast %85 : vector<1x128xf32> to vector<256x128xf32>
    %88 = arith.addf %86, %87 : vector<256x128xf32>
    %c2_69 = arith.constant 2 : index
    %c0_70 = arith.constant 0 : index
    %c0_71 = arith.constant 0 : index
    %89 = vector.load %arg7[%c2_69, %c0_70, %c0_71] : memref<3x256x128xf32, #tpu.memory_space<vmem>>, vector<1x256x128xf32>
    %90 = vector.shape_cast %89 : vector<1x256x128xf32> to vector<256x128xf32>
    %91 = vector.shape_cast %88 : vector<256x128xf32> to vector<1x256x128xf32>
    tpu.vector_store %arg7[%c2_69, %c0_70, %c0_71], %91 {strides = array<i32>} : memref<3x256x128xf32, #tpu.memory_space<vmem>>, vector<1x256x128xf32>,
    return
  }
  func.func @transform_0(%arg0: i32) -> (i32, i32) {
    %c0_i32 = arith.constant 0 : i32
    %c0_i32_0 = arith.constant 0 : i32
    return %arg0, %c0_i32 : i32, i32
  }
  func.func @transform_1(%arg0: i32) -> (i32, i32, i32) {
    %c0_i32 = arith.constant 0 : i32
    %c0_i32_0 = arith.constant 0 : i32
    %c0_i32_1 = arith.constant 0 : i32
    %c0_i32_2 = arith.constant 0 : i32
    return %c0_i32, %c0_i32_0, %c0_i32_1 : i32, i32, i32
  }
  func.func @transform_2(%arg0: i32) -> (i32, i32) {
    %c0_i32 = arith.constant 0 : i32
    %c0_i32_0 = arith.constant 0 : i32
    %c0_i32_1 = arith.constant 0 : i32
    return %c0_i32, %c0_i32_0 : i32, i32
  }
  func.func @transform_3(%arg0: i32) -> (i32, i32, i32) {
    %c0_i32 = arith.constant 0 : i32
    %c0_i32_0 = arith.constant 0 : i32
    %c0_i32_1 = arith.constant 0 : i32
    %c0_i32_2 = arith.constant 0 : i32
    return %c0_i32, %c0_i32_0, %c0_i32_1 : i32, i32, i32
  }
  func.func @transform_4(%arg0: i32) -> (i32, i32) {
    %c0_i32 = arith.constant 0 : i32
    %c0_i32_0 = arith.constant 0 : i32
    %c0_i32_1 = arith.constant 0 : i32
    return %c0_i32, %c0_i32_0 : i32, i32
  }
  func.func @transform_5(%arg0: i32) -> (i32, i32, i32) {
    %c0_i32 = arith.constant 0 : i32
    %c0_i32_0 = arith.constant 0 : i32
    %c0_i32_1 = arith.constant 0 : i32
    %c0_i32_2 = arith.constant 0 : i32
    return %c0_i32, %c0_i32_0, %c0_i32_1 : i32, i32, i32
  }
  func.func @transform_6(%arg0: i32) -> (i32, i32, i32) {
    %c0_i32 = arith.constant 0 : i32
    %c0_i32_0 = arith.constant 0 : i32
    %c0_i32_1 = arith.constant 0 : i32
    return %c0_i32, %arg0, %c0_i32_0 : i32, i32, i32
  }
}

</mosaic_0001>

<llo_original>
// kernel: tpu_custom_call.1
$region0: #{tpu_custom_call.1}
  #allocation0 [shape = 'u32[]', space=smem, size = 0x4, offset = 0x4, fixed_abs, tag = 'smem constant byte address 0x4 - core index']
  #allocation1 [shape = 'u32[144,128]{1,0:T(1,128)}', space=vmem, size = 0x12000, scoped, tag = 'internal scratch']
  #allocation14 [shape = 's32[]', space=sflag, size = 0x4, offset = 0, fixed_abs, tag = 'sflag constant byte address 0x0 - dummy sync flag']
  %s0 = inlined_call_operand.hbm [shape: bf16[512,128], index: 0, kind: input, shape index: {}]
  %s1 = inlined_call_operand.hbm [shape: bf16[5,128,128], index: 1, kind: input, shape index: {}]
  %s2 = inlined_call_operand.hbm [shape: f32[8,128], index: 2, kind: input, shape index: {}]
  %s3 = inlined_call_operand.hbm [shape: bf16[3,128,512], index: 3, kind: input, shape index: {}]
  %s4 = inlined_call_operand.hbm [shape: f32[3,512], index: 4, kind: input, shape index: {}]
  %s5 = inlined_call_operand.hbm [shape: bf16[3,512,128], index: 5, kind: input, shape index: {}]
  %s6 = inlined_call_operand.hbm [shape: f32[3,512,128], index: 6, kind: output, shape index: {}]
  %s7 = sld [smem:[#allocation0]]
  $region81: #{tpu_custom_call.1} parent=0
    _
  %s9 = ssub.s32 1, %s7
  %s10 = scalar_select 0, %s9, %s7
  $region1: #{tpu_custom_call.1} parent=0
    #allocation2 [shape = 'u8[131072]{0}', space=vmem, size = 0x20000, scoped, tag = 'input window, operand 0']
    #allocation3 [shape = 's32[2]{0}', space=sflag, size = 0x8, scoped, tag = 'scoped memory for tpu_custom_call.1']
    #allocation4 [shape = 's32[2]{0}', space=sflag, size = 0x8, scoped, tag = 'scoped memory for tpu_custom_call.1']
    #allocation5 [shape = 'u8[163840]{0}', space=vmem, size = 0x28000, scoped, tag = 'input window, operand 1, single buffered']
    #allocation6 [shape = 's32[1]{0}', space=sflag, size = 0x4, scoped, tag = 'scoped memory for tpu_custom_call.1']
    #allocation7 [shape = 'u8[4096]{0}', space=vmem, size = 0x1000, scoped, tag = 'input window, operand 2, single buffered']
    #allocation8 [shape = 'u8[393216]{0}', space=vmem, size = 0x60000, scoped, tag = 'input window, operand 3, single buffered']
    #allocation9 [shape = 's32[1]{0}', space=sflag, size = 0x4, scoped, tag = 'scoped memory for tpu_custom_call.1']
    #allocation10 [shape = 'u8[8192]{0}', space=vmem, size = 0x2000, scoped, tag = 'input window, operand 4, single buffered']
    #allocation11 [shape = 'u8[393216]{0}', space=vmem, size = 0x60000, scoped, tag = 'input window, operand 5, single buffered']
    #allocation12 [shape = 's32[1]{0}', space=sflag, size = 0x4, scoped, tag = 'scoped memory for tpu_custom_call.1']
    #allocation13 [shape = 'u8[786432]{0}', space=vmem, size = 0xc0000, scoped, tag = 'output window, operand 0']
    %11 = vsyncpa [#allocation3], 0
    %s12 = scalar_lea.sflag [#allocation3], 1
    %13 = vsyncpa %s12, 0
    %14 = vsyncpa [#allocation6], 0
    %15 = vsyncpa [#allocation9], 0
    %16 = vsyncpa [#allocation12], 0
    %17 = vsyncpa [#allocation4], 0
    %s18 = scalar_lea.sflag [#allocation4], 1
    %19 = vsyncpa %s18, 0
    loop: start=0, step=1, limit=4
    $region2: #{tpu_custom_call.1} parent=1 // loop_pre_header
      _
    $region3: #{tpu_custom_call.1} parent=1 // loop_header
      %s21 = sphi 0, %s25
      %p22 = scmp.ge.s32.totalorder %s21, 4
      %s31 = sphi 0, %s33
      %s34 = sphi 0, %s31
      %s35 = sphi 0, %s34
      %s51 = sphi 0, %s35
      %s55 = sphi 0, %s55
      %s57 = sphi 0, %s55
      %s58 = sphi 0, %s57
      %s72 = sphi 0, %s58
      %s76 = sphi 0, %s76
      %s78 = sphi 0, %s76
      %s79 = sphi 0, %s78
      %s93 = sphi 0, %s79
      %s97 = sphi 0, %s97
      %s99 = sphi 0, %s97
      %s100 = sphi 0, %s99
      %s114 = sphi 0, %s100
      %s118 = sphi 0, %s118
      %s120 = sphi 0, %s118
      %s121 = sphi 0, %s120
      %s135 = sphi 0, %s121
      %s139 = sphi 0, %s139
      %s141 = sphi 0, %s139
      %s142 = sphi 0, %s141
      %s156 = sphi 0, %s142
      %s162 = sphi 0, %s164
      %s165 = sphi 0, %s162
      %s166 = sphi 0, %s165
      %s182 = sphi 0, %s166
    $region4: #{tpu_custom_call.1} parent=1 // loop_header_branch
      %24 = sbr.rel (%p22) target = $region8
    $region5: #{tpu_custom_call.1} parent=1 // loop_body
      %s26 = ssub.s32 %s21, 1
      %s27 = ssub.s32 %s21, 2
      %s28 = sadd.s32 %s21, 1
      %s29 = ssub.s32 %s21, %s28
      %p30 = scmp.eq.s32.totalorder %s29, 0
      %s32 = sadd.s32 %s31, 1
      %s33 = scalar_select %p30, %s31, %s32
      %p36 = pneg %p30
      %p37 = scmp.eq.s32.totalorder %s21, 1
      %p38 = por %p36, %p37
      %p39 = scmp.ne.s32.totalorder %s31, %s34
      %p40 = scmp.eq.s32.totalorder %s21, 0
      %p41 = por %p39, %p40
      %p42 = scmp.ne.s32.totalorder %s31, %s34
      %p43 = scmp.eq.s32.totalorder %s26, 1
      %p44 = por %p42, %p43
      %p45 = scmp.ne.s32.totalorder %s34, %s35
      %p46 = scmp.eq.s32.totalorder %s26, 0
      %p47 = por %p45, %p46
      %p48 = scmp.ne.s32.totalorder %s34, %s35
      %p49 = scmp.eq.s32.totalorder %s27, 1
      %p50 = por %p48, %p49
      %p52 = scmp.ne.s32.totalorder %s35, %s51
      %p53 = scmp.eq.s32.totalorder %s27, 0
      %p54 = por %p52, %p53
      %s56 = sadd.s32 %s55, 1
      %p59 = scmp.eq.s32.totalorder %s21, 1
      %p60 = scmp.ne.s32.totalorder %s55, %s57
      %p61 = scmp.eq.s32.totalorder %s21, 0
      %p62 = por %p60, %p61
      %p63 = scmp.ne.s32.totalorder %s55, %s57
      %p64 = scmp.eq.s32.totalorder %s26, 1
      %p65 = por %p63, %p64
      %p66 = scmp.ne.s32.totalorder %s57, %s58
      %p67 = scmp.eq.s32.totalorder %s26, 0
      %p68 = por %p66, %p67
      %p69 = scmp.ne.s32.totalorder %s57, %s58
      %p70 = scmp.eq.s32.totalorder %s27, 1
      %p71 = por %p69, %p70
      %p73 = scmp.ne.s32.totalorder %s58, %s72
      %p74 = scmp.eq.s32.totalorder %s27, 0
      %p75 = por %p73, %p74
      %s77 = sadd.s32 %s76, 1
      %p80 = scmp.eq.s32.totalorder %s21, 1
      %p81 = scmp.ne.s32.totalorder %s76, %s78
      %p82 = scmp.eq.s32.totalorder %s21, 0
      %p83 = por %p81, %p82
      %p84 = scmp.ne.s32.totalorder %s76, %s78
      %p85 = scmp.eq.s32.totalorder %s26, 1
      %p86 = por %p84, %p85
      %p87 = scmp.ne.s32.totalorder %s78, %s79
      %p88 = scmp.eq.s32.totalorder %s26, 0
      %p89 = por %p87, %p88
      %p90 = scmp.ne.s32.totalorder %s78, %s79
      %p91 = scmp.eq.s32.totalorder %s27, 1
      %p92 = por %p90, %p91
      %p94 = scmp.ne.s32.totalorder %s79, %s93
      %p95 = scmp.eq.s32.totalorder %s27, 0
      %p96 = por %p94, %p95
      %s98 = sadd.s32 %s97, 1
      %p101 = scmp.eq.s32.totalorder %s21, 1
      %p102 = scmp.ne.s32.totalorder %s97, %s99
      %p103 = scmp.eq.s32.totalorder %s21, 0
      %p104 = por %p102, %p103
      %p105 = scmp.ne.s32.totalorder %s97, %s99
      %p106 = scmp.eq.s32.totalorder %s26, 1
      %p107 = por %p105, %p106
      %p108 = scmp.ne.s32.totalorder %s99, %s100
      %p109 = scmp.eq.s32.totalorder %s26, 0
      %p110 = por %p108, %p109
      %p111 = scmp.ne.s32.totalorder %s99, %s100
      %p112 = scmp.eq.s32.totalorder %s27, 1
      %p113 = por %p111, %p112
      %p115 = scmp.ne.s32.totalorder %s100, %s114
      %p116 = scmp.eq.s32.totalorder %s27, 0
      %p117 = por %p115, %p116
      %s119 = sadd.s32 %s118, 1
      %p122 = scmp.eq.s32.totalorder %s21, 1
      %p123 = scmp.ne.s32.totalorder %s118, %s120
      %p124 = scmp.eq.s32.totalorder %s21, 0
      %p125 = por %p123, %p124
      %p126 = scmp.ne.s32.totalorder %s118, %s120
      %p127 = scmp.eq.s32.totalorder %s26, 1
      %p128 = por %p126, %p127
      %p129 = scmp.ne.s32.totalorder %s120, %s121
      %p130 = scmp.eq.s32.totalorder %s26, 0
      %p131 = por %p129, %p130
      %p132 = scmp.ne.s32.totalorder %s120, %s121
      %p133 = scmp.eq.s32.totalorder %s27, 1
      %p134 = por %p132, %p133
      %p136 = scmp.ne.s32.totalorder %s121, %s135
      %p137 = scmp.eq.s32.totalorder %s27, 0
      %p138 = por %p136, %p137
      %s140 = sadd.s32 %s139, 1
      %p143 = scmp.eq.s32.totalorder %s21, 1
      %p144 = scmp.ne.s32.totalorder %s139, %s141
      %p145 = scmp.eq.s32.totalorder %s21, 0
      %p146 = por %p144, %p145
      %p147 = scmp.ne.s32.totalorder %s139, %s141
      %p148 = scmp.eq.s32.totalorder %s26, 1
      %p149 = por %p147, %p148
      %p150 = scmp.ne.s32.totalorder %s141, %s142
      %p151 = scmp.eq.s32.totalorder %s26, 0
      %p152 = por %p150, %p151
      %p153 = scmp.ne.s32.totalorder %s141, %s142
      %p154 = scmp.eq.s32.totalorder %s27, 1
      %p155 = por %p153, %p154
      %p157 = scmp.ne.s32.totalorder %s142, %s156
      %p158 = scmp.eq.s32.totalorder %s27, 0
      %p159 = por %p157, %p158
      %s160 = ssub.s32 %s21, %s28
      %p161 = scmp.eq.s32.totalorder %s160, 0
      %s163 = sadd.s32 %s162, 1
      %s164 = scalar_select %p161, %s162, %s163
      %p167 = pneg %p161
      %p168 = scmp.eq.s32.totalorder %s21, 1
      %p169 = por %p167, %p168
      %p170 = scmp.ne.s32.totalorder %s162, %s165
      %p171 = scmp.eq.s32.totalorder %s21, 0
      %p172 = por %p170, %p171
      %p173 = scmp.ne.s32.totalorder %s162, %s165
      %p174 = scmp.eq.s32.totalorder %s26, 1
      %p175 = por %p173, %p174
      %p176 = scmp.ne.s32.totalorder %s165, %s166
      %p177 = scmp.eq.s32.totalorder %s26, 0
      %p178 = por %p176, %p177
      %p179 = scmp.ne.s32.totalorder %s165, %s166
      %p180 = scmp.eq.s32.totalorder %s27, 1
      %p181 = por %p179, %p180
      %p183 = scmp.ne.s32.totalorder %s166, %s182
      %p184 = scmp.eq.s32.totalorder %s27, 0
      %p185 = por %p183, %p184
      %p186 = scmp.le.s32.totalorder 1, %s21
      %p187 = scmp.lt.s32.totalorder %s21, 3
      %p188 = pnand %p186, %p187
      %p189 = pneg %p188
      // Predicated region
      $region9: #{tpu_custom_call.1} parent=5 // pred_check
        _
      $region10: #{tpu_custom_call.1} parent=5 // pred_check_branch
        %191 = sbr.rel (%p188) target = $region12
      $region11: #{tpu_custom_call.1} parent=5 // pred_region
        %s192 = ssub.s32 %s21, 1
        // Predicated region
        $region13: #{tpu_custom_call.1} parent=11 // pred_check
          %p193 = pneg %p68
        $region14: #{tpu_custom_call.1} parent=11 // pred_check_branch
          %195 = sbr.rel (%p193) target = $region16
        $region15: #{tpu_custom_call.1} parent=11 // pred_region
          %s197 = ssub.s32 5120, 5120
          %198 = vsyncadd [#allocation6], %s197
          %s199 = sshll.u32 [#allocation5], 4
          %s200 = int_to_ptr.vmem [resolvable:$true] %s199
          %205 = dma.hbm_to_vmem [thread:$0]  %s1, 5120, %s200, [#allocation6], 64, 64, 4
        $region16: #{tpu_custom_call.1} parent=11 // pred_fallthru
          _
        // Predicated region
        $region17: #{tpu_custom_call.1} parent=11 // pred_check
          %p206 = pneg %p89
        $region18: #{tpu_custom_call.1} parent=11 // pred_check_branch
          %208 = sbr.rel (%p206) target = $region20
        $region19: #{tpu_custom_call.1} parent=11 // pred_region
          %s210 = ssub.s32 128, 128
          %211 = vsyncadd [#allocation6], %s210
          %s213 = sshll.u32 [#allocation7], 4
          %s214 = int_to_ptr.vmem [resolvable:$true] %s213
          %216 = dma.hbm_to_vmem [thread:$0]  %s2, 128, %s214, [#allocation6]
        $region20: #{tpu_custom_call.1} parent=11 // pred_fallthru
          _
        // Predicated region
        $region21: #{tpu_custom_call.1} parent=11 // pred_check
          %p217 = pneg %p110
        $region22: #{tpu_custom_call.1} parent=11 // pred_check_branch
          %219 = sbr.rel (%p217) target = $region24
        $region23: #{tpu_custom_call.1} parent=11 // pred_region
          %s221 = ssub.s32 12288, 12288
          %222 = vsyncadd [#allocation9], %s221
          %s223 = sshll.u32 [#allocation8], 4
          %s224 = int_to_ptr.vmem [resolvable:$true] %s223
          %229 = dma.hbm_to_vmem [thread:$0]  %s3, 12288, %s224, [#allocation9], 256, 256, 16
        $region24: #{tpu_custom_call.1} parent=11 // pred_fallthru
          _
        // Predicated region
        $region25: #{tpu_custom_call.1} parent=11 // pred_check
          %p230 = pneg %p131
        $region26: #{tpu_custom_call.1} parent=11 // pred_check_branch
          %232 = sbr.rel (%p230) target = $region28
        $region27: #{tpu_custom_call.1} parent=11 // pred_region
          %s234 = ssub.s32 256, 256
          %235 = vsyncadd [#allocation9], %s234
          %s237 = sshll.u32 [#allocation10], 4
          %s238 = int_to_ptr.vmem [resolvable:$true] %s237
          %240 = dma.hbm_to_vmem [thread:$0]  %s4, 256, %s238, [#allocation9]
        $region28: #{tpu_custom_call.1} parent=11 // pred_fallthru
          _
        // Predicated region
        $region29: #{tpu_custom_call.1} parent=11 // pred_check
          %p241 = pneg %p152
        $region30: #{tpu_custom_call.1} parent=11 // pred_check_branch
          %243 = sbr.rel (%p241) target = $region32
        $region31: #{tpu_custom_call.1} parent=11 // pred_region
          %s245 = ssub.s32 12288, 12288
          %246 = vsyncadd [#allocation12], %s245
          %s247 = sshll.u32 [#allocation11], 4
          %s248 = int_to_ptr.vmem [resolvable:$true] %s247
          %253 = dma.hbm_to_vmem [thread:$0]  %s5, 12288, %s248, [#allocation12], 64, 64, 4
        $region32: #{tpu_custom_call.1} parent=11 // pred_fallthru
          _
      $region12: #{tpu_custom_call.1} parent=5 // pred_fallthru
        _
      %p254 = scmp.lt.s32.totalorder %s21, 2
      // Predicated region
      $region33: #{tpu_custom_call.1} parent=5 // pred_check
        %p255 = pneg %p254
      $region34: #{tpu_custom_call.1} parent=5 // pred_check_branch
        %257 = sbr.rel (%p255) target = $region36
      $region35: #{tpu_custom_call.1} parent=5 // pred_region
        // Predicated region
        $region37: #{tpu_custom_call.1} parent=35 // pred_check
          %p258 = pneg %p41
        $region38: #{tpu_custom_call.1} parent=35 // pred_check_branch
          %260 = sbr.rel (%p258) target = $region40
        $region39: #{tpu_custom_call.1} parent=35 // pred_region
          %s261 = sand.u32 %s31, 1
          %s262 = scalar_lea.sflag [#allocation3], %s261
          %s263 = sand.u32 %s31, 1
          %s264 = smul.addr %s263, 128
          %s265 = scalar_lea.vmem [#allocation2], %s264
          %s266 = smul.u32 32, %s21
          %s268 = ssub.s32 2048, 2048
          %269 = vsyncadd %s262, %s268
          %s270 = smul.addr %s266, 64
          %s271 = scalar_lea.hbm %s0, %s270
          %s272 = sshll.u32 %s265, 4
          %s273 = int_to_ptr.vmem [resolvable:$true] %s272
          %278 = dma.hbm_to_vmem [thread:$0]  %s271, 2048, %s273, %s262, 64, 64, 4
        $region40: #{tpu_custom_call.1} parent=35 // pred_fallthru
          _
      $region36: #{tpu_custom_call.1} parent=5 // pred_fallthru
        _
      %p279 = scmp.le.s32.totalorder 1, %s21
      %p280 = scmp.lt.s32.totalorder %s21, 3
      %p281 = pnand %p279, %p280
      %p282 = pneg %p281
      // Predicated region
      $region41: #{tpu_custom_call.1} parent=5 // pred_check
        _
      $region42: #{tpu_custom_call.1} parent=5 // pred_check_branch
        %284 = sbr.rel (%p281) target = $region44
      $region43: #{tpu_custom_call.1} parent=5 // pred_region
        %s285 = ssub.s32 %s21, 1
        %s286 = sand.u32 %s34, 1
        %s287 = scalar_lea.sflag [#allocation3], %s286
        %s288 = sand.u32 %s34, 1
        %s289 = smul.addr %s288, 128
        %s290 = scalar_lea.vmem [#allocation2], %s289
        // Predicated region
        $region45: #{tpu_custom_call.1} parent=43 // pred_check
          %p291 = pneg %p47
        $region46: #{tpu_custom_call.1} parent=43 // pred_check_branch
          %293 = sbr.rel (%p291) target = $region48
        $region47: #{tpu_custom_call.1} parent=43 // pred_region
          %294 = dma.done %s287, 2048
        $region48: #{tpu_custom_call.1} parent=43 // pred_fallthru
          _
        // Predicated region
        $region49: #{tpu_custom_call.1} parent=43 // pred_check
          %p295 = pneg %p68
        $region50: #{tpu_custom_call.1} parent=43 // pred_check_branch
          %297 = sbr.rel (%p295) target = $region52
        $region51: #{tpu_custom_call.1} parent=43 // pred_region
          %298 = dma.done [#allocation6], 5120
        $region52: #{tpu_custom_call.1} parent=43 // pred_fallthru
          _
        // Predicated region
        $region53: #{tpu_custom_call.1} parent=43 // pred_check
          %p299 = pneg %p89
        $region54: #{tpu_custom_call.1} parent=43 // pred_check_branch
          %301 = sbr.rel (%p299) target = $region56
        $region55: #{tpu_custom_call.1} parent=43 // pred_region
          %302 = dma.done [#allocation6], 128
        $region56: #{tpu_custom_call.1} parent=43 // pred_fallthru
          _
        // Predicated region
        $region57: #{tpu_custom_call.1} parent=43 // pred_check
          %p303 = pneg %p110
        $region58: #{tpu_custom_call.1} parent=43 // pred_check_branch
          %305 = sbr.rel (%p303) target = $region60
        $region59: #{tpu_custom_call.1} parent=43 // pred_region
          %306 = dma.done [#allocation9], 12288
        $region60: #{tpu_custom_call.1} parent=43 // pred_fallthru
          _
        // Predicated region
        $region61: #{tpu_custom_call.1} parent=43 // pred_check
          %p307 = pneg %p131
        $region62: #{tpu_custom_call.1} parent=43 // pred_check_branch
          %309 = sbr.rel (%p307) target = $region64
        $region63: #{tpu_custom_call.1} parent=43 // pred_region
          %310 = dma.done [#allocation9], 256
        $region64: #{tpu_custom_call.1} parent=43 // pred_fallthru
          _
        // Predicated region
        $region65: #{tpu_custom_call.1} parent=43 // pred_check
          %p311 = pneg %p152
        $region66: #{tpu_custom_call.1} parent=43 // pred_check_branch
          %313 = sbr.rel (%p311) target = $region68
        $region67: #{tpu_custom_call.1} parent=43 // pred_region
          %314 = dma.done [#allocation12], 12288
        $region68: #{tpu_custom_call.1} parent=43 // pred_fallthru
          _
        %s315 = sand.u32 %s34, 1
        %s316 = scalar_lea.sflag [#allocation3], %s315
        %s317 = sand.u32 %s34, 1
        %s318 = smul.addr %s317, 128
        %s319 = scalar_lea.vmem [#allocation2], %s318
        %p320 = pneg %p47
        %p321 = pneg %p44
        %p322 = pneg %p68
        %p323 = pneg %p65
        %p324 = pneg %p89
        %p325 = pneg %p86
        %p326 = pneg %p110
        %p327 = pneg %p107
        %p328 = pneg %p131
        %p329 = pneg %p128
        %p330 = pneg %p152
        %p331 = pneg %p149
        %p332 = pneg %p178
        %p333 = pneg %p175
        %s334 = sand.u32 %s165, 1
        %s335 = scalar_lea.sflag [#allocation4], %s334
        %s336 = sand.u32 %s165, 1
        %s337 = smul.addr %s336, 768
        %s338 = scalar_lea.vmem [#allocation13], %s337
        %s339 = smul.u32 32, %s26
        %s340 = smul.u32 32, %s26
        %v342 = vld [vmem:[%s290] sm:$0xf]
        %v343 = vld [vmem:[%s290 + $0x4] sm:$0xf]
        %v344 = vld [vmem:[%s290 + $0x8] sm:$0xf]
        %v345 = vld [vmem:[%s290 + $0xc] sm:$0xf]
        %v346 = vld [vmem:[%s290 + $0x10] sm:$0xf]
        %v347 = vld [vmem:[%s290 + $0x14] sm:$0xf]
        %v348 = vld [vmem:[%s290 + $0x18] sm:$0xf]
        %v349 = vld [vmem:[%s290 + $0x1c] sm:$0xf]
        %v350 = vld [vmem:[%s290 + $0x20] sm:$0xf]
        %v351 = vld [vmem:[%s290 + $0x24] sm:$0xf]
        %v352 = vld [vmem:[%s290 + $0x28] sm:$0xf]
        %v353 = vld [vmem:[%s290 + $0x2c] sm:$0xf]
        %v354 = vld [vmem:[%s290 + $0x30] sm:$0xf]
        %v355 = vld [vmem:[%s290 + $0x34] sm:$0xf]
        %v356 = vld [vmem:[%s290 + $0x38] sm:$0xf]
        %v357 = vld [vmem:[%s290 + $0x3c] sm:$0xf]
        %v358 = vld [vmem:[%s290 + $0x40] sm:$0xf]
        %v359 = vld [vmem:[%s290 + $0x44] sm:$0xf]
        %v360 = vld [vmem:[%s290 + $0x48] sm:$0xf]
        %v361 = vld [vmem:[%s290 + $0x4c] sm:$0xf]
        %v362 = vld [vmem:[%s290 + $0x50] sm:$0xf]
        %v363 = vld [vmem:[%s290 + $0x54] sm:$0xf]
        %v364 = vld [vmem:[%s290 + $0x58] sm:$0xf]
        %v365 = vld [vmem:[%s290 + $0x5c] sm:$0xf]
        %v366 = vld [vmem:[%s290 + $0x60] sm:$0xf]
        %v367 = vld [vmem:[%s290 + $0x64] sm:$0xf]
        %v368 = vld [vmem:[%s290 + $0x68] sm:$0xf]
        %v369 = vld [vmem:[%s290 + $0x6c] sm:$0xf]
        %v370 = vld [vmem:[%s290 + $0x70] sm:$0xf]
        %v371 = vld [vmem:[%s290 + $0x74] sm:$0xf]
        %v372 = vld [vmem:[%s290 + $0x78] sm:$0xf]
        %v373 = vld [vmem:[%s290 + $0x7c] sm:$0xf]
        %v374 = vld [vmem:[#allocation5] sm:$0xf]
        %v375 = vld [vmem:[#allocation5 + $0x4] sm:$0xf]
        %v376 = vld [vmem:[#allocation5 + $0x8] sm:$0xf]
        %v377 = vld [vmem:[#allocation5 + $0xc] sm:$0xf]
        %v378 = vld [vmem:[#allocation5 + $0x10] sm:$0xf]
        %v379 = vld [vmem:[#allocation5 + $0x14] sm:$0xf]
        %v380 = vld [vmem:[#allocation5 + $0x18] sm:$0xf]
        %v381 = vld [vmem:[#allocation5 + $0x1c] sm:$0xf]
        %v382 = vld [vmem:[#allocation5 + $0x20] sm:$0xf]
        %v383 = vld [vmem:[#allocation5 + $0x24] sm:$0xf]
        %v384 = vld [vmem:[#allocation5 + $0x28] sm:$0xf]
        %v385 = vld [vmem:[#allocation5 + $0x2c] sm:$0xf]
        %v386 = vld [vmem:[#allocation5 + $0x30] sm:$0xf]
        %v387 = vld [vmem:[#allocation5 + $0x34] sm:$0xf]
        %v388 = vld [vmem:[#allocation5 + $0x38] sm:$0xf]
        %v389 = vld [vmem:[#allocation5 + $0x3c] sm:$0xf]
        %v390 = vld [vmem:[#allocation7] sm:$0x1]
        %v391 = vlaneseq
        %v392 = vshrl.u32 %v391, 7
        %v393 = vsub.s32 0, %v392
        %v394 = vrot.slane %v390, %v393
        %v427 = vunpack.c.l.b16 %v342
        %v428 = vunpack.c.l.b16 %v343
        %v429 = vunpack.c.l.b16 %v344
        %v430 = vunpack.c.l.b16 %v345
        %v431 = vunpack.c.l.b16 %v346
        %v432 = vunpack.c.l.b16 %v347
        %v433 = vunpack.c.l.b16 %v348
        %v434 = vunpack.c.l.b16 %v349
        %v435 = vunpack.c.l.b16 %v350
        %v436 = vunpack.c.l.b16 %v351
        %v437 = vunpack.c.l.b16 %v352
        %v438 = vunpack.c.l.b16 %v353
        %v439 = vunpack.c.l.b16 %v354
        %v440 = vunpack.c.l.b16 %v355
        %v441 = vunpack.c.l.b16 %v356
        %v442 = vunpack.c.l.b16 %v357
        %v443 = vunpack.c.l.b16 %v358
        %v444 = vunpack.c.l.b16 %v359
        %v445 = vunpack.c.l.b16 %v360
        %v446 = vunpack.c.l.b16 %v361
        %v447 = vunpack.c.l.b16 %v362
        %v448 = vunpack.c.l.b16 %v363
        %v449 = vunpack.c.l.b16 %v364
        %v450 = vunpack.c.l.b16 %v365
        %v451 = vunpack.c.l.b16 %v366
        %v452 = vunpack.c.l.b16 %v367
        %v453 = vunpack.c.l.b16 %v368
        %v454 = vunpack.c.l.b16 %v369
        %v455 = vunpack.c.l.b16 %v370
        %v456 = vunpack.c.l.b16 %v371
        %v457 = vunpack.c.l.b16 %v372
        %v458 = vunpack.c.l.b16 %v373
        %v459 = vpack.c.b16 %v428, %v427
        %v460 = vpack.c.b16 %v430, %v429
        %v461 = vpack.c.b16 %v432, %v431
        %v462 = vpack.c.b16 %v434, %v433
        %v463 = vpack.c.b16 %v436, %v435
        %v464 = vpack.c.b16 %v438, %v437
        %v465 = vpack.c.b16 %v440, %v439
        %v466 = vpack.c.b16 %v442, %v441
        %v467 = vpack.c.b16 %v444, %v443
        %v468 = vpack.c.b16 %v446, %v445
        %v469 = vpack.c.b16 %v448, %v447
        %v470 = vpack.c.b16 %v450, %v449
        %v471 = vpack.c.b16 %v452, %v451
        %v472 = vpack.c.b16 %v454, %v453
        %v473 = vpack.c.b16 %v456, %v455
        %v474 = vpack.c.b16 %v458, %v457
        %v507 = vunpack.c.l.b16 %v374
        %v508 = vunpack.c.l.b16 %v375
        %v509 = vunpack.c.l.b16 %v376
        %v510 = vunpack.c.l.b16 %v377
        %v511 = vunpack.c.l.b16 %v378
        %v512 = vunpack.c.l.b16 %v379
        %v513 = vunpack.c.l.b16 %v380
        %v514 = vunpack.c.l.b16 %v381
        %v515 = vunpack.c.l.b16 %v382
        %v516 = vunpack.c.l.b16 %v383
        %v517 = vunpack.c.l.b16 %v384
        %v518 = vunpack.c.l.b16 %v385
        %v519 = vunpack.c.l.b16 %v386
        %v520 = vunpack.c.l.b16 %v387
        %v521 = vunpack.c.l.b16 %v388
        %v522 = vunpack.c.l.b16 %v389
        %v523 = vpack.c.b16 %v508, %v507
        %v524 = vpack.c.b16 %v510, %v509
        %v525 = vpack.c.b16 %v512, %v511
        %v526 = vpack.c.b16 %v514, %v513
        %v527 = vpack.c.b16 %v516, %v515
        %v528 = vpack.c.b16 %v518, %v517
        %v529 = vpack.c.b16 %v520, %v519
        %v530 = vpack.c.b16 %v522, %v521
        %539 = vmatprep.subr.bf16.mxu0 0
        %540 = vmatpush1.bf16.msra.mxu0 %v530
        %541 = vmatprep.subr.bf16.mxu0 0
        %542 = vmatpush1.bf16.msra.mxu0 %v529
        %543 = vmatprep.subr.bf16.mxu0 0
        %544 = vmatpush1.bf16.msra.mxu0 %v528
        %545 = vmatprep.subr.bf16.mxu0 0
        %546 = vmatpush1.bf16.msra.mxu0 %v527
        %547 = vmatprep.subr.bf16.mxu0 0
        %548 = vmatpush1.bf16.msra.mxu0 %v526
        %549 = vmatprep.subr.bf16.mxu0 0
        %550 = vmatpush1.bf16.msra.mxu0 %v525
        %551 = vmatprep.subr.bf16.mxu0 0
        %552 = vmatpush1.bf16.msra.mxu0 %v524
        %553 = vmatprep.subr.bf16.mxu0 0
        %554 = vmatpush1.bf16.msra.mxu0 %v523
        %555 = vmatprep.subr.bf16.mxu0 0
        %556 = vmatpush2.bf16.msra.mxu0 0
        %557 = vmatprep.subr.bf16.mxu0 0
        %558 = vmatpush2.bf16.msra.mxu0 0
        %559 = vmatprep.subr.bf16.mxu0 0
        %560 = vmatpush2.bf16.msra.mxu0 0
        %561 = vmatprep.subr.bf16.mxu0 0
        %562 = vmatpush2.bf16.msra.mxu0 0
        %563 = vmatprep.subr.bf16.mxu0 0
        %564 = vmatpush2.bf16.msra.mxu0 0
        %565 = vmatprep.subr.bf16.mxu0 0
        %566 = vmatpush2.bf16.msra.mxu0 0
        %567 = vmatprep.subr.bf16.mxu0 0
        %568 = vmatpush2.bf16.msra.mxu0 0
        %569 = vmatprep.subr.bf16.mxu0 0
        %570 = vmatpush2.bf16.msra.mxu0 0
        %571 = vmatprep.mubr.bf16.mxu0 0
        %572 = vmatmul.mubr.bf16.gmra.mxu0 %v459
        %v573 = vpop.f32.mrf.mxu0
        %v574 = vadd.f32 %v394, %v573
        %v575 = vpop.f32.mrf.mxu0
        %v576 = vpop.f32.mrf.mxu0
        %v577 = vadd.f32 %v394, %v576
        %v578 = vpop.f32.mrf.mxu0
        %579 = vmatprep.mubr.bf16.mxu0 0
        %580 = vmatmul.mubr.bf16.gmra.mxu0 %v460
        %v581 = vpop.f32.mrf.mxu0
        %v582 = vadd.f32 %v394, %v581
        %v583 = vpop.f32.mrf.mxu0
        %v584 = vpop.f32.mrf.mxu0
        %v585 = vadd.f32 %v394, %v584
        %v586 = vpop.f32.mrf.mxu0
        %587 = vmatprep.mubr.bf16.mxu0 0
        %588 = vmatmul.mubr.bf16.gmra.mxu0 %v461
        %v589 = vpop.f32.mrf.mxu0
        %v590 = vadd.f32 %v394, %v589
        %v591 = vpop.f32.mrf.mxu0
        %v592 = vpop.f32.mrf.mxu0
        %v593 = vadd.f32 %v394, %v592
        %v594 = vpop.f32.mrf.mxu0
        %595 = vmatprep.mubr.bf16.mxu0 0
        %596 = vmatmul.mubr.bf16.gmra.mxu0 %v462
        %v597 = vpop.f32.mrf.mxu0
        %v598 = vadd.f32 %v394, %v597
        %v599 = vpop.f32.mrf.mxu0
        %v600 = vpop.f32.mrf.mxu0
        %v601 = vadd.f32 %v394, %v600
        %v602 = vpop.f32.mrf.mxu0
        %603 = vmatprep.mubr.bf16.mxu0 0
        %604 = vmatmul.mubr.bf16.gmra.mxu0 %v463
        %v605 = vpop.f32.mrf.mxu0
        %v606 = vadd.f32 %v394, %v605
        %v607 = vpop.f32.mrf.mxu0
        %v608 = vpop.f32.mrf.mxu0
        %v609 = vadd.f32 %v394, %v608
        %v610 = vpop.f32.mrf.mxu0
        %611 = vmatprep.mubr.bf16.mxu0 0
        %612 = vmatmul.mubr.bf16.gmra.mxu0 %v464
        %v613 = vpop.f32.mrf.mxu0
        %v614 = vadd.f32 %v394, %v613
        %v615 = vpop.f32.mrf.mxu0
        %v616 = vpop.f32.mrf.mxu0
        %v617 = vadd.f32 %v394, %v616
        %v618 = vpop.f32.mrf.mxu0
        %619 = vmatprep.mubr.bf16.mxu0 0
        %620 = vmatmul.mubr.bf16.gmra.mxu0 %v465
        %v621 = vpop.f32.mrf.mxu0
        %v622 = vadd.f32 %v394, %v621
        %v623 = vpop.f32.mrf.mxu0
        %v624 = vpop.f32.mrf.mxu0
        %v625 = vadd.f32 %v394, %v624
        %v626 = vpop.f32.mrf.mxu0
        %627 = vmatprep.mubr.bf16.mxu0 0
        %628 = vmatmul.mubr.bf16.gmra.mxu0 %v466
        %v629 = vpop.f32.mrf.mxu0
        %v630 = vadd.f32 %v394, %v629
        %v631 = vpop.f32.mrf.mxu0
        %v632 = vpop.f32.mrf.mxu0
        %v633 = vadd.f32 %v394, %v632
        %v634 = vpop.f32.mrf.mxu0
        %635 = vmatprep.mubr.bf16.mxu0 0
        %636 = vmatmul.mubr.bf16.gmra.mxu0 %v467
        %v637 = vpop.f32.mrf.mxu0
        %v638 = vadd.f32 %v394, %v637
        %v639 = vpop.f32.mrf.mxu0
        %v640 = vpop.f32.mrf.mxu0
        %v641 = vadd.f32 %v394, %v640
        %v642 = vpop.f32.mrf.mxu0
        %643 = vmatprep.mubr.bf16.mxu0 0
        %644 = vmatmul.mubr.bf16.gmra.mxu0 %v468
        %v645 = vpop.f32.mrf.mxu0
        %v646 = vadd.f32 %v394, %v645
        %v647 = vpop.f32.mrf.mxu0
        %v648 = vpop.f32.mrf.mxu0
        %v649 = vadd.f32 %v394, %v648
        %v650 = vpop.f32.mrf.mxu0
        %651 = vmatprep.mubr.bf16.mxu0 0
        %652 = vmatmul.mubr.bf16.gmra.mxu0 %v469
        %v653 = vpop.f32.mrf.mxu0
        %v654 = vadd.f32 %v394, %v653
        %v655 = vpop.f32.mrf.mxu0
        %v656 = vpop.f32.mrf.mxu0
        %v657 = vadd.f32 %v394, %v656
        %v658 = vpop.f32.mrf.mxu0
        %659 = vmatprep.mubr.bf16.mxu0 0
        %660 = vmatmul.mubr.bf16.gmra.mxu0 %v470
        %v661 = vpop.f32.mrf.mxu0
        %v662 = vadd.f32 %v394, %v661
        %v663 = vpop.f32.mrf.mxu0
        %v664 = vpop.f32.mrf.mxu0
        %v665 = vadd.f32 %v394, %v664
        %v666 = vpop.f32.mrf.mxu0
        %667 = vmatprep.mubr.bf16.mxu0 0
        %668 = vmatmul.mubr.bf16.gmra.mxu0 %v471
        %v669 = vpop.f32.mrf.mxu0
        %v670 = vadd.f32 %v394, %v669
        %v671 = vpop.f32.mrf.mxu0
        %v672 = vpop.f32.mrf.mxu0
        %v673 = vadd.f32 %v394, %v672
        %v674 = vpop.f32.mrf.mxu0
        %675 = vmatprep.mubr.bf16.mxu0 0
        %676 = vmatmul.mubr.bf16.gmra.mxu0 %v472
        %v677 = vpop.f32.mrf.mxu0
        %v678 = vadd.f32 %v394, %v677
        %v679 = vpop.f32.mrf.mxu0
        %v680 = vpop.f32.mrf.mxu0
        %v681 = vadd.f32 %v394, %v680
        %v682 = vpop.f32.mrf.mxu0
        %683 = vmatprep.mubr.bf16.mxu0 0
        %684 = vmatmul.mubr.bf16.gmra.mxu0 %v473
        %v685 = vpop.f32.mrf.mxu0
        %v686 = vadd.f32 %v394, %v685
        %v687 = vpop.f32.mrf.mxu0
        %v688 = vpop.f32.mrf.mxu0
        %v689 = vadd.f32 %v394, %v688
        %v690 = vpop.f32.mrf.mxu0
        %691 = vmatprep.mubr.bf16.mxu0 0
        %692 = vmatmul.mubr.bf16.gmra.mxu0 %v474
        %v693 = vpop.f32.mrf.mxu0
        %v694 = vadd.f32 %v394, %v693
        %v695 = vpop.f32.mrf.mxu0
        %v696 = vpop.f32.mrf.mxu0
        %v697 = vadd.f32 %v394, %v696
        %v698 = vpop.f32.mrf.mxu0
        %699 = vdwg.mxu0
        %v700 = vmax.f32 %v574, 0.0
        %v701 = vmax.f32 %v577, 0.0
        %v702 = vmax.f32 %v582, 0.0
        %v703 = vmax.f32 %v585, 0.0
        %v704 = vmax.f32 %v590, 0.0
        %v705 = vmax.f32 %v593, 0.0
        %v706 = vmax.f32 %v598, 0.0
        %v707 = vmax.f32 %v601, 0.0
        %v708 = vmax.f32 %v606, 0.0
        %v709 = vmax.f32 %v609, 0.0
        %v710 = vmax.f32 %v614, 0.0
        %v711 = vmax.f32 %v617, 0.0
        %v712 = vmax.f32 %v622, 0.0
        %v713 = vmax.f32 %v625, 0.0
        %v714 = vmax.f32 %v630, 0.0
        %v715 = vmax.f32 %v633, 0.0
        %v716 = vmax.f32 %v638, 0.0
        %v717 = vmax.f32 %v641, 0.0
        %v718 = vmax.f32 %v646, 0.0
        %v719 = vmax.f32 %v649, 0.0
        %v720 = vmax.f32 %v654, 0.0
        %v721 = vmax.f32 %v657, 0.0
        %v722 = vmax.f32 %v662, 0.0
        %v723 = vmax.f32 %v665, 0.0
        %v724 = vmax.f32 %v670, 0.0
        %v725 = vmax.f32 %v673, 0.0
        %v726 = vmax.f32 %v678, 0.0
        %v727 = vmax.f32 %v681, 0.0
        %v728 = vmax.f32 %v686, 0.0
        %v729 = vmax.f32 %v689, 0.0
        %v730 = vmax.f32 %v694, 0.0
        %v731 = vmax.f32 %v697, 0.0
        %v732 = vpack.c.bf16 %v701, %v700
        %v733 = vpack.c.bf16 %v703, %v702
        %v734 = vpack.c.bf16 %v705, %v704
        %v735 = vpack.c.bf16 %v707, %v706
        %v736 = vpack.c.bf16 %v709, %v708
        %v737 = vpack.c.bf16 %v711, %v710
        %v738 = vpack.c.bf16 %v713, %v712
        %v739 = vpack.c.bf16 %v715, %v714
        %v740 = vpack.c.bf16 %v717, %v716
        %v741 = vpack.c.bf16 %v719, %v718
        %v742 = vpack.c.bf16 %v721, %v720
        %v743 = vpack.c.bf16 %v723, %v722
        %v744 = vpack.c.bf16 %v725, %v724
        %v745 = vpack.c.bf16 %v727, %v726
        %v746 = vpack.c.bf16 %v729, %v728
        %v747 = vpack.c.bf16 %v731, %v730
        %s748 = scalar_lea.vmem [#allocation5], 64
        %v749 = vld [vmem:[%s748] sm:$0xf]
        %v750 = vld [vmem:[%s748 + $0x4] sm:$0xf]
        %v751 = vld [vmem:[%s748 + $0x8] sm:$0xf]
        %v752 = vld [vmem:[%s748 + $0xc] sm:$0xf]
        %v753 = vld [vmem:[%s748 + $0x10] sm:$0xf]
        %v754 = vld [vmem:[%s748 + $0x14] sm:$0xf]
        %v755 = vld [vmem:[%s748 + $0x18] sm:$0xf]
        %v756 = vld [vmem:[%s748 + $0x1c] sm:$0xf]
        %v757 = vld [vmem:[%s748 + $0x20] sm:$0xf]
        %v758 = vld [vmem:[%s748 + $0x24] sm:$0xf]
        %v759 = vld [vmem:[%s748 + $0x28] sm:$0xf]
        %v760 = vld [vmem:[%s748 + $0x2c] sm:$0xf]
        %v761 = vld [vmem:[%s748 + $0x30] sm:$0xf]
        %v762 = vld [vmem:[%s748 + $0x34] sm:$0xf]
        %v763 = vld [vmem:[%s748 + $0x38] sm:$0xf]
        %v764 = vld [vmem:[%s748 + $0x3c] sm:$0xf]
        %v765 = vld [vmem:[#allocation7 + $0x1] sm:$0x1]
        %v766 = vlaneseq
        %v767 = vshrl.u32 %v766, 7
        %v768 = vsub.s32 0, %v767
        %v769 = vrot.slane %v765, %v768
        %v786 = vunpack.c.l.b16 %v749
        %v787 = vunpack.c.l.b16 %v750
        %v788 = vunpack.c.l.b16 %v751
        %v789 = vunpack.c.l.b16 %v752
        %v790 = vunpack.c.l.b16 %v753
        %v791 = vunpack.c.l.b16 %v754
        %v792 = vunpack.c.l.b16 %v755
        %v793 = vunpack.c.l.b16 %v756
        %v794 = vunpack.c.l.b16 %v757
        %v795 = vunpack.c.l.b16 %v758
        %v796 = vunpack.c.l.b16 %v759
        %v797 = vunpack.c.l.b16 %v760
        %v798 = vunpack.c.l.b16 %v761
        %v799 = vunpack.c.l.b16 %v762
        %v800 = vunpack.c.l.b16 %v763
        %v801 = vunpack.c.l.b16 %v764
        %v802 = vpack.c.b16 %v787, %v786
        %v803 = vpack.c.b16 %v789, %v788
        %v804 = vpack.c.b16 %v791, %v790
        %v805 = vpack.c.b16 %v793, %v792
        %v806 = vpack.c.b16 %v795, %v794
        %v807 = vpack.c.b16 %v797, %v796
        %v808 = vpack.c.b16 %v799, %v798
        %v809 = vpack.c.b16 %v801, %v800
        %818 = vmatprep.subr.bf16.mxu0 0
        %819 = vmatpush1.bf16.msra.mxu0 %v809
        %820 = vmatprep.subr.bf16.mxu0 0
        %821 = vmatpush1.bf16.msra.mxu0 %v808
        %822 = vmatprep.subr.bf16.mxu0 0
        %823 = vmatpush1.bf16.msra.mxu0 %v807
        %824 = vmatprep.subr.bf16.mxu0 0
        %825 = vmatpush1.bf16.msra.mxu0 %v806
        %826 = vmatprep.subr.bf16.mxu0 0
        %827 = vmatpush1.bf16.msra.mxu0 %v805
        %828 = vmatprep.subr.bf16.mxu0 0
        %829 = vmatpush1.bf16.msra.mxu0 %v804
        %830 = vmatprep.subr.bf16.mxu0 0
        %831 = vmatpush1.bf16.msra.mxu0 %v803
        %832 = vmatprep.subr.bf16.mxu0 0
        %833 = vmatpush1.bf16.msra.mxu0 %v802
        %834 = vmatprep.subr.bf16.mxu0 0
        %835 = vmatpush2.bf16.msra.mxu0 0
        %836 = vmatprep.subr.bf16.mxu0 0
        %837 = vmatpush2.bf16.msra.mxu0 0
        %838 = vmatprep.subr.bf16.mxu0 0
        %839 = vmatpush2.bf16.msra.mxu0 0
        %840 = vmatprep.subr.bf16.mxu0 0
        %841 = vmatpush2.bf16.msra.mxu0 0
        %842 = vmatprep.subr.bf16.mxu0 0
        %843 = vmatpush2.bf16.msra.mxu0 0
        %844 = vmatprep.subr.bf16.mxu0 0
        %845 = vmatpush2.bf16.msra.mxu0 0
        %846 = vmatprep.subr.bf16.mxu0 0
        %847 = vmatpush2.bf16.msra.mxu0 0
        %848 = vmatprep.subr.bf16.mxu0 0
        %849 = vmatpush2.bf16.msra.mxu0 0
        %850 = vmatprep.mubr.bf16.mxu0 0
        %851 = vmatmul.mubr.bf16.gmra.mxu0 %v732
        %v852 = vpop.f32.mrf.mxu0
        %v853 = vadd.f32 %v769, %v852
        %v854 = vpop.f32.mrf.mxu0
        %v855 = vpop.f32.mrf.mxu0
        %v856 = vadd.f32 %v769, %v855
        %v857 = vpop.f32.mrf.mxu0
        %858 = vmatprep.mubr.bf16.mxu0 0
        %859 = vmatmul.mubr.bf16.gmra.mxu0 %v733
        %v860 = vpop.f32.mrf.mxu0
        %v861 = vadd.f32 %v769, %v860
        %v862 = vpop.f32.mrf.mxu0
        %v863 = vpop.f32.mrf.mxu0
        %v864 = vadd.f32 %v769, %v863
        %v865 = vpop.f32.mrf.mxu0
        %866 = vmatprep.mubr.bf16.mxu0 0
        %867 = vmatmul.mubr.bf16.gmra.mxu0 %v734
        %v868 = vpop.f32.mrf.mxu0
        %v869 = vadd.f32 %v769, %v868
        %v870 = vpop.f32.mrf.mxu0
        %v871 = vpop.f32.mrf.mxu0
        %v872 = vadd.f32 %v769, %v871
        %v873 = vpop.f32.mrf.mxu0
        %874 = vmatprep.mubr.bf16.mxu0 0
        %875 = vmatmul.mubr.bf16.gmra.mxu0 %v735
        %v876 = vpop.f32.mrf.mxu0
        %v877 = vadd.f32 %v769, %v876
        %v878 = vpop.f32.mrf.mxu0
        %v879 = vpop.f32.mrf.mxu0
        %v880 = vadd.f32 %v769, %v879
        %v881 = vpop.f32.mrf.mxu0
        %882 = vmatprep.mubr.bf16.mxu0 0
        %883 = vmatmul.mubr.bf16.gmra.mxu0 %v736
        %v884 = vpop.f32.mrf.mxu0
        %v885 = vadd.f32 %v769, %v884
        %v886 = vpop.f32.mrf.mxu0
        %v887 = vpop.f32.mrf.mxu0
        %v888 = vadd.f32 %v769, %v887
        %v889 = vpop.f32.mrf.mxu0
        %890 = vmatprep.mubr.bf16.mxu0 0
        %891 = vmatmul.mubr.bf16.gmra.mxu0 %v737
        %v892 = vpop.f32.mrf.mxu0
        %v893 = vadd.f32 %v769, %v892
        %v894 = vpop.f32.mrf.mxu0
        %v895 = vpop.f32.mrf.mxu0
        %v896 = vadd.f32 %v769, %v895
        %v897 = vpop.f32.mrf.mxu0
        %898 = vmatprep.mubr.bf16.mxu0 0
        %899 = vmatmul.mubr.bf16.gmra.mxu0 %v738
        %v900 = vpop.f32.mrf.mxu0
        %v901 = vadd.f32 %v769, %v900
        %v902 = vpop.f32.mrf.mxu0
        %v903 = vpop.f32.mrf.mxu0
        %v904 = vadd.f32 %v769, %v903
        %v905 = vpop.f32.mrf.mxu0
        %906 = vmatprep.mubr.bf16.mxu0 0
        %907 = vmatmul.mubr.bf16.gmra.mxu0 %v739
        %v908 = vpop.f32.mrf.mxu0
        %v909 = vadd.f32 %v769, %v908
        %v910 = vpop.f32.mrf.mxu0
        %v911 = vpop.f32.mrf.mxu0
        %v912 = vadd.f32 %v769, %v911
        %v913 = vpop.f32.mrf.mxu0
        %914 = vmatprep.mubr.bf16.mxu0 0
        %915 = vmatmul.mubr.bf16.gmra.mxu0 %v740
        %v916 = vpop.f32.mrf.mxu0
        %v917 = vadd.f32 %v769, %v916
        %v918 = vpop.f32.mrf.mxu0
        %v919 = vpop.f32.mrf.mxu0
        %v920 = vadd.f32 %v769, %v919
        %v921 = vpop.f32.mrf.mxu0
        %922 = vmatprep.mubr.bf16.mxu0 0
        %923 = vmatmul.mubr.bf16.gmra.mxu0 %v741
        %v924 = vpop.f32.mrf.mxu0
        %v925 = vadd.f32 %v769, %v924
        %v926 = vpop.f32.mrf.mxu0
        %v927 = vpop.f32.mrf.mxu0
        %v928 = vadd.f32 %v769, %v927
        %v929 = vpop.f32.mrf.mxu0
        %930 = vmatprep.mubr.bf16.mxu0 0
        %931 = vmatmul.mubr.bf16.gmra.mxu0 %v742
        %v932 = vpop.f32.mrf.mxu0
        %v933 = vadd.f32 %v769, %v932
        %v934 = vpop.f32.mrf.mxu0
        %v935 = vpop.f32.mrf.mxu0
        %v936 = vadd.f32 %v769, %v935
        %v937 = vpop.f32.mrf.mxu0
        %938 = vmatprep.mubr.bf16.mxu0 0
        %939 = vmatmul.mubr.bf16.gmra.mxu0 %v743
        %v940 = vpop.f32.mrf.mxu0
        %v941 = vadd.f32 %v769, %v940
        %v942 = vpop.f32.mrf.mxu0
        %v943 = vpop.f32.mrf.mxu0
        %v944 = vadd.f32 %v769, %v943
        %v945 = vpop.f32.mrf.mxu0
        %946 = vmatprep.mubr.bf16.mxu0 0
        %947 = vmatmul.mubr.bf16.gmra.mxu0 %v744
        %v948 = vpop.f32.mrf.mxu0
        %v949 = vadd.f32 %v769, %v948
        %v950 = vpop.f32.mrf.mxu0
        %v951 = vpop.f32.mrf.mxu0
        %v952 = vadd.f32 %v769, %v951
        %v953 = vpop.f32.mrf.mxu0
        %954 = vmatprep.mubr.bf16.mxu0 0
        %955 = vmatmul.mubr.bf16.gmra.mxu0 %v745
        %v956 = vpop.f32.mrf.mxu0
        %v957 = vadd.f32 %v769, %v956
        %v958 = vpop.f32.mrf.mxu0
        %v959 = vpop.f32.mrf.mxu0
        %v960 = vadd.f32 %v769, %v959
        %v961 = vpop.f32.mrf.mxu0
        %962 = vmatprep.mubr.bf16.mxu0 0
        %963 = vmatmul.mubr.bf16.gmra.mxu0 %v746
        %v964 = vpop.f32.mrf.mxu0
        %v965 = vadd.f32 %v769, %v964
        %v966 = vpop.f32.mrf.mxu0
        %v967 = vpop.f32.mrf.mxu0
        %v968 = vadd.f32 %v769, %v967
        %v969 = vpop.f32.mrf.mxu0
        %970 = vmatprep.mubr.bf16.mxu0 0
        %971 = vmatmul.mubr.bf16.gmra.mxu0 %v747
        %v972 = vpop.f32.mrf.mxu0
        %v973 = vadd.f32 %v769, %v972
        %v974 = vpop.f32.mrf.mxu0
        %v975 = vpop.f32.mrf.mxu0
        %v976 = vadd.f32 %v769, %v975
        %v977 = vpop.f32.mrf.mxu0
        %978 = vdwg.mxu0
        %v979 = vmax.f32 %v853, 0.0
        %v980 = vmax.f32 %v856, 0.0
        %v981 = vmax.f32 %v861, 0.0
        %v982 = vmax.f32 %v864, 0.0
        %v983 = vmax.f32 %v869, 0.0
        %v984 = vmax.f32 %v872, 0.0
        %v985 = vmax.f32 %v877, 0.0
        %v986 = vmax.f32 %v880, 0.0
        %v987 = vmax.f32 %v885, 0.0
        %v988 = vmax.f32 %v888, 0.0
        %v989 = vmax.f32 %v893, 0.0
        %v990 = vmax.f32 %v896, 0.0
        %v991 = vmax.f32 %v901, 0.0
        %v992 = vmax.f32 %v904, 0.0
        %v993 = vmax.f32 %v909, 0.0
        %v994 = vmax.f32 %v912, 0.0
        %v995 = vmax.f32 %v917, 0.0
        %v996 = vmax.f32 %v920, 0.0
        %v997 = vmax.f32 %v925, 0.0
        %v998 = vmax.f32 %v928, 0.0
        %v999 = vmax.f32 %v933, 0.0
        %v1000 = vmax.f32 %v936, 0.0
        %v1001 = vmax.f32 %v941, 0.0
        %v1002 = vmax.f32 %v944, 0.0
        %v1003 = vmax.f32 %v949, 0.0
        %v1004 = vmax.f32 %v952, 0.0
        %v1005 = vmax.f32 %v957, 0.0
        %v1006 = vmax.f32 %v960, 0.0
        %v1007 = vmax.f32 %v965, 0.0
        %v1008 = vmax.f32 %v968, 0.0
        %v1009 = vmax.f32 %v973, 0.0
        %v1010 = vmax.f32 %v976, 0.0
        %v1011 = vpack.c.bf16 %v980, %v979
        %v1012 = vpack.c.bf16 %v982, %v981
        %v1013 = vpack.c.bf16 %v984, %v983
        %v1014 = vpack.c.bf16 %v986, %v985
        %v1015 = vpack.c.bf16 %v988, %v987
        %v1016 = vpack.c.bf16 %v990, %v989
        %v1017 = vpack.c.bf16 %v992, %v991
        %v1018 = vpack.c.bf16 %v994, %v993
        %v1019 = vpack.c.bf16 %v996, %v995
        %v1020 = vpack.c.bf16 %v998, %v997
        %v1021 = vpack.c.bf16 %v1000, %v999
        %v1022 = vpack.c.bf16 %v1002, %v1001
        %v1023 = vpack.c.bf16 %v1004, %v1003
        %v1024 = vpack.c.bf16 %v1006, %v1005
        %v1025 = vpack.c.bf16 %v1008, %v1007
        %v1026 = vpack.c.bf16 %v1010, %v1009
        %v1027 = vld [vmem:[#allocation8] sm:$0xff]
        %v1028 = vld [vmem:[#allocation8 + $0x8] sm:$0xff]
        %v1029 = vld [vmem:[#allocation8 + $0x10] sm:$0xff]
        %v1030 = vld [vmem:[#allocation8 + $0x18] sm:$0xff]
        %v1031 = vld [vmem:[#allocation8 + $0x20] sm:$0xff]
        %v1032 = vld [vmem:[#allocation8 + $0x28] sm:$0xff]
        %v1033 = vld [vmem:[#allocation8 + $0x30] sm:$0xff]
        %v1034 = vld [vmem:[#allocation8 + $0x38] sm:$0xff]
        %v1035 = vld [vmem:[#allocation8 + $0x40] sm:$0xff]
        %v1036 = vld [vmem:[#allocation8 + $0x48] sm:$0xff]
        %v1037 = vld [vmem:[#allocation8 + $0x50] sm:$0xff]
        %v1038 = vld [vmem:[#allocation8 + $0x58] sm:$0xff]
        %v1039 = vld [vmem:[#allocation8 + $0x60] sm:$0xff]
        %v1040 = vld [vmem:[#allocation8 + $0x68] sm:$0xff]
        %v1041 = vld [vmem:[#allocation8 + $0x70] sm:$0xff]
        %v1042 = vld [vmem:[#allocation8 + $0x78] sm:$0xff]
        %v1043 = vld [vmem:[#allocation8 + $0x80] sm:$0xff]
        %v1044 = vld [vmem:[#allocation8 + $0x88] sm:$0xff]
        %v1045 = vld [vmem:[#allocation8 + $0x90] sm:$0xff]
        %v1046 = vld [vmem:[#allocation8 + $0x98] sm:$0xff]
        %v1047 = vld [vmem:[#allocation8 + $0xa0] sm:$0xff]
        %v1048 = vld [vmem:[#allocation8 + $0xa8] sm:$0xff]
        %v1049 = vld [vmem:[#allocation8 + $0xb0] sm:$0xff]
        %v1050 = vld [vmem:[#allocation8 + $0xb8] sm:$0xff]
        %v1051 = vld [vmem:[#allocation8 + $0xc0] sm:$0xff]
        %v1052 = vld [vmem:[#allocation8 + $0xc8] sm:$0xff]
        %v1053 = vld [vmem:[#allocation8 + $0xd0] sm:$0xff]
        %v1054 = vld [vmem:[#allocation8 + $0xd8] sm:$0xff]
        %v1055 = vld [vmem:[#allocation8 + $0xe0] sm:$0xff]
        %v1056 = vld [vmem:[#allocation8 + $0xe8] sm:$0xff]
        %v1057 = vld [vmem:[#allocation8 + $0xf0] sm:$0xff]
        %v1058 = vld [vmem:[#allocation8 + $0xf8] sm:$0xff]
        %v1059 = vld [vmem:[#allocation10] ss:$4 sm:$0xf]
        %v1061 = vlaneseq
        %v1062 = vshrl.u32 %v1061, 7
        %v1063 = vsub.s32 0, %v1062
        %v1064 = vrot.slane %v1059, %v1063
        %v1065 = vlaneseq
        %v1066 = vshrl.u32 %v1065, 7
        %v1067 = vsub.s32 1, %v1066
        %v1068 = vrot.slane %v1059, %v1067
        %v1069 = vlaneseq
        %v1070 = vshrl.u32 %v1069, 7
        %v1071 = vsub.s32 2, %v1070
        %v1072 = vrot.slane %v1059, %v1071
        %v1073 = vlaneseq
        %v1074 = vshrl.u32 %v1073, 7
        %v1075 = vsub.s32 3, %v1074
        %v1076 = vrot.slane %v1059, %v1075
        %v1113 = vunpack.c.l.b16 %v1027
        %v1114 = vunpack.c.h.b16 %v1027
        %v1115 = vunpack.c.l.b16 %v1028
        %v1116 = vunpack.c.h.b16 %v1028
        %v1117 = vunpack.c.l.b16 %v1029
        %v1118 = vunpack.c.h.b16 %v1029
        %v1119 = vunpack.c.l.b16 %v1030
        %v1120 = vunpack.c.h.b16 %v1030
        %v1121 = vunpack.c.l.b16 %v1031
        %v1122 = vunpack.c.h.b16 %v1031
        %v1123 = vunpack.c.l.b16 %v1032
        %v1124 = vunpack.c.h.b16 %v1032
        %v1125 = vunpack.c.l.b16 %v1033
        %v1126 = vunpack.c.h.b16 %v1033
        %v1127 = vunpack.c.l.b16 %v1034
        %v1128 = vunpack.c.h.b16 %v1034
        %v1129 = vunpack.c.l.b16 %v1035
        %v1130 = vunpack.c.h.b16 %v1035
        %v1131 = vunpack.c.l.b16 %v1036
        %v1132 = vunpack.c.h.b16 %v1036
        %v1133 = vunpack.c.l.b16 %v1037
        %v1134 = vunpack.c.h.b16 %v1037
        %v1135 = vunpack.c.l.b16 %v1038
        %v1136 = vunpack.c.h.b16 %v1038
        %v1137 = vunpack.c.l.b16 %v1039
        %v1138 = vunpack.c.h.b16 %v1039
        %v1139 = vunpack.c.l.b16 %v1040
        %v1140 = vunpack.c.h.b16 %v1040
        %v1141 = vunpack.c.l.b16 %v1041
        %v1142 = vunpack.c.h.b16 %v1041
        %v1143 = vunpack.c.l.b16 %v1042
        %v1144 = vunpack.c.h.b16 %v1042
        %v1145 = vunpack.c.l.b16 %v1043
        %v1146 = vunpack.c.h.b16 %v1043
        %v1147 = vunpack.c.l.b16 %v1044
        %v1148 = vunpack.c.h.b16 %v1044
        %v1149 = vunpack.c.l.b16 %v1045
        %v1150 = vunpack.c.h.b16 %v1045
        %v1151 = vunpack.c.l.b16 %v1046
        %v1152 = vunpack.c.h.b16 %v1046
        %v1153 = vunpack.c.l.b16 %v1047
        %v1154 = vunpack.c.h.b16 %v1047
        %v1155 = vunpack.c.l.b16 %v1048
        %v1156 = vunpack.c.h.b16 %v1048
        %v1157 = vunpack.c.l.b16 %v1049
        %v1158 = vunpack.c.h.b16 %v1049
        %v1159 = vunpack.c.l.b16 %v1050
        %v1160 = vunpack.c.h.b16 %v1050
        %v1161 = vunpack.c.l.b16 %v1051
        %v1162 = vunpack.c.h.b16 %v1051
        %v1163 = vunpack.c.l.b16 %v1052
        %v1164 = vunpack.c.h.b16 %v1052
        %v1165 = vunpack.c.l.b16 %v1053
        %v1166 = vunpack.c.h.b16 %v1053
        %v1167 = vunpack.c.l.b16 %v1054
        %v1168 = vunpack.c.h.b16 %v1054
        %v1169 = vunpack.c.l.b16 %v1055
        %v1170 = vunpack.c.h.b16 %v1055
        %v1171 = vunpack.c.l.b16 %v1056
        %v1172 = vunpack.c.h.b16 %v1056
        %v1173 = vunpack.c.l.b16 %v1057
        %v1174 = vunpack.c.h.b16 %v1057
        %v1175 = vunpack.c.l.b16 %v1058
        %v1176 = vunpack.c.h.b16 %v1058
        %v1177 = vpack.c.b16 %v1117, %v1113
        %v1178 = vpack.c.b16 %v1118, %v1114
        %v1179 = vpack.c.b16 %v1119, %v1115
        %v1180 = vpack.c.b16 %v1120, %v1116
        %v1181 = vpack.c.b16 %v1125, %v1121
        %v1182 = vpack.c.b16 %v1126, %v1122
        %v1183 = vpack.c.b16 %v1127, %v1123
        %v1184 = vpack.c.b16 %v1128, %v1124
        %v1185 = vpack.c.b16 %v1133, %v1129
        %v1186 = vpack.c.b16 %v1134, %v1130
        %v1187 = vpack.c.b16 %v1135, %v1131
        %v1188 = vpack.c.b16 %v1136, %v1132
        %v1189 = vpack.c.b16 %v1141, %v1137
        %v1190 = vpack.c.b16 %v1142, %v1138
        %v1191 = vpack.c.b16 %v1143, %v1139
        %v1192 = vpack.c.b16 %v1144, %v1140
        %v1193 = vpack.c.b16 %v1149, %v1145
        %v1194 = vpack.c.b16 %v1150, %v1146
        %v1195 = vpack.c.b16 %v1151, %v1147
        %v1196 = vpack.c.b16 %v1152, %v1148
        %v1197 = vpack.c.b16 %v1157, %v1153
        %v1198 = vpack.c.b16 %v1158, %v1154
        %v1199 = vpack.c.b16 %v1159, %v1155
        %v1200 = vpack.c.b16 %v1160, %v1156
        %v1201 = vpack.c.b16 %v1165, %v1161
        %v1202 = vpack.c.b16 %v1166, %v1162
        %v1203 = vpack.c.b16 %v1167, %v1163
        %v1204 = vpack.c.b16 %v1168, %v1164
        %v1205 = vpack.c.b16 %v1173, %v1169
        %v1206 = vpack.c.b16 %v1174, %v1170
        %v1207 = vpack.c.b16 %v1175, %v1171
        %v1208 = vpack.c.b16 %v1176, %v1172
        %1241 = vmatprep.subr.bf16.mxu0 %v1206
        %1242 = vmatpush1.bf16.msra.mxu0 %v1205
        %1243 = vmatprep.subr.bf16.mxu0 %v1202
        %1244 = vmatpush1.bf16.msra.mxu0 %v1201
        %1245 = vmatprep.subr.bf16.mxu0 %v1198
        %1246 = vmatpush1.bf16.msra.mxu0 %v1197
        %1247 = vmatprep.subr.bf16.mxu0 %v1194
        %1248 = vmatpush1.bf16.msra.mxu0 %v1193
        %1249 = vmatprep.subr.bf16.mxu0 %v1190
        %1250 = vmatpush1.bf16.msra.mxu0 %v1189
        %1251 = vmatprep.subr.bf16.mxu0 %v1186
        %1252 = vmatpush1.bf16.msra.mxu0 %v1185
        %1253 = vmatprep.subr.bf16.mxu0 %v1182
        %1254 = vmatpush1.bf16.msra.mxu0 %v1181
        %1255 = vmatprep.subr.bf16.mxu0 %v1178
        %1256 = vmatpush1.bf16.msra.mxu0 %v1177
        %1257 = vmatprep.subr.bf16.mxu0 0
        %1258 = vmatpush2.bf16.msra.mxu0 0
        %1259 = vmatprep.subr.bf16.mxu0 0
        %1260 = vmatpush2.bf16.msra.mxu0 0
        %1261 = vmatprep.subr.bf16.mxu0 0
        %1262 = vmatpush2.bf16.msra.mxu0 0
        %1263 = vmatprep.subr.bf16.mxu0 0
        %1264 = vmatpush2.bf16.msra.mxu0 0
        %1265 = vmatprep.subr.bf16.mxu0 0
        %1266 = vmatpush2.bf16.msra.mxu0 0
        %1267 = vmatprep.subr.bf16.mxu0 0
        %1268 = vmatpush2.bf16.msra.mxu0 0
        %1269 = vmatprep.subr.bf16.mxu0 0
        %1270 = vmatpush2.bf16.msra.mxu0 0
        %1271 = vmatprep.subr.bf16.mxu0 0
        %1272 = vmatpush2.bf16.msra.mxu0 0
        %1273 = vmatprep.mubr.bf16.mxu0 0
        %1274 = vmatmul.mubr.bf16.gmra.mxu0 %v1011
        %v1275 = vpop.f32.mrf.mxu0
        %v1276 = vadd.f32 %v1064, %v1275
        %v1277 = vpop.f32.mrf.mxu0
        %v1278 = vadd.f32 %v1068, %v1277
        %v1279 = vpop.f32.mrf.mxu0
        %v1280 = vadd.f32 %v1064, %v1279
        %v1281 = vpop.f32.mrf.mxu0
        %v1282 = vadd.f32 %v1068, %v1281
        %1283 = vmatprep.mubr.bf16.mxu0 0
        %1284 = vmatmul.mubr.bf16.gmra.mxu0 %v1012
        %v1285 = vpop.f32.mrf.mxu0
        %v1286 = vadd.f32 %v1064, %v1285
        %v1287 = vpop.f32.mrf.mxu0
        %v1288 = vadd.f32 %v1068, %v1287
        %v1289 = vpop.f32.mrf.mxu0
        %v1290 = vadd.f32 %v1064, %v1289
        %v1291 = vpop.f32.mrf.mxu0
        %v1292 = vadd.f32 %v1068, %v1291
        %1293 = vmatprep.mubr.bf16.mxu0 0
        %1294 = vmatmul.mubr.bf16.gmra.mxu0 %v1013
        %v1295 = vpop.f32.mrf.mxu0
        %v1296 = vadd.f32 %v1064, %v1295
        %v1297 = vpop.f32.mrf.mxu0
        %v1298 = vadd.f32 %v1068, %v1297
        %v1299 = vpop.f32.mrf.mxu0
        %v1300 = vadd.f32 %v1064, %v1299
        %v1301 = vpop.f32.mrf.mxu0
        %v1302 = vadd.f32 %v1068, %v1301
        %1303 = vmatprep.mubr.bf16.mxu0 0
        %1304 = vmatmul.mubr.bf16.gmra.mxu0 %v1014
        %v1305 = vpop.f32.mrf.mxu0
        %v1306 = vadd.f32 %v1064, %v1305
        %v1307 = vpop.f32.mrf.mxu0
        %v1308 = vadd.f32 %v1068, %v1307
        %v1309 = vpop.f32.mrf.mxu0
        %v1310 = vadd.f32 %v1064, %v1309
        %v1311 = vpop.f32.mrf.mxu0
        %v1312 = vadd.f32 %v1068, %v1311
        %1313 = vmatprep.mubr.bf16.mxu0 0
        %1314 = vmatmul.mubr.bf16.gmra.mxu0 %v1015
        %v1315 = vpop.f32.mrf.mxu0
        %v1316 = vadd.f32 %v1064, %v1315
        %v1317 = vpop.f32.mrf.mxu0
        %v1318 = vadd.f32 %v1068, %v1317
        %v1319 = vpop.f32.mrf.mxu0
        %v1320 = vadd.f32 %v1064, %v1319
        %v1321 = vpop.f32.mrf.mxu0
        %v1322 = vadd.f32 %v1068, %v1321
        %1323 = vmatprep.mubr.bf16.mxu0 0
        %1324 = vmatmul.mubr.bf16.gmra.mxu0 %v1016
        %v1325 = vpop.f32.mrf.mxu0
        %v1326 = vadd.f32 %v1064, %v1325
        %v1327 = vpop.f32.mrf.mxu0
        %v1328 = vadd.f32 %v1068, %v1327
        %v1329 = vpop.f32.mrf.mxu0
        %v1330 = vadd.f32 %v1064, %v1329
        %v1331 = vpop.f32.mrf.mxu0
        %v1332 = vadd.f32 %v1068, %v1331
        %1333 = vmatprep.mubr.bf16.mxu0 0
        %1334 = vmatmul.mubr.bf16.gmra.mxu0 %v1017
        %v1335 = vpop.f32.mrf.mxu0
        %v1336 = vadd.f32 %v1064, %v1335
        %v1337 = vpop.f32.mrf.mxu0
        %v1338 = vadd.f32 %v1068, %v1337
        %v1339 = vpop.f32.mrf.mxu0
        %v1340 = vadd.f32 %v1064, %v1339
        %v1341 = vpop.f32.mrf.mxu0
        %v1342 = vadd.f32 %v1068, %v1341
        %1343 = vmatprep.mubr.bf16.mxu0 0
        %1344 = vmatmul.mubr.bf16.gmra.mxu0 %v1018
        %v1345 = vpop.f32.mrf.mxu0
        %v1346 = vadd.f32 %v1064, %v1345
        %v1347 = vpop.f32.mrf.mxu0
        %v1348 = vadd.f32 %v1068, %v1347
        %v1349 = vpop.f32.mrf.mxu0
        %v1350 = vadd.f32 %v1064, %v1349
        %v1351 = vpop.f32.mrf.mxu0
        %v1352 = vadd.f32 %v1068, %v1351
        %1353 = vmatprep.mubr.bf16.mxu0 0
        %1354 = vmatmul.mubr.bf16.gmra.mxu0 %v1019
        %v1355 = vpop.f32.mrf.mxu0
        %v1356 = vadd.f32 %v1064, %v1355
        %v1357 = vpop.f32.mrf.mxu0
        %v1358 = vadd.f32 %v1068, %v1357
        %v1359 = vpop.f32.mrf.mxu0
        %v1360 = vadd.f32 %v1064, %v1359
        %v1361 = vpop.f32.mrf.mxu0
        %v1362 = vadd.f32 %v1068, %v1361
        %1363 = vmatprep.mubr.bf16.mxu0 0
        %1364 = vmatmul.mubr.bf16.gmra.mxu0 %v1020
        %v1365 = vpop.f32.mrf.mxu0
        %v1366 = vadd.f32 %v1064, %v1365
        %v1367 = vpop.f32.mrf.mxu0
        %v1368 = vadd.f32 %v1068, %v1367
        %v1369 = vpop.f32.mrf.mxu0
        %v1370 = vadd.f32 %v1064, %v1369
        %v1371 = vpop.f32.mrf.mxu0
        %v1372 = vadd.f32 %v1068, %v1371
        %1373 = vmatprep.mubr.bf16.mxu0 0
        %1374 = vmatmul.mubr.bf16.gmra.mxu0 %v1021
        %v1375 = vpop.f32.mrf.mxu0
        %v1376 = vadd.f32 %v1064, %v1375
        %v1377 = vpop.f32.mrf.mxu0
        %v1378 = vadd.f32 %v1068, %v1377
        %v1379 = vpop.f32.mrf.mxu0
        %v1380 = vadd.f32 %v1064, %v1379
        %v1381 = vpop.f32.mrf.mxu0
        %v1382 = vadd.f32 %v1068, %v1381
        %1383 = vmatprep.mubr.bf16.mxu0 0
        %1384 = vmatmul.mubr.bf16.gmra.mxu0 %v1022
        %v1385 = vpop.f32.mrf.mxu0
        %v1386 = vadd.f32 %v1064, %v1385
        %v1387 = vpop.f32.mrf.mxu0
        %v1388 = vadd.f32 %v1068, %v1387
        %v1389 = vpop.f32.mrf.mxu0
        %v1390 = vadd.f32 %v1064, %v1389
        %v1391 = vpop.f32.mrf.mxu0
        %v1392 = vadd.f32 %v1068, %v1391
        %1393 = vmatprep.mubr.bf16.mxu0 0
        %1394 = vmatmul.mubr.bf16.gmra.mxu0 %v1023
        %v1395 = vpop.f32.mrf.mxu0
        %v1396 = vadd.f32 %v1064, %v1395
        %v1397 = vpop.f32.mrf.mxu0
        %v1398 = vadd.f32 %v1068, %v1397
        %v1399 = vpop.f32.mrf.mxu0
        %v1400 = vadd.f32 %v1064, %v1399
        %v1401 = vpop.f32.mrf.mxu0
        %v1402 = vadd.f32 %v1068, %v1401
        %1403 = vmatprep.mubr.bf16.mxu0 0
        %1404 = vmatmul.mubr.bf16.gmra.mxu0 %v1024
        %v1405 = vpop.f32.mrf.mxu0
        %v1406 = vadd.f32 %v1064, %v1405
        %v1407 = vpop.f32.mrf.mxu0
        %v1408 = vadd.f32 %v1068, %v1407
        %v1409 = vpop.f32.mrf.mxu0
        %v1410 = vadd.f32 %v1064, %v1409
        %v1411 = vpop.f32.mrf.mxu0
        %v1412 = vadd.f32 %v1068, %v1411
        %1413 = vmatprep.mubr.bf16.mxu0 0
        %1414 = vmatmul.mubr.bf16.gmra.mxu0 %v1025
        %v1415 = vpop.f32.mrf.mxu0
        %v1416 = vadd.f32 %v1064, %v1415
        %v1417 = vpop.f32.mrf.mxu0
        %v1418 = vadd.f32 %v1068, %v1417
        %v1419 = vpop.f32.mrf.mxu0
        %v1420 = vadd.f32 %v1064, %v1419
        %v1421 = vpop.f32.mrf.mxu0
        %v1422 = vadd.f32 %v1068, %v1421
        %1423 = vmatprep.mubr.bf16.mxu0 0
        %1424 = vmatmul.mubr.bf16.gmra.mxu0 %v1026
        %v1425 = vpop.f32.mrf.mxu0
        %v1426 = vadd.f32 %v1064, %v1425
        %v1427 = vpop.f32.mrf.mxu0
        %v1428 = vadd.f32 %v1068, %v1427
        %v1429 = vpop.f32.mrf.mxu0
        %v1430 = vadd.f32 %v1064, %v1429
        %v1431 = vpop.f32.mrf.mxu0
        %v1432 = vadd.f32 %v1068, %v1431
        %1433 = vdwg.mxu0
        %1434 = vmatprep.subr.bf16.mxu0 %v1208
        %1435 = vmatpush1.bf16.msra.mxu0 %v1207
        %1436 = vmatprep.subr.bf16.mxu0 %v1204
        %1437 = vmatpush1.bf16.msra.mxu0 %v1203
        %1438 = vmatprep.subr.bf16.mxu0 %v1200
        %1439 = vmatpush1.bf16.msra.mxu0 %v1199
        %1440 = vmatprep.subr.bf16.mxu0 %v1196
        %1441 = vmatpush1.bf16.msra.mxu0 %v1195
        %1442 = vmatprep.subr.bf16.mxu0 %v1192
        %1443 = vmatpush1.bf16.msra.mxu0 %v1191
        %1444 = vmatprep.subr.bf16.mxu0 %v1188
        %1445 = vmatpush1.bf16.msra.mxu0 %v1187
        %1446 = vmatprep.subr.bf16.mxu0 %v1184
        %1447 = vmatpush1.bf16.msra.mxu0 %v1183
        %1448 = vmatprep.subr.bf16.mxu0 %v1180
        %1449 = vmatpush1.bf16.msra.mxu0 %v1179
        %1450 = vmatprep.subr.bf16.mxu0 0
        %1451 = vmatpush2.bf16.msra.mxu0 0
        %1452 = vmatprep.subr.bf16.mxu0 0
        %1453 = vmatpush2.bf16.msra.mxu0 0
        %1454 = vmatprep.subr.bf16.mxu0 0
        %1455 = vmatpush2.bf16.msra.mxu0 0
        %1456 = vmatprep.subr.bf16.mxu0 0
        %1457 = vmatpush2.bf16.msra.mxu0 0
        %1458 = vmatprep.subr.bf16.mxu0 0
        %1459 = vmatpush2.bf16.msra.mxu0 0
        %1460 = vmatprep.subr.bf16.mxu0 0
        %1461 = vmatpush2.bf16.msra.mxu0 0
        %1462 = vmatprep.subr.bf16.mxu0 0
        %1463 = vmatpush2.bf16.msra.mxu0 0
        %1464 = vmatprep.subr.bf16.mxu0 0
        %1465 = vmatpush2.bf16.msra.mxu0 0
        %1466 = vmatprep.mubr.bf16.mxu0 0
        %1467 = vmatmul.mubr.bf16.gmra.mxu0 %v1011
        %v1468 = vpop.f32.mrf.mxu0
        %v1469 = vadd.f32 %v1072, %v1468
        %v1470 = vpop.f32.mrf.mxu0
        %v1471 = vadd.f32 %v1076, %v1470
        %v1472 = vpop.f32.mrf.mxu0
        %v1473 = vadd.f32 %v1072, %v1472
        %v1474 = vpop.f32.mrf.mxu0
        %v1475 = vadd.f32 %v1076, %v1474
        %1476 = vmatprep.mubr.bf16.mxu0 0
        %1477 = vmatmul.mubr.bf16.gmra.mxu0 %v1012
        %v1478 = vpop.f32.mrf.mxu0
        %v1479 = vadd.f32 %v1072, %v1478
        %v1480 = vpop.f32.mrf.mxu0
        %v1481 = vadd.f32 %v1076, %v1480
        %v1482 = vpop.f32.mrf.mxu0
        %v1483 = vadd.f32 %v1072, %v1482
        %v1484 = vpop.f32.mrf.mxu0
        %v1485 = vadd.f32 %v1076, %v1484
        %1486 = vmatprep.mubr.bf16.mxu0 0
        %1487 = vmatmul.mubr.bf16.gmra.mxu0 %v1013
        %v1488 = vpop.f32.mrf.mxu0
        %v1489 = vadd.f32 %v1072, %v1488
        %v1490 = vpop.f32.mrf.mxu0
        %v1491 = vadd.f32 %v1076, %v1490
        %v1492 = vpop.f32.mrf.mxu0
        %v1493 = vadd.f32 %v1072, %v1492
        %v1494 = vpop.f32.mrf.mxu0
        %v1495 = vadd.f32 %v1076, %v1494
        %1496 = vmatprep.mubr.bf16.mxu0 0
        %1497 = vmatmul.mubr.bf16.gmra.mxu0 %v1014
        %v1498 = vpop.f32.mrf.mxu0
        %v1499 = vadd.f32 %v1072, %v1498
        %v1500 = vpop.f32.mrf.mxu0
        %v1501 = vadd.f32 %v1076, %v1500
        %v1502 = vpop.f32.mrf.mxu0
        %v1503 = vadd.f32 %v1072, %v1502
        %v1504 = vpop.f32.mrf.mxu0
        %v1505 = vadd.f32 %v1076, %v1504
        %1506 = vmatprep.mubr.bf16.mxu0 0
        %1507 = vmatmul.mubr.bf16.gmra.mxu0 %v1015
        %v1508 = vpop.f32.mrf.mxu0
        %v1509 = vadd.f32 %v1072, %v1508
        %v1510 = vpop.f32.mrf.mxu0
        %v1511 = vadd.f32 %v1076, %v1510
        %v1512 = vpop.f32.mrf.mxu0
        %v1513 = vadd.f32 %v1072, %v1512
        %v1514 = vpop.f32.mrf.mxu0
        %v1515 = vadd.f32 %v1076, %v1514
        %1516 = vmatprep.mubr.bf16.mxu0 0
        %1517 = vmatmul.mubr.bf16.gmra.mxu0 %v1016
        %v1518 = vpop.f32.mrf.mxu0
        %v1519 = vadd.f32 %v1072, %v1518
        %v1520 = vpop.f32.mrf.mxu0
        %v1521 = vadd.f32 %v1076, %v1520
        %v1522 = vpop.f32.mrf.mxu0
        %v1523 = vadd.f32 %v1072, %v1522
        %v1524 = vpop.f32.mrf.mxu0
        %v1525 = vadd.f32 %v1076, %v1524
        %1526 = vmatprep.mubr.bf16.mxu0 0
        %1527 = vmatmul.mubr.bf16.gmra.mxu0 %v1017
        %v1528 = vpop.f32.mrf.mxu0
        %v1529 = vadd.f32 %v1072, %v1528
        %v1530 = vpop.f32.mrf.mxu0
        %v1531 = vadd.f32 %v1076, %v1530
        %v1532 = vpop.f32.mrf.mxu0
        %v1533 = vadd.f32 %v1072, %v1532
        %v1534 = vpop.f32.mrf.mxu0
        %v1535 = vadd.f32 %v1076, %v1534
        %1536 = vmatprep.mubr.bf16.mxu0 0
        %1537 = vmatmul.mubr.bf16.gmra.mxu0 %v1018
        %v1538 = vpop.f32.mrf.mxu0
        %v1539 = vadd.f32 %v1072, %v1538
        %v1540 = vpop.f32.mrf.mxu0
        %v1541 = vadd.f32 %v1076, %v1540
        %v1542 = vpop.f32.mrf.mxu0
        %v1543 = vadd.f32 %v1072, %v1542
        %v1544 = vpop.f32.mrf.mxu0
        %v1545 = vadd.f32 %v1076, %v1544
        %1546 = vmatprep.mubr.bf16.mxu0 0
        %1547 = vmatmul.mubr.bf16.gmra.mxu0 %v1019
        %v1548 = vpop.f32.mrf.mxu0
        %v1549 = vadd.f32 %v1072, %v1548
        %v1550 = vpop.f32.mrf.mxu0
        %v1551 = vadd.f32 %v1076, %v1550
        %v1552 = vpop.f32.mrf.mxu0
        %v1553 = vadd.f32 %v1072, %v1552
        %v1554 = vpop.f32.mrf.mxu0
        %v1555 = vadd.f32 %v1076, %v1554
        %1556 = vmatprep.mubr.bf16.mxu0 0
        %1557 = vmatmul.mubr.bf16.gmra.mxu0 %v1020
        %v1558 = vpop.f32.mrf.mxu0
        %v1559 = vadd.f32 %v1072, %v1558
        %v1560 = vpop.f32.mrf.mxu0
        %v1561 = vadd.f32 %v1076, %v1560
        %v1562 = vpop.f32.mrf.mxu0
        %v1563 = vadd.f32 %v1072, %v1562
        %v1564 = vpop.f32.mrf.mxu0
        %v1565 = vadd.f32 %v1076, %v1564
        %1566 = vmatprep.mubr.bf16.mxu0 0
        %1567 = vmatmul.mubr.bf16.gmra.mxu0 %v1021
        %v1568 = vpop.f32.mrf.mxu0
        %v1569 = vadd.f32 %v1072, %v1568
        %v1570 = vpop.f32.mrf.mxu0
        %v1571 = vadd.f32 %v1076, %v1570
        %v1572 = vpop.f32.mrf.mxu0
        %v1573 = vadd.f32 %v1072, %v1572
        %v1574 = vpop.f32.mrf.mxu0
        %v1575 = vadd.f32 %v1076, %v1574
        %1576 = vmatprep.mubr.bf16.mxu0 0
        %1577 = vmatmul.mubr.bf16.gmra.mxu0 %v1022
        %v1578 = vpop.f32.mrf.mxu0
        %v1579 = vadd.f32 %v1072, %v1578
        %v1580 = vpop.f32.mrf.mxu0
        %v1581 = vadd.f32 %v1076, %v1580
        %v1582 = vpop.f32.mrf.mxu0
        %v1583 = vadd.f32 %v1072, %v1582
        %v1584 = vpop.f32.mrf.mxu0
        %v1585 = vadd.f32 %v1076, %v1584
        %1586 = vmatprep.mubr.bf16.mxu0 0
        %1587 = vmatmul.mubr.bf16.gmra.mxu0 %v1023
        %v1588 = vpop.f32.mrf.mxu0
        %v1589 = vadd.f32 %v1072, %v1588
        %v1590 = vpop.f32.mrf.mxu0
        %v1591 = vadd.f32 %v1076, %v1590
        %v1592 = vpop.f32.mrf.mxu0
        %v1593 = vadd.f32 %v1072, %v1592
        %v1594 = vpop.f32.mrf.mxu0
        %v1595 = vadd.f32 %v1076, %v1594
        %1596 = vmatprep.mubr.bf16.mxu0 0
        %1597 = vmatmul.mubr.bf16.gmra.mxu0 %v1024
        %v1598 = vpop.f32.mrf.mxu0
        %v1599 = vadd.f32 %v1072, %v1598
        %v1600 = vpop.f32.mrf.mxu0
        %v1601 = vadd.f32 %v1076, %v1600
        %v1602 = vpop.f32.mrf.mxu0
        %v1603 = vadd.f32 %v1072, %v1602
        %v1604 = vpop.f32.mrf.mxu0
        %v1605 = vadd.f32 %v1076, %v1604
        %1606 = vmatprep.mubr.bf16.mxu0 0
        %1607 = vmatmul.mubr.bf16.gmra.mxu0 %v1025
        %v1608 = vpop.f32.mrf.mxu0
        %v1609 = vadd.f32 %v1072, %v1608
        %v1610 = vpop.f32.mrf.mxu0
        %v1611 = vadd.f32 %v1076, %v1610
        %v1612 = vpop.f32.mrf.mxu0
        %v1613 = vadd.f32 %v1072, %v1612
        %v1614 = vpop.f32.mrf.mxu0
        %v1615 = vadd.f32 %v1076, %v1614
        %1616 = vmatprep.mubr.bf16.mxu0 0
        %1617 = vmatmul.mubr.bf16.gmra.mxu0 %v1026
        %v1618 = vpop.f32.mrf.mxu0
        %v1619 = vadd.f32 %v1072, %v1618
        %v1620 = vpop.f32.mrf.mxu0
        %v1621 = vadd.f32 %v1076, %v1620
        %v1622 = vpop.f32.mrf.mxu0
        %v1623 = vadd.f32 %v1072, %v1622
        %v1624 = vpop.f32.mrf.mxu0
        %v1625 = vadd.f32 %v1076, %v1624
        %1626 = vdwg.mxu0
        %v1627 = vpack.c.bf16 %v1280, %v1276
        %v1628 = vpack.c.bf16 %v1282, %v1278
        %v1629 = vpack.c.bf16 %v1473, %v1469
        %v1630 = vpack.c.bf16 %v1475, %v1471
        %v1631 = vpack.c.bf16 %v1290, %v1286
        %v1632 = vpack.c.bf16 %v1292, %v1288
        %v1633 = vpack.c.bf16 %v1483, %v1479
        %v1634 = vpack.c.bf16 %v1485, %v1481
        %v1635 = vpack.c.bf16 %v1300, %v1296
        %v1636 = vpack.c.bf16 %v1302, %v1298
        %v1637 = vpack.c.bf16 %v1493, %v1489
        %v1638 = vpack.c.bf16 %v1495, %v1491
        %v1639 = vpack.c.bf16 %v1310, %v1306
        %v1640 = vpack.c.bf16 %v1312, %v1308
        %v1641 = vpack.c.bf16 %v1503, %v1499
        %v1642 = vpack.c.bf16 %v1505, %v1501
        %v1643 = vpack.c.bf16 %v1320, %v1316
        %v1644 = vpack.c.bf16 %v1322, %v1318
        %v1645 = vpack.c.bf16 %v1513, %v1509
        %v1646 = vpack.c.bf16 %v1515, %v1511
        %v1647 = vpack.c.bf16 %v1330, %v1326
        %v1648 = vpack.c.bf16 %v1332, %v1328
        %v1649 = vpack.c.bf16 %v1523, %v1519
        %v1650 = vpack.c.bf16 %v1525, %v1521
        %v1651 = vpack.c.bf16 %v1340, %v1336
        %v1652 = vpack.c.bf16 %v1342, %v1338
        %v1653 = vpack.c.bf16 %v1533, %v1529
        %v1654 = vpack.c.bf16 %v1535, %v1531
        %v1655 = vpack.c.bf16 %v1350, %v1346
        %v1656 = vpack.c.bf16 %v1352, %v1348
        %v1657 = vpack.c.bf16 %v1543, %v1539
        %v1658 = vpack.c.bf16 %v1545, %v1541
        %v1659 = vpack.c.bf16 %v1360, %v1356
        %v1660 = vpack.c.bf16 %v1362, %v1358
        %v1661 = vpack.c.bf16 %v1553, %v1549
        %v1662 = vpack.c.bf16 %v1555, %v1551
        %v1663 = vpack.c.bf16 %v1370, %v1366
        %v1664 = vpack.c.bf16 %v1372, %v1368
        %v1665 = vpack.c.bf16 %v1563, %v1559
        %v1666 = vpack.c.bf16 %v1565, %v1561
        %v1667 = vpack.c.bf16 %v1380, %v1376
        %v1668 = vpack.c.bf16 %v1382, %v1378
        %v1669 = vpack.c.bf16 %v1573, %v1569
        %v1670 = vpack.c.bf16 %v1575, %v1571
        %v1671 = vpack.c.bf16 %v1390, %v1386
        %v1672 = vpack.c.bf16 %v1392, %v1388
        %v1673 = vpack.c.bf16 %v1583, %v1579
        %v1674 = vpack.c.bf16 %v1585, %v1581
        %v1675 = vpack.c.bf16 %v1400, %v1396
        %v1676 = vpack.c.bf16 %v1402, %v1398
        %v1677 = vpack.c.bf16 %v1593, %v1589
        %v1678 = vpack.c.bf16 %v1595, %v1591
        %v1679 = vpack.c.bf16 %v1410, %v1406
        %v1680 = vpack.c.bf16 %v1412, %v1408
        %v1681 = vpack.c.bf16 %v1603, %v1599
        %v1682 = vpack.c.bf16 %v1605, %v1601
        %v1683 = vpack.c.bf16 %v1420, %v1416
        %v1684 = vpack.c.bf16 %v1422, %v1418
        %v1685 = vpack.c.bf16 %v1613, %v1609
        %v1686 = vpack.c.bf16 %v1615, %v1611
        %v1687 = vpack.c.bf16 %v1430, %v1426
        %v1688 = vpack.c.bf16 %v1432, %v1428
        %v1689 = vpack.c.bf16 %v1623, %v1619
        %v1690 = vpack.c.bf16 %v1625, %v1621
        %v1691 = vld [vmem:[#allocation11] sm:$0xf]
        %v1692 = vld [vmem:[#allocation11 + $0x4] sm:$0xf]
        %v1693 = vld [vmem:[#allocation11 + $0x8] sm:$0xf]
        %v1694 = vld [vmem:[#allocation11 + $0xc] sm:$0xf]
        %v1695 = vld [vmem:[#allocation11 + $0x10] sm:$0xf]
        %v1696 = vld [vmem:[#allocation11 + $0x14] sm:$0xf]
        %v1697 = vld [vmem:[#allocation11 + $0x18] sm:$0xf]
        %v1698 = vld [vmem:[#allocation11 + $0x1c] sm:$0xf]
        %v1699 = vld [vmem:[#allocation11 + $0x20] sm:$0xf]
        %v1700 = vld [vmem:[#allocation11 + $0x24] sm:$0xf]
        %v1701 = vld [vmem:[#allocation11 + $0x28] sm:$0xf]
        %v1702 = vld [vmem:[#allocation11 + $0x2c] sm:$0xf]
        %v1703 = vld [vmem:[#allocation11 + $0x30] sm:$0xf]
        %v1704 = vld [vmem:[#allocation11 + $0x34] sm:$0xf]
        %v1705 = vld [vmem:[#allocation11 + $0x38] sm:$0xf]
        %v1706 = vld [vmem:[#allocation11 + $0x3c] sm:$0xf]
        %v1707 = vld [vmem:[#allocation11 + $0x40] sm:$0xf]
        %v1708 = vld [vmem:[#allocation11 + $0x44] sm:$0xf]
        %v1709 = vld [vmem:[#allocation11 + $0x48] sm:$0xf]
        %v1710 = vld [vmem:[#allocation11 + $0x4c] sm:$0xf]
        %v1711 = vld [vmem:[#allocation11 + $0x50] sm:$0xf]
        %v1712 = vld [vmem:[#allocation11 + $0x54] sm:$0xf]
        %v1713 = vld [vmem:[#allocation11 + $0x58] sm:$0xf]
        %v1714 = vld [vmem:[#allocation11 + $0x5c] sm:$0xf]
        %v1715 = vld [vmem:[#allocation11 + $0x60] sm:$0xf]
        %v1716 = vld [vmem:[#allocation11 + $0x64] sm:$0xf]
        %v1717 = vld [vmem:[#allocation11 + $0x68] sm:$0xf]
        %v1718 = vld [vmem:[#allocation11 + $0x6c] sm:$0xf]
        %v1719 = vld [vmem:[#allocation11 + $0x70] sm:$0xf]
        %v1720 = vld [vmem:[#allocation11 + $0x74] sm:$0xf]
        %v1721 = vld [vmem:[#allocation11 + $0x78] sm:$0xf]
        %v1722 = vld [vmem:[#allocation11 + $0x7c] sm:$0xf]
        %v1723 = vld [vmem:[#allocation11 + $0x80] sm:$0xf]
        %v1724 = vld [vmem:[#allocation11 + $0x84] sm:$0xf]
        %v1725 = vld [vmem:[#allocation11 + $0x88] sm:$0xf]
        %v1726 = vld [vmem:[#allocation11 + $0x8c] sm:$0xf]
        %v1727 = vld [vmem:[#allocation11 + $0x90] sm:$0xf]
        %v1728 = vld [vmem:[#allocation11 + $0x94] sm:$0xf]
        %v1729 = vld [vmem:[#allocation11 + $0x98] sm:$0xf]
        %v1730 = vld [vmem:[#allocation11 + $0x9c] sm:$0xf]
        %v1731 = vld [vmem:[#allocation11 + $0xa0] sm:$0xf]
        %v1732 = vld [vmem:[#allocation11 + $0xa4] sm:$0xf]
        %v1733 = vld [vmem:[#allocation11 + $0xa8] sm:$0xf]
        %v1734 = vld [vmem:[#allocation11 + $0xac] sm:$0xf]
        %v1735 = vld [vmem:[#allocation11 + $0xb0] sm:$0xf]
        %v1736 = vld [vmem:[#allocation11 + $0xb4] sm:$0xf]
        %v1737 = vld [vmem:[#allocation11 + $0xb8] sm:$0xf]
        %v1738 = vld [vmem:[#allocation11 + $0xbc] sm:$0xf]
        %v1739 = vld [vmem:[#allocation11 + $0xc0] sm:$0xf]
        %v1740 = vld [vmem:[#allocation11 + $0xc4] sm:$0xf]
        %v1741 = vld [vmem:[#allocation11 + $0xc8] sm:$0xf]
        %v1742 = vld [vmem:[#allocation11 + $0xcc] sm:$0xf]
        %v1743 = vld [vmem:[#allocation11 + $0xd0] sm:$0xf]
        %v1744 = vld [vmem:[#allocation11 + $0xd4] sm:$0xf]
        %v1745 = vld [vmem:[#allocation11 + $0xd8] sm:$0xf]
        %v1746 = vld [vmem:[#allocation11 + $0xdc] sm:$0xf]
        %v1747 = vld [vmem:[#allocation11 + $0xe0] sm:$0xf]
        %v1748 = vld [vmem:[#allocation11 + $0xe4] sm:$0xf]
        %v1749 = vld [vmem:[#allocation11 + $0xe8] sm:$0xf]
        %v1750 = vld [vmem:[#allocation11 + $0xec] sm:$0xf]
        %v1751 = vld [vmem:[#allocation11 + $0xf0] sm:$0xf]
        %v1752 = vld [vmem:[#allocation11 + $0xf4] sm:$0xf]
        %v1753 = vld [vmem:[#allocation11 + $0xf8] sm:$0xf]
        %v1754 = vld [vmem:[#allocation11 + $0xfc] sm:$0xf]
        %v1755 = vld [vmem:[#allocation7 + $0x2] sm:$0x1]
        %v1756 = vlaneseq
        %v1757 = vshrl.u32 %v1756, 7
        %v1758 = vsub.s32 0, %v1757
        %v1759 = vrot.slane %v1755, %v1758
        %v1824 = vunpack.c.l.b16 %v1691
        %v1825 = vunpack.c.l.b16 %v1692
        %v1826 = vunpack.c.l.b16 %v1693
        %v1827 = vunpack.c.l.b16 %v1694
        %v1828 = vunpack.c.l.b16 %v1695
        %v1829 = vunpack.c.l.b16 %v1696
        %v1830 = vunpack.c.l.b16 %v1697
        %v1831 = vunpack.c.l.b16 %v1698
        %v1832 = vunpack.c.l.b16 %v1699
        %v1833 = vunpack.c.l.b16 %v1700
        %v1834 = vunpack.c.l.b16 %v1701
        %v1835 = vunpack.c.l.b16 %v1702
        %v1836 = vunpack.c.l.b16 %v1703
        %v1837 = vunpack.c.l.b16 %v1704
        %v1838 = vunpack.c.l.b16 %v1705
        %v1839 = vunpack.c.l.b16 %v1706
        %v1840 = vunpack.c.l.b16 %v1707
        %v1841 = vunpack.c.l.b16 %v1708
        %v1842 = vunpack.c.l.b16 %v1709
        %v1843 = vunpack.c.l.b16 %v1710
        %v1844 = vunpack.c.l.b16 %v1711
        %v1845 = vunpack.c.l.b16 %v1712
        %v1846 = vunpack.c.l.b16 %v1713
        %v1847 = vunpack.c.l.b16 %v1714
        %v1848 = vunpack.c.l.b16 %v1715
        %v1849 = vunpack.c.l.b16 %v1716
        %v1850 = vunpack.c.l.b16 %v1717
        %v1851 = vunpack.c.l.b16 %v1718
        %v1852 = vunpack.c.l.b16 %v1719
        %v1853 = vunpack.c.l.b16 %v1720
        %v1854 = vunpack.c.l.b16 %v1721
        %v1855 = vunpack.c.l.b16 %v1722
        %v1856 = vunpack.c.l.b16 %v1723
        %v1857 = vunpack.c.l.b16 %v1724
        %v1858 = vunpack.c.l.b16 %v1725
        %v1859 = vunpack.c.l.b16 %v1726
        %v1860 = vunpack.c.l.b16 %v1727
        %v1861 = vunpack.c.l.b16 %v1728
        %v1862 = vunpack.c.l.b16 %v1729
        %v1863 = vunpack.c.l.b16 %v1730
        %v1864 = vunpack.c.l.b16 %v1731
        %v1865 = vunpack.c.l.b16 %v1732
        %v1866 = vunpack.c.l.b16 %v1733
        %v1867 = vunpack.c.l.b16 %v1734
        %v1868 = vunpack.c.l.b16 %v1735
        %v1869 = vunpack.c.l.b16 %v1736
        %v1870 = vunpack.c.l.b16 %v1737
        %v1871 = vunpack.c.l.b16 %v1738
        %v1872 = vunpack.c.l.b16 %v1739
        %v1873 = vunpack.c.l.b16 %v1740
        %v1874 = vunpack.c.l.b16 %v1741
        %v1875 = vunpack.c.l.b16 %v1742
        %v1876 = vunpack.c.l.b16 %v1743
        %v1877 = vunpack.c.l.b16 %v1744
        %v1878 = vunpack.c.l.b16 %v1745
        %v1879 = vunpack.c.l.b16 %v1746
        %v1880 = vunpack.c.l.b16 %v1747
        %v1881 = vunpack.c.l.b16 %v1748
        %v1882 = vunpack.c.l.b16 %v1749
        %v1883 = vunpack.c.l.b16 %v1750
        %v1884 = vunpack.c.l.b16 %v1751
        %v1885 = vunpack.c.l.b16 %v1752
        %v1886 = vunpack.c.l.b16 %v1753
        %v1887 = vunpack.c.l.b16 %v1754
        %v1888 = vpack.c.b16 %v1825, %v1824
        %v1889 = vpack.c.b16 %v1827, %v1826
        %v1890 = vpack.c.b16 %v1829, %v1828
        %v1891 = vpack.c.b16 %v1831, %v1830
        %v1892 = vpack.c.b16 %v1833, %v1832
        %v1893 = vpack.c.b16 %v1835, %v1834
        %v1894 = vpack.c.b16 %v1837, %v1836
        %v1895 = vpack.c.b16 %v1839, %v1838
        %v1896 = vpack.c.b16 %v1841, %v1840
        %v1897 = vpack.c.b16 %v1843, %v1842
        %v1898 = vpack.c.b16 %v1845, %v1844
        %v1899 = vpack.c.b16 %v1847, %v1846
        %v1900 = vpack.c.b16 %v1849, %v1848
        %v1901 = vpack.c.b16 %v1851, %v1850
        %v1902 = vpack.c.b16 %v1853, %v1852
        %v1903 = vpack.c.b16 %v1855, %v1854
        %v1904 = vpack.c.b16 %v1857, %v1856
        %v1905 = vpack.c.b16 %v1859, %v1858
        %v1906 = vpack.c.b16 %v1861, %v1860
        %v1907 = vpack.c.b16 %v1863, %v1862
        %v1908 = vpack.c.b16 %v1865, %v1864
        %v1909 = vpack.c.b16 %v1867, %v1866
        %v1910 = vpack.c.b16 %v1869, %v1868
        %v1911 = vpack.c.b16 %v1871, %v1870
        %v1912 = vpack.c.b16 %v1873, %v1872
        %v1913 = vpack.c.b16 %v1875, %v1874
        %v1914 = vpack.c.b16 %v1877, %v1876
        %v1915 = vpack.c.b16 %v1879, %v1878
        %v1916 = vpack.c.b16 %v1881, %v1880
        %v1917 = vpack.c.b16 %v1883, %v1882
        %v1918 = vpack.c.b16 %v1885, %v1884
        %v1919 = vpack.c.b16 %v1887, %v1886
        %1952 = vmatprep.subr.bf16.mxu0 0
        %1953 = vmatpush1.bf16.msra.mxu0 %v1895
        %1954 = vmatprep.subr.bf16.mxu0 0
        %1955 = vmatpush1.bf16.msra.mxu0 %v1894
        %1956 = vmatprep.subr.bf16.mxu0 0
        %1957 = vmatpush1.bf16.msra.mxu0 %v1893
        %1958 = vmatprep.subr.bf16.mxu0 0
        %1959 = vmatpush1.bf16.msra.mxu0 %v1892
        %1960 = vmatprep.subr.bf16.mxu0 0
        %1961 = vmatpush1.bf16.msra.mxu0 %v1891
        %1962 = vmatprep.subr.bf16.mxu0 0
        %1963 = vmatpush1.bf16.msra.mxu0 %v1890
        %1964 = vmatprep.subr.bf16.mxu0 0
        %1965 = vmatpush1.bf16.msra.mxu0 %v1889
        %1966 = vmatprep.subr.bf16.mxu0 0
        %1967 = vmatpush1.bf16.msra.mxu0 %v1888
        %1968 = vmatprep.subr.bf16.mxu0 0
        %1969 = vmatpush2.bf16.msra.mxu0 %v1903
        %1970 = vmatprep.subr.bf16.mxu0 0
        %1971 = vmatpush2.bf16.msra.mxu0 %v1902
        %1972 = vmatprep.subr.bf16.mxu0 0
        %1973 = vmatpush2.bf16.msra.mxu0 %v1901
        %1974 = vmatprep.subr.bf16.mxu0 0
        %1975 = vmatpush2.bf16.msra.mxu0 %v1900
        %1976 = vmatprep.subr.bf16.mxu0 0
        %1977 = vmatpush2.bf16.msra.mxu0 %v1899
        %1978 = vmatprep.subr.bf16.mxu0 0
        %1979 = vmatpush2.bf16.msra.mxu0 %v1898
        %1980 = vmatprep.subr.bf16.mxu0 0
        %1981 = vmatpush2.bf16.msra.mxu0 %v1897
        %1982 = vmatprep.subr.bf16.mxu0 0
        %1983 = vmatpush2.bf16.msra.mxu0 %v1896
        %1984 = vmatprep.mubr.bf16.mxu0 %v1628
        %1985 = vmatmul.mubr.bf16.gmra.mxu0 %v1627
        %v1986 = vpop.f32.mrf.mxu0
        %v1987 = vadd.f32 %v1759, %v1986
        %v1988 = vpop.f32.mrf.mxu0
        %v1989 = vpop.f32.mrf.mxu0
        %v1990 = vadd.f32 %v1759, %v1989
        %v1991 = vpop.f32.mrf.mxu0
        %1992 = vmatprep.mubr.bf16.mxu0 %v1632
        %1993 = vmatmul.mubr.bf16.gmra.mxu0 %v1631
        %v1994 = vpop.f32.mrf.mxu0
        %v1995 = vadd.f32 %v1759, %v1994
        %v1996 = vpop.f32.mrf.mxu0
        %v1997 = vpop.f32.mrf.mxu0
        %v1998 = vadd.f32 %v1759, %v1997
        %v1999 = vpop.f32.mrf.mxu0
        %2000 = vmatprep.mubr.bf16.mxu0 %v1636
        %2001 = vmatmul.mubr.bf16.gmra.mxu0 %v1635
        %v2002 = vpop.f32.mrf.mxu0
        %v2003 = vadd.f32 %v1759, %v2002
        %v2004 = vpop.f32.mrf.mxu0
        %v2005 = vpop.f32.mrf.mxu0
        %v2006 = vadd.f32 %v1759, %v2005
        %v2007 = vpop.f32.mrf.mxu0
        %2008 = vmatprep.mubr.bf16.mxu0 %v1640
        %2009 = vmatmul.mubr.bf16.gmra.mxu0 %v1639
        %v2010 = vpop.f32.mrf.mxu0
        %v2011 = vadd.f32 %v1759, %v2010
        %v2012 = vpop.f32.mrf.mxu0
        %v2013 = vpop.f32.mrf.mxu0
        %v2014 = vadd.f32 %v1759, %v2013
        %v2015 = vpop.f32.mrf.mxu0
        %2016 = vmatprep.mubr.bf16.mxu0 %v1644
        %2017 = vmatmul.mubr.bf16.gmra.mxu0 %v1643
        %v2018 = vpop.f32.mrf.mxu0
        %v2019 = vadd.f32 %v1759, %v2018
        %v2020 = vpop.f32.mrf.mxu0
        %v2021 = vpop.f32.mrf.mxu0
        %v2022 = vadd.f32 %v1759, %v2021
        %v2023 = vpop.f32.mrf.mxu0
        %2024 = vmatprep.mubr.bf16.mxu0 %v1648
        %2025 = vmatmul.mubr.bf16.gmra.mxu0 %v1647
        %v2026 = vpop.f32.mrf.mxu0
        %v2027 = vadd.f32 %v1759, %v2026
        %v2028 = vpop.f32.mrf.mxu0
        %v2029 = vpop.f32.mrf.mxu0
        %v2030 = vadd.f32 %v1759, %v2029
        %v2031 = vpop.f32.mrf.mxu0
        %2032 = vmatprep.mubr.bf16.mxu0 %v1652
        %2033 = vmatmul.mubr.bf16.gmra.mxu0 %v1651
        %v2034 = vpop.f32.mrf.mxu0
        %v2035 = vadd.f32 %v1759, %v2034
        %v2036 = vpop.f32.mrf.mxu0
        %v2037 = vpop.f32.mrf.mxu0
        %v2038 = vadd.f32 %v1759, %v2037
        %v2039 = vpop.f32.mrf.mxu0
        %2040 = vmatprep.mubr.bf16.mxu0 %v1656
        %2041 = vmatmul.mubr.bf16.gmra.mxu0 %v1655
        %v2042 = vpop.f32.mrf.mxu0
        %v2043 = vadd.f32 %v1759, %v2042
        %v2044 = vpop.f32.mrf.mxu0
        %v2045 = vpop.f32.mrf.mxu0
        %v2046 = vadd.f32 %v1759, %v2045
        %v2047 = vpop.f32.mrf.mxu0
        %2048 = vmatprep.mubr.bf16.mxu0 %v1660
        %2049 = vmatmul.mubr.bf16.gmra.mxu0 %v1659
        %v2050 = vpop.f32.mrf.mxu0
        %v2051 = vadd.f32 %v1759, %v2050
        %v2052 = vpop.f32.mrf.mxu0
        %v2053 = vpop.f32.mrf.mxu0
        %v2054 = vadd.f32 %v1759, %v2053
        %v2055 = vpop.f32.mrf.mxu0
        %2056 = vmatprep.mubr.bf16.mxu0 %v1664
        %2057 = vmatmul.mubr.bf16.gmra.mxu0 %v1663
        %v2058 = vpop.f32.mrf.mxu0
        %v2059 = vadd.f32 %v1759, %v2058
        %v2060 = vpop.f32.mrf.mxu0
        %v2061 = vpop.f32.mrf.mxu0
        %v2062 = vadd.f32 %v1759, %v2061
        %v2063 = vpop.f32.mrf.mxu0
        %2064 = vmatprep.mubr.bf16.mxu0 %v1668
        %2065 = vmatmul.mubr.bf16.gmra.mxu0 %v1667
        %v2066 = vpop.f32.mrf.mxu0
        %v2067 = vadd.f32 %v1759, %v2066
        %v2068 = vpop.f32.mrf.mxu0
        %v2069 = vpop.f32.mrf.mxu0
        %v2070 = vadd.f32 %v1759, %v2069
        %v2071 = vpop.f32.mrf.mxu0
        %2072 = vmatprep.mubr.bf16.mxu0 %v1672
        %2073 = vmatmul.mubr.bf16.gmra.mxu0 %v1671
        %v2074 = vpop.f32.mrf.mxu0
        %v2075 = vadd.f32 %v1759, %v2074
        %v2076 = vpop.f32.mrf.mxu0
        %v2077 = vpop.f32.mrf.mxu0
        %v2078 = vadd.f32 %v1759, %v2077
        %v2079 = vpop.f32.mrf.mxu0
        %2080 = vmatprep.mubr.bf16.mxu0 %v1676
        %2081 = vmatmul.mubr.bf16.gmra.mxu0 %v1675
        %v2082 = vpop.f32.mrf.mxu0
        %v2083 = vadd.f32 %v1759, %v2082
        %v2084 = vpop.f32.mrf.mxu0
        %v2085 = vpop.f32.mrf.mxu0
        %v2086 = vadd.f32 %v1759, %v2085
        %v2087 = vpop.f32.mrf.mxu0
        %2088 = vmatprep.mubr.bf16.mxu0 %v1680
        %2089 = vmatmul.mubr.bf16.gmra.mxu0 %v1679
        %v2090 = vpop.f32.mrf.mxu0
        %v2091 = vadd.f32 %v1759, %v2090
        %v2092 = vpop.f32.mrf.mxu0
        %v2093 = vpop.f32.mrf.mxu0
        %v2094 = vadd.f32 %v1759, %v2093
        %v2095 = vpop.f32.mrf.mxu0
        %2096 = vmatprep.mubr.bf16.mxu0 %v1684
        %2097 = vmatmul.mubr.bf16.gmra.mxu0 %v1683
        %v2098 = vpop.f32.mrf.mxu0
        %v2099 = vadd.f32 %v1759, %v2098
        %v2100 = vpop.f32.mrf.mxu0
        %v2101 = vpop.f32.mrf.mxu0
        %v2102 = vadd.f32 %v1759, %v2101
        %v2103 = vpop.f32.mrf.mxu0
        %2104 = vmatprep.mubr.bf16.mxu0 %v1688
        %2105 = vmatmul.mubr.bf16.gmra.mxu0 %v1687
        %v2106 = vpop.f32.mrf.mxu0
        %v2107 = vadd.f32 %v1759, %v2106
        %v2108 = vpop.f32.mrf.mxu0
        %v2109 = vpop.f32.mrf.mxu0
        %v2110 = vadd.f32 %v1759, %v2109
        %v2111 = vpop.f32.mrf.mxu0
        %2112 = vdwg.mxu0
        %2113 = vmatprep.subr.bf16.mxu0 0
        %2114 = vmatpush1.bf16.msra.mxu0 %v1911
        %2115 = vmatprep.subr.bf16.mxu0 0
        %2116 = vmatpush1.bf16.msra.mxu0 %v1910
        %2117 = vmatprep.subr.bf16.mxu0 0
        %2118 = vmatpush1.bf16.msra.mxu0 %v1909
        %2119 = vmatprep.subr.bf16.mxu0 0
        %2120 = vmatpush1.bf16.msra.mxu0 %v1908
        %2121 = vmatprep.subr.bf16.mxu0 0
        %2122 = vmatpush1.bf16.msra.mxu0 %v1907
        %2123 = vmatprep.subr.bf16.mxu0 0
        %2124 = vmatpush1.bf16.msra.mxu0 %v1906
        %2125 = vmatprep.subr.bf16.mxu0 0
        %2126 = vmatpush1.bf16.msra.mxu0 %v1905
        %2127 = vmatprep.subr.bf16.mxu0 0
        %2128 = vmatpush1.bf16.msra.mxu0 %v1904
        %2129 = vmatprep.subr.bf16.mxu0 0
        %2130 = vmatpush2.bf16.msra.mxu0 %v1919
        %2131 = vmatprep.subr.bf16.mxu0 0
        %2132 = vmatpush2.bf16.msra.mxu0 %v1918
        %2133 = vmatprep.subr.bf16.mxu0 0
        %2134 = vmatpush2.bf16.msra.mxu0 %v1917
        %2135 = vmatprep.subr.bf16.mxu0 0
        %2136 = vmatpush2.bf16.msra.mxu0 %v1916
        %2137 = vmatprep.subr.bf16.mxu0 0
        %2138 = vmatpush2.bf16.msra.mxu0 %v1915
        %2139 = vmatprep.subr.bf16.mxu0 0
        %2140 = vmatpush2.bf16.msra.mxu0 %v1914
        %2141 = vmatprep.subr.bf16.mxu0 0
        %2142 = vmatpush2.bf16.msra.mxu0 %v1913
        %2143 = vmatprep.subr.bf16.mxu0 0
        %2144 = vmatpush2.bf16.msra.mxu0 %v1912
        %2145 = vmatprep.mubr.bf16.mxu0 %v1630
        %2146 = vmatmul.mubr.bf16.gmra.mxu0 %v1629
        %v2147 = vpop.f32.mrf.mxu0
        %v2148 = vadd.f32 %v1987, %v2147
        %v2149 = vpop.f32.mrf.mxu0
        %v2150 = vpop.f32.mrf.mxu0
        %v2151 = vadd.f32 %v1990, %v2150
        %v2152 = vpop.f32.mrf.mxu0
        %2153 = vmatprep.mubr.bf16.mxu0 %v1634
        %2154 = vmatmul.mubr.bf16.gmra.mxu0 %v1633
        %v2155 = vpop.f32.mrf.mxu0
        %v2156 = vadd.f32 %v1995, %v2155
        %v2157 = vpop.f32.mrf.mxu0
        %v2158 = vpop.f32.mrf.mxu0
        %v2159 = vadd.f32 %v1998, %v2158
        %v2160 = vpop.f32.mrf.mxu0
        %2161 = vmatprep.mubr.bf16.mxu0 %v1638
        %2162 = vmatmul.mubr.bf16.gmra.mxu0 %v1637
        %v2163 = vpop.f32.mrf.mxu0
        %v2164 = vadd.f32 %v2003, %v2163
        %v2165 = vpop.f32.mrf.mxu0
        %v2166 = vpop.f32.mrf.mxu0
        %v2167 = vadd.f32 %v2006, %v2166
        %v2168 = vpop.f32.mrf.mxu0
        %2169 = vmatprep.mubr.bf16.mxu0 %v1642
        %2170 = vmatmul.mubr.bf16.gmra.mxu0 %v1641
        %v2171 = vpop.f32.mrf.mxu0
        %v2172 = vadd.f32 %v2011, %v2171
        %v2173 = vpop.f32.mrf.mxu0
        %v2174 = vpop.f32.mrf.mxu0
        %v2175 = vadd.f32 %v2014, %v2174
        %v2176 = vpop.f32.mrf.mxu0
        %2177 = vmatprep.mubr.bf16.mxu0 %v1646
        %2178 = vmatmul.mubr.bf16.gmra.mxu0 %v1645
        %v2179 = vpop.f32.mrf.mxu0
        %v2180 = vadd.f32 %v2019, %v2179
        %v2181 = vpop.f32.mrf.mxu0
        %v2182 = vpop.f32.mrf.mxu0
        %v2183 = vadd.f32 %v2022, %v2182
        %v2184 = vpop.f32.mrf.mxu0
        %2185 = vmatprep.mubr.bf16.mxu0 %v1650
        %2186 = vmatmul.mubr.bf16.gmra.mxu0 %v1649
        %v2187 = vpop.f32.mrf.mxu0
        %v2188 = vadd.f32 %v2027, %v2187
        %v2189 = vpop.f32.mrf.mxu0
        %v2190 = vpop.f32.mrf.mxu0
        %v2191 = vadd.f32 %v2030, %v2190
        %v2192 = vpop.f32.mrf.mxu0
        %2193 = vmatprep.mubr.bf16.mxu0 %v1654
        %2194 = vmatmul.mubr.bf16.gmra.mxu0 %v1653
        %v2195 = vpop.f32.mrf.mxu0
        %v2196 = vadd.f32 %v2035, %v2195
        %v2197 = vpop.f32.mrf.mxu0
        %v2198 = vpop.f32.mrf.mxu0
        %v2199 = vadd.f32 %v2038, %v2198
        %v2200 = vpop.f32.mrf.mxu0
        %2201 = vmatprep.mubr.bf16.mxu0 %v1658
        %2202 = vmatmul.mubr.bf16.gmra.mxu0 %v1657
        %v2203 = vpop.f32.mrf.mxu0
        %v2204 = vadd.f32 %v2043, %v2203
        %v2205 = vpop.f32.mrf.mxu0
        %v2206 = vpop.f32.mrf.mxu0
        %v2207 = vadd.f32 %v2046, %v2206
        %v2208 = vpop.f32.mrf.mxu0
        %2209 = vmatprep.mubr.bf16.mxu0 %v1662
        %2210 = vmatmul.mubr.bf16.gmra.mxu0 %v1661
        %v2211 = vpop.f32.mrf.mxu0
        %v2212 = vadd.f32 %v2051, %v2211
        %v2213 = vpop.f32.mrf.mxu0
        %v2214 = vpop.f32.mrf.mxu0
        %v2215 = vadd.f32 %v2054, %v2214
        %v2216 = vpop.f32.mrf.mxu0
        %2217 = vmatprep.mubr.bf16.mxu0 %v1666
        %2218 = vmatmul.mubr.bf16.gmra.mxu0 %v1665
        %v2219 = vpop.f32.mrf.mxu0
        %v2220 = vadd.f32 %v2059, %v2219
        %v2221 = vpop.f32.mrf.mxu0
        %v2222 = vpop.f32.mrf.mxu0
        %v2223 = vadd.f32 %v2062, %v2222
        %v2224 = vpop.f32.mrf.mxu0
        %2225 = vmatprep.mubr.bf16.mxu0 %v1670
        %2226 = vmatmul.mubr.bf16.gmra.mxu0 %v1669
        %v2227 = vpop.f32.mrf.mxu0
        %v2228 = vadd.f32 %v2067, %v2227
        %v2229 = vpop.f32.mrf.mxu0
        %v2230 = vpop.f32.mrf.mxu0
        %v2231 = vadd.f32 %v2070, %v2230
        %v2232 = vpop.f32.mrf.mxu0
        %2233 = vmatprep.mubr.bf16.mxu0 %v1674
        %2234 = vmatmul.mubr.bf16.gmra.mxu0 %v1673
        %v2235 = vpop.f32.mrf.mxu0
        %v2236 = vadd.f32 %v2075, %v2235
        %v2237 = vpop.f32.mrf.mxu0
        %v2238 = vpop.f32.mrf.mxu0
        %v2239 = vadd.f32 %v2078, %v2238
        %v2240 = vpop.f32.mrf.mxu0
        %2241 = vmatprep.mubr.bf16.mxu0 %v1678
        %2242 = vmatmul.mubr.bf16.gmra.mxu0 %v1677
        %v2243 = vpop.f32.mrf.mxu0
        %v2244 = vadd.f32 %v2083, %v2243
        %v2245 = vpop.f32.mrf.mxu0
        %v2246 = vpop.f32.mrf.mxu0
        %v2247 = vadd.f32 %v2086, %v2246
        %v2248 = vpop.f32.mrf.mxu0
        %2249 = vmatprep.mubr.bf16.mxu0 %v1682
        %2250 = vmatmul.mubr.bf16.gmra.mxu0 %v1681
        %v2251 = vpop.f32.mrf.mxu0
        %v2252 = vadd.f32 %v2091, %v2251
        %v2253 = vpop.f32.mrf.mxu0
        %v2254 = vpop.f32.mrf.mxu0
        %v2255 = vadd.f32 %v2094, %v2254
        %v2256 = vpop.f32.mrf.mxu0
        %2257 = vmatprep.mubr.bf16.mxu0 %v1686
        %2258 = vmatmul.mubr.bf16.gmra.mxu0 %v1685
        %v2259 = vpop.f32.mrf.mxu0
        %v2260 = vadd.f32 %v2099, %v2259
        %v2261 = vpop.f32.mrf.mxu0
        %v2262 = vpop.f32.mrf.mxu0
        %v2263 = vadd.f32 %v2102, %v2262
        %v2264 = vpop.f32.mrf.mxu0
        %2265 = vmatprep.mubr.bf16.mxu0 %v1690
        %2266 = vmatmul.mubr.bf16.gmra.mxu0 %v1689
        %v2267 = vpop.f32.mrf.mxu0
        %v2268 = vadd.f32 %v2107, %v2267
        %v2269 = vpop.f32.mrf.mxu0
        %v2270 = vpop.f32.mrf.mxu0
        %v2271 = vadd.f32 %v2110, %v2270
        %v2272 = vpop.f32.mrf.mxu0
        %2273 = vdwg.mxu0
        %2274 = vst [vmem:[%s338] sm:$0xff] %v2148
        %2275 = vst [vmem:[%s338 + $0x8] sm:$0xff] %v2151
        %2276 = vst [vmem:[%s338 + $0x10] sm:$0xff] %v2156
        %2277 = vst [vmem:[%s338 + $0x18] sm:$0xff] %v2159
        %2278 = vst [vmem:[%s338 + $0x20] sm:$0xff] %v2164
        %2279 = vst [vmem:[%s338 + $0x28] sm:$0xff] %v2167
        %2280 = vst [vmem:[%s338 + $0x30] sm:$0xff] %v2172
        %2281 = vst [vmem:[%s338 + $0x38] sm:$0xff] %v2175
        %2282 = vst [vmem:[%s338 + $0x40] sm:$0xff] %v2180
        %2283 = vst [vmem:[%s338 + $0x48] sm:$0xff] %v2183
        %2284 = vst [vmem:[%s338 + $0x50] sm:$0xff] %v2188
        %2285 = vst [vmem:[%s338 + $0x58] sm:$0xff] %v2191
        %2286 = vst [vmem:[%s338 + $0x60] sm:$0xff] %v2196
        %2287 = vst [vmem:[%s338 + $0x68] sm:$0xff] %v2199
        %2288 = vst [vmem:[%s338 + $0x70] sm:$0xff] %v2204
        %2289 = vst [vmem:[%s338 + $0x78] sm:$0xff] %v2207
        %2290 = vst [vmem:[%s338 + $0x80] sm:$0xff] %v2212
        %2291 = vst [vmem:[%s338 + $0x88] sm:$0xff] %v2215
        %2292 = vst [vmem:[%s338 + $0x90] sm:$0xff] %v2220
        %2293 = vst [vmem:[%s338 + $0x98] sm:$0xff] %v2223
        %2294 = vst [vmem:[%s338 + $0xa0] sm:$0xff] %v2228
        %2295 = vst [vmem:[%s338 + $0xa8] sm:$0xff] %v2231
        %2296 = vst [vmem:[%s338 + $0xb0] sm:$0xff] %v2236
        %2297 = vst [vmem:[%s338 + $0xb8] sm:$0xff] %v2239
        %2298 = vst [vmem:[%s338 + $0xc0] sm:$0xff] %v2244
        %2299 = vst [vmem:[%s338 + $0xc8] sm:$0xff] %v2247
        %2300 = vst [vmem:[%s338 + $0xd0] sm:$0xff] %v2252
        %2301 = vst [vmem:[%s338 + $0xd8] sm:$0xff] %v2255
        %2302 = vst [vmem:[%s338 + $0xe0] sm:$0xff] %v2260
        %2303 = vst [vmem:[%s338 + $0xe8] sm:$0xff] %v2263
        %2304 = vst [vmem:[%s338 + $0xf0] sm:$0xff] %v2268
        %2305 = vst [vmem:[%s338 + $0xf8] sm:$0xff] %v2271
        %s2306 = scalar_lea.vmem [#allocation5], 128
        %v2307 = vld [vmem:[%s2306] sm:$0xf]
        %v2308 = vld [vmem:[%s2306 + $0x4] sm:$0xf]
        %v2309 = vld [vmem:[%s2306 + $0x8] sm:$0xf]
        %v2310 = vld [vmem:[%s2306 + $0xc] sm:$0xf]
        %v2311 = vld [vmem:[%s2306 + $0x10] sm:$0xf]
        %v2312 = vld [vmem:[%s2306 + $0x14] sm:$0xf]
        %v2313 = vld [vmem:[%s2306 + $0x18] sm:$0xf]
        %v2314 = vld [vmem:[%s2306 + $0x1c] sm:$0xf]
        %v2315 = vld [vmem:[%s2306 + $0x20] sm:$0xf]
        %v2316 = vld [vmem:[%s2306 + $0x24] sm:$0xf]
        %v2317 = vld [vmem:[%s2306 + $0x28] sm:$0xf]
        %v2318 = vld [vmem:[%s2306 + $0x2c] sm:$0xf]
        %v2319 = vld [vmem:[%s2306 + $0x30] sm:$0xf]
        %v2320 = vld [vmem:[%s2306 + $0x34] sm:$0xf]
        %v2321 = vld [vmem:[%s2306 + $0x38] sm:$0xf]
        %v2322 = vld [vmem:[%s2306 + $0x3c] sm:$0xf]
        %v2323 = vld [vmem:[#allocation7 + $0x3] sm:$0x1]
        %v2324 = vlaneseq
        %v2325 = vshrl.u32 %v2324, 7
        %v2326 = vsub.s32 0, %v2325
        %v2327 = vrot.slane %v2323, %v2326
        %v2344 = vunpack.c.l.b16 %v2307
        %v2345 = vunpack.c.l.b16 %v2308
        %v2346 = vunpack.c.l.b16 %v2309
        %v2347 = vunpack.c.l.b16 %v2310
        %v2348 = vunpack.c.l.b16 %v2311
        %v2349 = vunpack.c.l.b16 %v2312
        %v2350 = vunpack.c.l.b16 %v2313
        %v2351 = vunpack.c.l.b16 %v2314
        %v2352 = vunpack.c.l.b16 %v2315
        %v2353 = vunpack.c.l.b16 %v2316
        %v2354 = vunpack.c.l.b16 %v2317
        %v2355 = vunpack.c.l.b16 %v2318
        %v2356 = vunpack.c.l.b16 %v2319
        %v2357 = vunpack.c.l.b16 %v2320
        %v2358 = vunpack.c.l.b16 %v2321
        %v2359 = vunpack.c.l.b16 %v2322
        %v2360 = vpack.c.b16 %v2345, %v2344
        %v2361 = vpack.c.b16 %v2347, %v2346
        %v2362 = vpack.c.b16 %v2349, %v2348
        %v2363 = vpack.c.b16 %v2351, %v2350
        %v2364 = vpack.c.b16 %v2353, %v2352
        %v2365 = vpack.c.b16 %v2355, %v2354
        %v2366 = vpack.c.b16 %v2357, %v2356
        %v2367 = vpack.c.b16 %v2359, %v2358
        %2376 = vmatprep.subr.bf16.mxu0 0
        %2377 = vmatpush1.bf16.msra.mxu0 %v2367
        %2378 = vmatprep.subr.bf16.mxu0 0
        %2379 = vmatpush1.bf16.msra.mxu0 %v2366
        %2380 = vmatprep.subr.bf16.mxu0 0
        %2381 = vmatpush1.bf16.msra.mxu0 %v2365
        %2382 = vmatprep.subr.bf16.mxu0 0
        %2383 = vmatpush1.bf16.msra.mxu0 %v2364
        %2384 = vmatprep.subr.bf16.mxu0 0
        %2385 = vmatpush1.bf16.msra.mxu0 %v2363
        %2386 = vmatprep.subr.bf16.mxu0 0
        %2387 = vmatpush1.bf16.msra.mxu0 %v2362
        %2388 = vmatprep.subr.bf16.mxu0 0
        %2389 = vmatpush1.bf16.msra.mxu0 %v2361
        %2390 = vmatprep.subr.bf16.mxu0 0
        %2391 = vmatpush1.bf16.msra.mxu0 %v2360
        %2392 = vmatprep.subr.bf16.mxu0 0
        %2393 = vmatpush2.bf16.msra.mxu0 0
        %2394 = vmatprep.subr.bf16.mxu0 0
        %2395 = vmatpush2.bf16.msra.mxu0 0
        %2396 = vmatprep.subr.bf16.mxu0 0
        %2397 = vmatpush2.bf16.msra.mxu0 0
        %2398 = vmatprep.subr.bf16.mxu0 0
        %2399 = vmatpush2.bf16.msra.mxu0 0
        %2400 = vmatprep.subr.bf16.mxu0 0
        %2401 = vmatpush2.bf16.msra.mxu0 0
        %2402 = vmatprep.subr.bf16.mxu0 0
        %2403 = vmatpush2.bf16.msra.mxu0 0
        %2404 = vmatprep.subr.bf16.mxu0 0
        %2405 = vmatpush2.bf16.msra.mxu0 0
        %2406 = vmatprep.subr.bf16.mxu0 0
        %2407 = vmatpush2.bf16.msra.mxu0 0
        %2408 = vmatprep.mubr.bf16.mxu0 0
        %2409 = vmatmul.mubr.bf16.gmra.mxu0 %v1011
        %v2410 = vpop.f32.mrf.mxu0
        %v2411 = vadd.f32 %v2327, %v2410
        %v2412 = vpop.f32.mrf.mxu0
        %v2413 = vpop.f32.mrf.mxu0
        %v2414 = vadd.f32 %v2327, %v2413
        %v2415 = vpop.f32.mrf.mxu0
        %2416 = vmatprep.mubr.bf16.mxu0 0
        %2417 = vmatmul.mubr.bf16.gmra.mxu0 %v1012
        %v2418 = vpop.f32.mrf.mxu0
        %v2419 = vadd.f32 %v2327, %v2418
        %v2420 = vpop.f32.mrf.mxu0
        %v2421 = vpop.f32.mrf.mxu0
        %v2422 = vadd.f32 %v2327, %v2421
        %v2423 = vpop.f32.mrf.mxu0
        %2424 = vmatprep.mubr.bf16.mxu0 0
        %2425 = vmatmul.mubr.bf16.gmra.mxu0 %v1013
        %v2426 = vpop.f32.mrf.mxu0
        %v2427 = vadd.f32 %v2327, %v2426
        %v2428 = vpop.f32.mrf.mxu0
        %v2429 = vpop.f32.mrf.mxu0
        %v2430 = vadd.f32 %v2327, %v2429
        %v2431 = vpop.f32.mrf.mxu0
        %2432 = vmatprep.mubr.bf16.mxu0 0
        %2433 = vmatmul.mubr.bf16.gmra.mxu0 %v1014
        %v2434 = vpop.f32.mrf.mxu0
        %v2435 = vadd.f32 %v2327, %v2434
        %v2436 = vpop.f32.mrf.mxu0
        %v2437 = vpop.f32.mrf.mxu0
        %v2438 = vadd.f32 %v2327, %v2437
        %v2439 = vpop.f32.mrf.mxu0
        %2440 = vmatprep.mubr.bf16.mxu0 0
        %2441 = vmatmul.mubr.bf16.gmra.mxu0 %v1015
        %v2442 = vpop.f32.mrf.mxu0
        %v2443 = vadd.f32 %v2327, %v2442
        %v2444 = vpop.f32.mrf.mxu0
        %v2445 = vpop.f32.mrf.mxu0
        %v2446 = vadd.f32 %v2327, %v2445
        %v2447 = vpop.f32.mrf.mxu0
        %2448 = vmatprep.mubr.bf16.mxu0 0
        %2449 = vmatmul.mubr.bf16.gmra.mxu0 %v1016
        %v2450 = vpop.f32.mrf.mxu0
        %v2451 = vadd.f32 %v2327, %v2450
        %v2452 = vpop.f32.mrf.mxu0
        %v2453 = vpop.f32.mrf.mxu0
        %v2454 = vadd.f32 %v2327, %v2453
        %v2455 = vpop.f32.mrf.mxu0
        %2456 = vmatprep.mubr.bf16.mxu0 0
        %2457 = vmatmul.mubr.bf16.gmra.mxu0 %v1017
        %v2458 = vpop.f32.mrf.mxu0
        %v2459 = vadd.f32 %v2327, %v2458
        %v2460 = vpop.f32.mrf.mxu0
        %v2461 = vpop.f32.mrf.mxu0
        %v2462 = vadd.f32 %v2327, %v2461
        %v2463 = vpop.f32.mrf.mxu0
        %2464 = vmatprep.mubr.bf16.mxu0 0
        %2465 = vmatmul.mubr.bf16.gmra.mxu0 %v1018
        %v2466 = vpop.f32.mrf.mxu0
        %v2467 = vadd.f32 %v2327, %v2466
        %v2468 = vpop.f32.mrf.mxu0
        %v2469 = vpop.f32.mrf.mxu0
        %v2470 = vadd.f32 %v2327, %v2469
        %v2471 = vpop.f32.mrf.mxu0
        %2472 = vmatprep.mubr.bf16.mxu0 0
        %2473 = vmatmul.mubr.bf16.gmra.mxu0 %v1019
        %v2474 = vpop.f32.mrf.mxu0
        %v2475 = vadd.f32 %v2327, %v2474
        %v2476 = vpop.f32.mrf.mxu0
        %v2477 = vpop.f32.mrf.mxu0
        %v2478 = vadd.f32 %v2327, %v2477
        %v2479 = vpop.f32.mrf.mxu0
        %2480 = vmatprep.mubr.bf16.mxu0 0
        %2481 = vmatmul.mubr.bf16.gmra.mxu0 %v1020
        %v2482 = vpop.f32.mrf.mxu0
        %v2483 = vadd.f32 %v2327, %v2482
        %v2484 = vpop.f32.mrf.mxu0
        %v2485 = vpop.f32.mrf.mxu0
        %v2486 = vadd.f32 %v2327, %v2485
        %v2487 = vpop.f32.mrf.mxu0
        %2488 = vmatprep.mubr.bf16.mxu0 0
        %2489 = vmatmul.mubr.bf16.gmra.mxu0 %v1021
        %v2490 = vpop.f32.mrf.mxu0
        %v2491 = vadd.f32 %v2327, %v2490
        %v2492 = vpop.f32.mrf.mxu0
        %v2493 = vpop.f32.mrf.mxu0
        %v2494 = vadd.f32 %v2327, %v2493
        %v2495 = vpop.f32.mrf.mxu0
        %2496 = vmatprep.mubr.bf16.mxu0 0
        %2497 = vmatmul.mubr.bf16.gmra.mxu0 %v1022
        %v2498 = vpop.f32.mrf.mxu0
        %v2499 = vadd.f32 %v2327, %v2498
        %v2500 = vpop.f32.mrf.mxu0
        %v2501 = vpop.f32.mrf.mxu0
        %v2502 = vadd.f32 %v2327, %v2501
        %v2503 = vpop.f32.mrf.mxu0
        %2504 = vmatprep.mubr.bf16.mxu0 0
        %2505 = vmatmul.mubr.bf16.gmra.mxu0 %v1023
        %v2506 = vpop.f32.mrf.mxu0
        %v2507 = vadd.f32 %v2327, %v2506
        %v2508 = vpop.f32.mrf.mxu0
        %v2509 = vpop.f32.mrf.mxu0
        %v2510 = vadd.f32 %v2327, %v2509
        %v2511 = vpop.f32.mrf.mxu0
        %2512 = vmatprep.mubr.bf16.mxu0 0
        %2513 = vmatmul.mubr.bf16.gmra.mxu0 %v1024
        %v2514 = vpop.f32.mrf.mxu0
        %v2515 = vadd.f32 %v2327, %v2514
        %v2516 = vpop.f32.mrf.mxu0
        %v2517 = vpop.f32.mrf.mxu0
        %v2518 = vadd.f32 %v2327, %v2517
        %v2519 = vpop.f32.mrf.mxu0
        %2520 = vmatprep.mubr.bf16.mxu0 0
        %2521 = vmatmul.mubr.bf16.gmra.mxu0 %v1025
        %v2522 = vpop.f32.mrf.mxu0
        %v2523 = vadd.f32 %v2327, %v2522
        %v2524 = vpop.f32.mrf.mxu0
        %v2525 = vpop.f32.mrf.mxu0
        %v2526 = vadd.f32 %v2327, %v2525
        %v2527 = vpop.f32.mrf.mxu0
        %2528 = vmatprep.mubr.bf16.mxu0 0
        %2529 = vmatmul.mubr.bf16.gmra.mxu0 %v1026
        %v2530 = vpop.f32.mrf.mxu0
        %v2531 = vadd.f32 %v2327, %v2530
        %v2532 = vpop.f32.mrf.mxu0
        %v2533 = vpop.f32.mrf.mxu0
        %v2534 = vadd.f32 %v2327, %v2533
        %v2535 = vpop.f32.mrf.mxu0
        %2536 = vdwg.mxu0
        %v2537 = vmax.f32 %v2411, 0.0
        %v2538 = vmax.f32 %v2414, 0.0
        %v2539 = vmax.f32 %v2419, 0.0
        %v2540 = vmax.f32 %v2422, 0.0
        %v2541 = vmax.f32 %v2427, 0.0
        %v2542 = vmax.f32 %v2430, 0.0
        %v2543 = vmax.f32 %v2435, 0.0
        %v2544 = vmax.f32 %v2438, 0.0
        %v2545 = vmax.f32 %v2443, 0.0
        %v2546 = vmax.f32 %v2446, 0.0
        %v2547 = vmax.f32 %v2451, 0.0
        %v2548 = vmax.f32 %v2454, 0.0
        %v2549 = vmax.f32 %v2459, 0.0
        %v2550 = vmax.f32 %v2462, 0.0
        %v2551 = vmax.f32 %v2467, 0.0
        %v2552 = vmax.f32 %v2470, 0.0
        %v2553 = vmax.f32 %v2475, 0.0
        %v2554 = vmax.f32 %v2478, 0.0
        %v2555 = vmax.f32 %v2483, 0.0
        %v2556 = vmax.f32 %v2486, 0.0
        %v2557 = vmax.f32 %v2491, 0.0
        %v2558 = vmax.f32 %v2494, 0.0
        %v2559 = vmax.f32 %v2499, 0.0
        %v2560 = vmax.f32 %v2502, 0.0
        %v2561 = vmax.f32 %v2507, 0.0
        %v2562 = vmax.f32 %v2510, 0.0
        %v2563 = vmax.f32 %v2515, 0.0
        %v2564 = vmax.f32 %v2518, 0.0
        %v2565 = vmax.f32 %v2523, 0.0
        %v2566 = vmax.f32 %v2526, 0.0
        %v2567 = vmax.f32 %v2531, 0.0
        %v2568 = vmax.f32 %v2534, 0.0
        %v2569 = vpack.c.bf16 %v2538, %v2537
        %v2570 = vpack.c.bf16 %v2540, %v2539
        %v2571 = vpack.c.bf16 %v2542, %v2541
        %v2572 = vpack.c.bf16 %v2544, %v2543
        %v2573 = vpack.c.bf16 %v2546, %v2545
        %v2574 = vpack.c.bf16 %v2548, %v2547
        %v2575 = vpack.c.bf16 %v2550, %v2549
        %v2576 = vpack.c.bf16 %v2552, %v2551
        %v2577 = vpack.c.bf16 %v2554, %v2553
        %v2578 = vpack.c.bf16 %v2556, %v2555
        %v2579 = vpack.c.bf16 %v2558, %v2557
        %v2580 = vpack.c.bf16 %v2560, %v2559
        %v2581 = vpack.c.bf16 %v2562, %v2561
        %v2582 = vpack.c.bf16 %v2564, %v2563
        %v2583 = vpack.c.bf16 %v2566, %v2565
        %v2584 = vpack.c.bf16 %v2568, %v2567
        %s2585 = scalar_lea.vmem [#allocation5], 192
        %v2586 = vld [vmem:[%s2585] sm:$0xf]
        %v2587 = vld [vmem:[%s2585 + $0x4] sm:$0xf]
        %v2588 = vld [vmem:[%s2585 + $0x8] sm:$0xf]
        %v2589 = vld [vmem:[%s2585 + $0xc] sm:$0xf]
        %v2590 = vld [vmem:[%s2585 + $0x10] sm:$0xf]
        %v2591 = vld [vmem:[%s2585 + $0x14] sm:$0xf]
        %v2592 = vld [vmem:[%s2585 + $0x18] sm:$0xf]
        %v2593 = vld [vmem:[%s2585 + $0x1c] sm:$0xf]
        %v2594 = vld [vmem:[%s2585 + $0x20] sm:$0xf]
        %v2595 = vld [vmem:[%s2585 + $0x24] sm:$0xf]
        %v2596 = vld [vmem:[%s2585 + $0x28] sm:$0xf]
        %v2597 = vld [vmem:[%s2585 + $0x2c] sm:$0xf]
        %v2598 = vld [vmem:[%s2585 + $0x30] sm:$0xf]
        %v2599 = vld [vmem:[%s2585 + $0x34] sm:$0xf]
        %v2600 = vld [vmem:[%s2585 + $0x38] sm:$0xf]
        %v2601 = vld [vmem:[%s2585 + $0x3c] sm:$0xf]
        %v2602 = vld [vmem:[#allocation7 + $0x4] sm:$0x1]
        %v2603 = vlaneseq
        %v2604 = vshrl.u32 %v2603, 7
        %v2605 = vsub.s32 0, %v2604
        %v2606 = vrot.slane %v2602, %v2605
        %v2623 = vunpack.c.l.b16 %v2586
        %v2624 = vunpack.c.l.b16 %v2587
        %v2625 = vunpack.c.l.b16 %v2588
        %v2626 = vunpack.c.l.b16 %v2589
        %v2627 = vunpack.c.l.b16 %v2590
        %v2628 = vunpack.c.l.b16 %v2591
        %v2629 = vunpack.c.l.b16 %v2592
        %v2630 = vunpack.c.l.b16 %v2593
        %v2631 = vunpack.c.l.b16 %v2594
        %v2632 = vunpack.c.l.b16 %v2595
        %v2633 = vunpack.c.l.b16 %v2596
        %v2634 = vunpack.c.l.b16 %v2597
        %v2635 = vunpack.c.l.b16 %v2598
        %v2636 = vunpack.c.l.b16 %v2599
        %v2637 = vunpack.c.l.b16 %v2600
        %v2638 = vunpack.c.l.b16 %v2601
        %v2639 = vpack.c.b16 %v2624, %v2623
        %v2640 = vpack.c.b16 %v2626, %v2625
        %v2641 = vpack.c.b16 %v2628, %v2627
        %v2642 = vpack.c.b16 %v2630, %v2629
        %v2643 = vpack.c.b16 %v2632, %v2631
        %v2644 = vpack.c.b16 %v2634, %v2633
        %v2645 = vpack.c.b16 %v2636, %v2635
        %v2646 = vpack.c.b16 %v2638, %v2637
        %2655 = vmatprep.subr.bf16.mxu0 0
        %2656 = vmatpush1.bf16.msra.mxu0 %v2646
        %2657 = vmatprep.subr.bf16.mxu0 0
        %2658 = vmatpush1.bf16.msra.mxu0 %v2645
        %2659 = vmatprep.subr.bf16.mxu0 0
        %2660 = vmatpush1.bf16.msra.mxu0 %v2644
        %2661 = vmatprep.subr.bf16.mxu0 0
        %2662 = vmatpush1.bf16.msra.mxu0 %v2643
        %2663 = vmatprep.subr.bf16.mxu0 0
        %2664 = vmatpush1.bf16.msra.mxu0 %v2642
        %2665 = vmatprep.subr.bf16.mxu0 0
        %2666 = vmatpush1.bf16.msra.mxu0 %v2641
        %2667 = vmatprep.subr.bf16.mxu0 0
        %2668 = vmatpush1.bf16.msra.mxu0 %v2640
        %2669 = vmatprep.subr.bf16.mxu0 0
        %2670 = vmatpush1.bf16.msra.mxu0 %v2639
        %2671 = vmatprep.subr.bf16.mxu0 0
        %2672 = vmatpush2.bf16.msra.mxu0 0
        %2673 = vmatprep.subr.bf16.mxu0 0
        %2674 = vmatpush2.bf16.msra.mxu0 0
        %2675 = vmatprep.subr.bf16.mxu0 0
        %2676 = vmatpush2.bf16.msra.mxu0 0
        %2677 = vmatprep.subr.bf16.mxu0 0
        %2678 = vmatpush2.bf16.msra.mxu0 0
        %2679 = vmatprep.subr.bf16.mxu0 0
        %2680 = vmatpush2.bf16.msra.mxu0 0
        %2681 = vmatprep.subr.bf16.mxu0 0
        %2682 = vmatpush2.bf16.msra.mxu0 0
        %2683 = vmatprep.subr.bf16.mxu0 0
        %2684 = vmatpush2.bf16.msra.mxu0 0
        %2685 = vmatprep.subr.bf16.mxu0 0
        %2686 = vmatpush2.bf16.msra.mxu0 0
        %2687 = vmatprep.mubr.bf16.mxu0 0
        %2688 = vmatmul.mubr.bf16.gmra.mxu0 %v2569
        %v2689 = vpop.f32.mrf.mxu0
        %v2690 = vadd.f32 %v2606, %v2689
        %v2691 = vpop.f32.mrf.mxu0
        %v2692 = vpop.f32.mrf.mxu0
        %v2693 = vadd.f32 %v2606, %v2692
        %v2694 = vpop.f32.mrf.mxu0
        %2695 = vmatprep.mubr.bf16.mxu0 0
        %2696 = vmatmul.mubr.bf16.gmra.mxu0 %v2570
        %v2697 = vpop.f32.mrf.mxu0
        %v2698 = vadd.f32 %v2606, %v2697
        %v2699 = vpop.f32.mrf.mxu0
        %v2700 = vpop.f32.mrf.mxu0
        %v2701 = vadd.f32 %v2606, %v2700
        %v2702 = vpop.f32.mrf.mxu0
        %2703 = vmatprep.mubr.bf16.mxu0 0
        %2704 = vmatmul.mubr.bf16.gmra.mxu0 %v2571
        %v2705 = vpop.f32.mrf.mxu0
        %v2706 = vadd.f32 %v2606, %v2705
        %v2707 = vpop.f32.mrf.mxu0
        %v2708 = vpop.f32.mrf.mxu0
        %v2709 = vadd.f32 %v2606, %v2708
        %v2710 = vpop.f32.mrf.mxu0
        %2711 = vmatprep.mubr.bf16.mxu0 0
        %2712 = vmatmul.mubr.bf16.gmra.mxu0 %v2572
        %v2713 = vpop.f32.mrf.mxu0
        %v2714 = vadd.f32 %v2606, %v2713
        %v2715 = vpop.f32.mrf.mxu0
        %v2716 = vpop.f32.mrf.mxu0
        %v2717 = vadd.f32 %v2606, %v2716
        %v2718 = vpop.f32.mrf.mxu0
        %2719 = vmatprep.mubr.bf16.mxu0 0
        %2720 = vmatmul.mubr.bf16.gmra.mxu0 %v2573
        %v2721 = vpop.f32.mrf.mxu0
        %v2722 = vadd.f32 %v2606, %v2721
        %v2723 = vpop.f32.mrf.mxu0
        %v2724 = vpop.f32.mrf.mxu0
        %v2725 = vadd.f32 %v2606, %v2724
        %v2726 = vpop.f32.mrf.mxu0
        %2727 = vmatprep.mubr.bf16.mxu0 0
        %2728 = vmatmul.mubr.bf16.gmra.mxu0 %v2574
        %v2729 = vpop.f32.mrf.mxu0
        %v2730 = vadd.f32 %v2606, %v2729
        %v2731 = vpop.f32.mrf.mxu0
        %v2732 = vpop.f32.mrf.mxu0
        %v2733 = vadd.f32 %v2606, %v2732
        %v2734 = vpop.f32.mrf.mxu0
        %2735 = vmatprep.mubr.bf16.mxu0 0
        %2736 = vmatmul.mubr.bf16.gmra.mxu0 %v2575
        %v2737 = vpop.f32.mrf.mxu0
        %v2738 = vadd.f32 %v2606, %v2737
        %v2739 = vpop.f32.mrf.mxu0
        %v2740 = vpop.f32.mrf.mxu0
        %v2741 = vadd.f32 %v2606, %v2740
        %v2742 = vpop.f32.mrf.mxu0
        %2743 = vmatprep.mubr.bf16.mxu0 0
        %2744 = vmatmul.mubr.bf16.gmra.mxu0 %v2576
        %v2745 = vpop.f32.mrf.mxu0
        %v2746 = vadd.f32 %v2606, %v2745
        %v2747 = vpop.f32.mrf.mxu0
        %v2748 = vpop.f32.mrf.mxu0
        %v2749 = vadd.f32 %v2606, %v2748
        %v2750 = vpop.f32.mrf.mxu0
        %2751 = vmatprep.mubr.bf16.mxu0 0
        %2752 = vmatmul.mubr.bf16.gmra.mxu0 %v2577
        %v2753 = vpop.f32.mrf.mxu0
        %v2754 = vadd.f32 %v2606, %v2753
        %v2755 = vpop.f32.mrf.mxu0
        %v2756 = vpop.f32.mrf.mxu0
        %v2757 = vadd.f32 %v2606, %v2756
        %v2758 = vpop.f32.mrf.mxu0
        %2759 = vmatprep.mubr.bf16.mxu0 0
        %2760 = vmatmul.mubr.bf16.gmra.mxu0 %v2578
        %v2761 = vpop.f32.mrf.mxu0
        %v2762 = vadd.f32 %v2606, %v2761
        %v2763 = vpop.f32.mrf.mxu0
        %v2764 = vpop.f32.mrf.mxu0
        %v2765 = vadd.f32 %v2606, %v2764
        %v2766 = vpop.f32.mrf.mxu0
        %2767 = vmatprep.mubr.bf16.mxu0 0
        %2768 = vmatmul.mubr.bf16.gmra.mxu0 %v2579
        %v2769 = vpop.f32.mrf.mxu0
        %v2770 = vadd.f32 %v2606, %v2769
        %v2771 = vpop.f32.mrf.mxu0
        %v2772 = vpop.f32.mrf.mxu0
        %v2773 = vadd.f32 %v2606, %v2772
        %v2774 = vpop.f32.mrf.mxu0
        %2775 = vmatprep.mubr.bf16.mxu0 0
        %2776 = vmatmul.mubr.bf16.gmra.mxu0 %v2580
        %v2777 = vpop.f32.mrf.mxu0
        %v2778 = vadd.f32 %v2606, %v2777
        %v2779 = vpop.f32.mrf.mxu0
        %v2780 = vpop.f32.mrf.mxu0
        %v2781 = vadd.f32 %v2606, %v2780
        %v2782 = vpop.f32.mrf.mxu0
        %2783 = vmatprep.mubr.bf16.mxu0 0
        %2784 = vmatmul.mubr.bf16.gmra.mxu0 %v2581
        %v2785 = vpop.f32.mrf.mxu0
        %v2786 = vadd.f32 %v2606, %v2785
        %v2787 = vpop.f32.mrf.mxu0
        %v2788 = vpop.f32.mrf.mxu0
        %v2789 = vadd.f32 %v2606, %v2788
        %v2790 = vpop.f32.mrf.mxu0
        %2791 = vmatprep.mubr.bf16.mxu0 0
        %2792 = vmatmul.mubr.bf16.gmra.mxu0 %v2582
        %v2793 = vpop.f32.mrf.mxu0
        %v2794 = vadd.f32 %v2606, %v2793
        %v2795 = vpop.f32.mrf.mxu0
        %v2796 = vpop.f32.mrf.mxu0
        %v2797 = vadd.f32 %v2606, %v2796
        %v2798 = vpop.f32.mrf.mxu0
        %2799 = vmatprep.mubr.bf16.mxu0 0
        %2800 = vmatmul.mubr.bf16.gmra.mxu0 %v2583
        %v2801 = vpop.f32.mrf.mxu0
        %v2802 = vadd.f32 %v2606, %v2801
        %v2803 = vpop.f32.mrf.mxu0
        %v2804 = vpop.f32.mrf.mxu0
        %v2805 = vadd.f32 %v2606, %v2804
        %v2806 = vpop.f32.mrf.mxu0
        %2807 = vmatprep.mubr.bf16.mxu0 0
        %2808 = vmatmul.mubr.bf16.gmra.mxu0 %v2584
        %v2809 = vpop.f32.mrf.mxu0
        %v2810 = vadd.f32 %v2606, %v2809
        %v2811 = vpop.f32.mrf.mxu0
        %v2812 = vpop.f32.mrf.mxu0
        %v2813 = vadd.f32 %v2606, %v2812
        %v2814 = vpop.f32.mrf.mxu0
        %2815 = vdwg.mxu0
        %v2816 = vmax.f32 %v2690, 0.0
        %v2817 = vmax.f32 %v2693, 0.0
        %v2818 = vmax.f32 %v2698, 0.0
        %v2819 = vmax.f32 %v2701, 0.0
        %v2820 = vmax.f32 %v2706, 0.0
        %v2821 = vmax.f32 %v2709, 0.0
        %v2822 = vmax.f32 %v2714, 0.0
        %v2823 = vmax.f32 %v2717, 0.0
        %v2824 = vmax.f32 %v2722, 0.0
        %v2825 = vmax.f32 %v2725, 0.0
        %v2826 = vmax.f32 %v2730, 0.0
        %v2827 = vmax.f32 %v2733, 0.0
        %v2828 = vmax.f32 %v2738, 0.0
        %v2829 = vmax.f32 %v2741, 0.0
        %v2830 = vmax.f32 %v2746, 0.0
        %v2831 = vmax.f32 %v2749, 0.0
        %v2832 = vmax.f32 %v2754, 0.0
        %v2833 = vmax.f32 %v2757, 0.0
        %v2834 = vmax.f32 %v2762, 0.0
        %v2835 = vmax.f32 %v2765, 0.0
        %v2836 = vmax.f32 %v2770, 0.0
        %v2837 = vmax.f32 %v2773, 0.0
        %v2838 = vmax.f32 %v2778, 0.0
        %v2839 = vmax.f32 %v2781, 0.0
        %v2840 = vmax.f32 %v2786, 0.0
        %v2841 = vmax.f32 %v2789, 0.0
        %v2842 = vmax.f32 %v2794, 0.0
        %v2843 = vmax.f32 %v2797, 0.0
        %v2844 = vmax.f32 %v2802, 0.0
        %v2845 = vmax.f32 %v2805, 0.0
        %v2846 = vmax.f32 %v2810, 0.0
        %v2847 = vmax.f32 %v2813, 0.0
        %v2848 = vpack.c.bf16 %v2817, %v2816
        %v2849 = vpack.c.bf16 %v2819, %v2818
        %v2850 = vpack.c.bf16 %v2821, %v2820
        %v2851 = vpack.c.bf16 %v2823, %v2822
        %v2852 = vpack.c.bf16 %v2825, %v2824
        %v2853 = vpack.c.bf16 %v2827, %v2826
        %v2854 = vpack.c.bf16 %v2829, %v2828
        %v2855 = vpack.c.bf16 %v2831, %v2830
        %v2856 = vpack.c.bf16 %v2833, %v2832
        %v2857 = vpack.c.bf16 %v2835, %v2834
        %v2858 = vpack.c.bf16 %v2837, %v2836
        %v2859 = vpack.c.bf16 %v2839, %v2838
        %v2860 = vpack.c.bf16 %v2841, %v2840
        %v2861 = vpack.c.bf16 %v2843, %v2842
        %v2862 = vpack.c.bf16 %v2845, %v2844
        %v2863 = vpack.c.bf16 %v2847, %v2846
        %s2864 = scalar_lea.vmem [#allocation8], 256
        %v2865 = vld [vmem:[%s2864] sm:$0xff]
        %v2866 = vld [vmem:[%s2864 + $0x8] sm:$0xff]
        %v2867 = vld [vmem:[%s2864 + $0x10] sm:$0xff]
        %v2868 = vld [vmem:[%s2864 + $0x18] sm:$0xff]
        %v2869 = vld [vmem:[%s2864 + $0x20] sm:$0xff]
        %v2870 = vld [vmem:[%s2864 + $0x28] sm:$0xff]
        %v2871 = vld [vmem:[%s2864 + $0x30] sm:$0xff]
        %v2872 = vld [vmem:[%s2864 + $0x38] sm:$0xff]
        %v2873 = vld [vmem:[%s2864 + $0x40] sm:$0xff]
        %v2874 = vld [vmem:[%s2864 + $0x48] sm:$0xff]
        %v2875 = vld [vmem:[%s2864 + $0x50] sm:$0xff]
        %v2876 = vld [vmem:[%s2864 + $0x58] sm:$0xff]
        %v2877 = vld [vmem:[%s2864 + $0x60] sm:$0xff]
        %v2878 = vld [vmem:[%s2864 + $0x68] sm:$0xff]
        %v2879 = vld [vmem:[%s2864 + $0x70] sm:$0xff]
        %v2880 = vld [vmem:[%s2864 + $0x78] sm:$0xff]
        %v2881 = vld [vmem:[%s2864 + $0x80] sm:$0xff]
        %v2882 = vld [vmem:[%s2864 + $0x88] sm:$0xff]
        %v2883 = vld [vmem:[%s2864 + $0x90] sm:$0xff]
        %v2884 = vld [vmem:[%s2864 + $0x98] sm:$0xff]
        %v2885 = vld [vmem:[%s2864 + $0xa0] sm:$0xff]
        %v2886 = vld [vmem:[%s2864 + $0xa8] sm:$0xff]
        %v2887 = vld [vmem:[%s2864 + $0xb0] sm:$0xff]
        %v2888 = vld [vmem:[%s2864 + $0xb8] sm:$0xff]
        %v2889 = vld [vmem:[%s2864 + $0xc0] sm:$0xff]
        %v2890 = vld [vmem:[%s2864 + $0xc8] sm:$0xff]
        %v2891 = vld [vmem:[%s2864 + $0xd0] sm:$0xff]
        %v2892 = vld [vmem:[%s2864 + $0xd8] sm:$0xff]
        %v2893 = vld [vmem:[%s2864 + $0xe0] sm:$0xff]
        %v2894 = vld [vmem:[%s2864 + $0xe8] sm:$0xff]
        %v2895 = vld [vmem:[%s2864 + $0xf0] sm:$0xff]
        %v2896 = vld [vmem:[%s2864 + $0xf8] sm:$0xff]
        %s2897 = scalar_lea.vmem [#allocation10], 1
        %v2898 = vld [vmem:[%s2897] ss:$4 sm:$0xf]
        %v2900 = vlaneseq
        %v2901 = vshrl.u32 %v2900, 7
        %v2902 = vsub.s32 0, %v2901
        %v2903 = vrot.slane %v2898, %v2902
        %v2904 = vlaneseq
        %v2905 = vshrl.u32 %v2904, 7
        %v2906 = vsub.s32 1, %v2905
        %v2907 = vrot.slane %v2898, %v2906
        %v2908 = vlaneseq
        %v2909 = vshrl.u32 %v2908, 7
        %v2910 = vsub.s32 2, %v2909
        %v2911 = vrot.slane %v2898, %v2910
        %v2912 = vlaneseq
        %v2913 = vshrl.u32 %v2912, 7
        %v2914 = vsub.s32 3, %v2913
        %v2915 = vrot.slane %v2898, %v2914
        %v2952 = vunpack.c.l.b16 %v2865
        %v2953 = vunpack.c.h.b16 %v2865
        %v2954 = vunpack.c.l.b16 %v2866
        %v2955 = vunpack.c.h.b16 %v2866
        %v2956 = vunpack.c.l.b16 %v2867
        %v2957 = vunpack.c.h.b16 %v2867
        %v2958 = vunpack.c.l.b16 %v2868
        %v2959 = vunpack.c.h.b16 %v2868
        %v2960 = vunpack.c.l.b16 %v2869
        %v2961 = vunpack.c.h.b16 %v2869
        %v2962 = vunpack.c.l.b16 %v2870
        %v2963 = vunpack.c.h.b16 %v2870
        %v2964 = vunpack.c.l.b16 %v2871
        %v2965 = vunpack.c.h.b16 %v2871
        %v2966 = vunpack.c.l.b16 %v2872
        %v2967 = vunpack.c.h.b16 %v2872
        %v2968 = vunpack.c.l.b16 %v2873
        %v2969 = vunpack.c.h.b16 %v2873
        %v2970 = vunpack.c.l.b16 %v2874
        %v2971 = vunpack.c.h.b16 %v2874
        %v2972 = vunpack.c.l.b16 %v2875
        %v2973 = vunpack.c.h.b16 %v2875
        %v2974 = vunpack.c.l.b16 %v2876
        %v2975 = vunpack.c.h.b16 %v2876
        %v2976 = vunpack.c.l.b16 %v2877
        %v2977 = vunpack.c.h.b16 %v2877
        %v2978 = vunpack.c.l.b16 %v2878
        %v2979 = vunpack.c.h.b16 %v2878
        %v2980 = vunpack.c.l.b16 %v2879
        %v2981 = vunpack.c.h.b16 %v2879
        %v2982 = vunpack.c.l.b16 %v2880
        %v2983 = vunpack.c.h.b16 %v2880
        %v2984 = vunpack.c.l.b16 %v2881
        %v2985 = vunpack.c.h.b16 %v2881
        %v2986 = vunpack.c.l.b16 %v2882
        %v2987 = vunpack.c.h.b16 %v2882
        %v2988 = vunpack.c.l.b16 %v2883
        %v2989 = vunpack.c.h.b16 %v2883
        %v2990 = vunpack.c.l.b16 %v2884
        %v2991 = vunpack.c.h.b16 %v2884
        %v2992 = vunpack.c.l.b16 %v2885
        %v2993 = vunpack.c.h.b16 %v2885
        %v2994 = vunpack.c.l.b16 %v2886
        %v2995 = vunpack.c.h.b16 %v2886
        %v2996 = vunpack.c.l.b16 %v2887
        %v2997 = vunpack.c.h.b16 %v2887
        %v2998 = vunpack.c.l.b16 %v2888
        %v2999 = vunpack.c.h.b16 %v2888
        %v3000 = vunpack.c.l.b16 %v2889
        %v3001 = vunpack.c.h.b16 %v2889
        %v3002 = vunpack.c.l.b16 %v2890
        %v3003 = vunpack.c.h.b16 %v2890
        %v3004 = vunpack.c.l.b16 %v2891
        %v3005 = vunpack.c.h.b16 %v2891
        %v3006 = vunpack.c.l.b16 %v2892
        %v3007 = vunpack.c.h.b16 %v2892
        %v3008 = vunpack.c.l.b16 %v2893
        %v3009 = vunpack.c.h.b16 %v2893
        %v3010 = vunpack.c.l.b16 %v2894
        %v3011 = vunpack.c.h.b16 %v2894
        %v3012 = vunpack.c.l.b16 %v2895
        %v3013 = vunpack.c.h.b16 %v2895
        %v3014 = vunpack.c.l.b16 %v2896
        %v3015 = vunpack.c.h.b16 %v2896
        %v3016 = vpack.c.b16 %v2956, %v2952
        %v3017 = vpack.c.b16 %v2957, %v2953
        %v3018 = vpack.c.b16 %v2958, %v2954
        %v3019 = vpack.c.b16 %v2959, %v2955
        %v3020 = vpack.c.b16 %v2964, %v2960
        %v3021 = vpack.c.b16 %v2965, %v2961
        %v3022 = vpack.c.b16 %v2966, %v2962
        %v3023 = vpack.c.b16 %v2967, %v2963
        %v3024 = vpack.c.b16 %v2972, %v2968
        %v3025 = vpack.c.b16 %v2973, %v2969
        %v3026 = vpack.c.b16 %v2974, %v2970
        %v3027 = vpack.c.b16 %v2975, %v2971
        %v3028 = vpack.c.b16 %v2980, %v2976
        %v3029 = vpack.c.b16 %v2981, %v2977
        %v3030 = vpack.c.b16 %v2982, %v2978
        %v3031 = vpack.c.b16 %v2983, %v2979
        %v3032 = vpack.c.b16 %v2988, %v2984
        %v3033 = vpack.c.b16 %v2989, %v2985
        %v3034 = vpack.c.b16 %v2990, %v2986
        %v3035 = vpack.c.b16 %v2991, %v2987
        %v3036 = vpack.c.b16 %v2996, %v2992
        %v3037 = vpack.c.b16 %v2997, %v2993
        %v3038 = vpack.c.b16 %v2998, %v2994
        %v3039 = vpack.c.b16 %v2999, %v2995
        %v3040 = vpack.c.b16 %v3004, %v3000
        %v3041 = vpack.c.b16 %v3005, %v3001
        %v3042 = vpack.c.b16 %v3006, %v3002
        %v3043 = vpack.c.b16 %v3007, %v3003
        %v3044 = vpack.c.b16 %v3012, %v3008
        %v3045 = vpack.c.b16 %v3013, %v3009
        %v3046 = vpack.c.b16 %v3014, %v3010
        %v3047 = vpack.c.b16 %v3015, %v3011
        %3080 = vmatprep.subr.bf16.mxu0 %v3045
        %3081 = vmatpush1.bf16.msra.mxu0 %v3044
        %3082 = vmatprep.subr.bf16.mxu0 %v3041
        %3083 = vmatpush1.bf16.msra.mxu0 %v3040
        %3084 = vmatprep.subr.bf16.mxu0 %v3037
        %3085 = vmatpush1.bf16.msra.mxu0 %v3036
        %3086 = vmatprep.subr.bf16.mxu0 %v3033
        %3087 = vmatpush1.bf16.msra.mxu0 %v3032
        %3088 = vmatprep.subr.bf16.mxu0 %v3029
        %3089 = vmatpush1.bf16.msra.mxu0 %v3028
        %3090 = vmatprep.subr.bf16.mxu0 %v3025
        %3091 = vmatpush1.bf16.msra.mxu0 %v3024
        %3092 = vmatprep.subr.bf16.mxu0 %v3021
        %3093 = vmatpush1.bf16.msra.mxu0 %v3020
        %3094 = vmatprep.subr.bf16.mxu0 %v3017
        %3095 = vmatpush1.bf16.msra.mxu0 %v3016
        %3096 = vmatprep.subr.bf16.mxu0 0
        %3097 = vmatpush2.bf16.msra.mxu0 0
        %3098 = vmatprep.subr.bf16.mxu0 0
        %3099 = vmatpush2.bf16.msra.mxu0 0
        %3100 = vmatprep.subr.bf16.mxu0 0
        %3101 = vmatpush2.bf16.msra.mxu0 0
        %3102 = vmatprep.subr.bf16.mxu0 0
        %3103 = vmatpush2.bf16.msra.mxu0 0
        %3104 = vmatprep.subr.bf16.mxu0 0
        %3105 = vmatpush2.bf16.msra.mxu0 0
        %3106 = vmatprep.subr.bf16.mxu0 0
        %3107 = vmatpush2.bf16.msra.mxu0 0
        %3108 = vmatprep.subr.bf16.mxu0 0
        %3109 = vmatpush2.bf16.msra.mxu0 0
        %3110 = vmatprep.subr.bf16.mxu0 0
        %3111 = vmatpush2.bf16.msra.mxu0 0
        %3112 = vmatprep.mubr.bf16.mxu0 0
        %3113 = vmatmul.mubr.bf16.gmra.mxu0 %v2848
        %v3114 = vpop.f32.mrf.mxu0
        %v3115 = vadd.f32 %v2903, %v3114
        %v3116 = vpop.f32.mrf.mxu0
        %v3117 = vadd.f32 %v2907, %v3116
        %v3118 = vpop.f32.mrf.mxu0
        %v3119 = vadd.f32 %v2903, %v3118
        %v3120 = vpop.f32.mrf.mxu0
        %v3121 = vadd.f32 %v2907, %v3120
        %3122 = vmatprep.mubr.bf16.mxu0 0
        %3123 = vmatmul.mubr.bf16.gmra.mxu0 %v2849
        %v3124 = vpop.f32.mrf.mxu0
        %v3125 = vadd.f32 %v2903, %v3124
        %v3126 = vpop.f32.mrf.mxu0
        %v3127 = vadd.f32 %v2907, %v3126
        %v3128 = vpop.f32.mrf.mxu0
        %v3129 = vadd.f32 %v2903, %v3128
        %v3130 = vpop.f32.mrf.mxu0
        %v3131 = vadd.f32 %v2907, %v3130
        %3132 = vmatprep.mubr.bf16.mxu0 0
        %3133 = vmatmul.mubr.bf16.gmra.mxu0 %v2850
        %v3134 = vpop.f32.mrf.mxu0
        %v3135 = vadd.f32 %v2903, %v3134
        %v3136 = vpop.f32.mrf.mxu0
        %v3137 = vadd.f32 %v2907, %v3136
        %v3138 = vpop.f32.mrf.mxu0
        %v3139 = vadd.f32 %v2903, %v3138
        %v3140 = vpop.f32.mrf.mxu0
        %v3141 = vadd.f32 %v2907, %v3140
        %3142 = vmatprep.mubr.bf16.mxu0 0
        %3143 = vmatmul.mubr.bf16.gmra.mxu0 %v2851
        %v3144 = vpop.f32.mrf.mxu0
        %v3145 = vadd.f32 %v2903, %v3144
        %v3146 = vpop.f32.mrf.mxu0
        %v3147 = vadd.f32 %v2907, %v3146
        %v3148 = vpop.f32.mrf.mxu0
        %v3149 = vadd.f32 %v2903, %v3148
        %v3150 = vpop.f32.mrf.mxu0
        %v3151 = vadd.f32 %v2907, %v3150
        %3152 = vmatprep.mubr.bf16.mxu0 0
        %3153 = vmatmul.mubr.bf16.gmra.mxu0 %v2852
        %v3154 = vpop.f32.mrf.mxu0
        %v3155 = vadd.f32 %v2903, %v3154
        %v3156 = vpop.f32.mrf.mxu0
        %v3157 = vadd.f32 %v2907, %v3156
        %v3158 = vpop.f32.mrf.mxu0
        %v3159 = vadd.f32 %v2903, %v3158
        %v3160 = vpop.f32.mrf.mxu0
        %v3161 = vadd.f32 %v2907, %v3160
        %3162 = vmatprep.mubr.bf16.mxu0 0
        %3163 = vmatmul.mubr.bf16.gmra.mxu0 %v2853
        %v3164 = vpop.f32.mrf.mxu0
        %v3165 = vadd.f32 %v2903, %v3164
        %v3166 = vpop.f32.mrf.mxu0
        %v3167 = vadd.f32 %v2907, %v3166
        %v3168 = vpop.f32.mrf.mxu0
        %v3169 = vadd.f32 %v2903, %v3168
        %v3170 = vpop.f32.mrf.mxu0
        %v3171 = vadd.f32 %v2907, %v3170
        %3172 = vmatprep.mubr.bf16.mxu0 0
        %3173 = vmatmul.mubr.bf16.gmra.mxu0 %v2854
        %v3174 = vpop.f32.mrf.mxu0
        %v3175 = vadd.f32 %v2903, %v3174
        %v3176 = vpop.f32.mrf.mxu0
        %v3177 = vadd.f32 %v2907, %v3176
        %v3178 = vpop.f32.mrf.mxu0
        %v3179 = vadd.f32 %v2903, %v3178
        %v3180 = vpop.f32.mrf.mxu0
        %v3181 = vadd.f32 %v2907, %v3180
        %3182 = vmatprep.mubr.bf16.mxu0 0
        %3183 = vmatmul.mubr.bf16.gmra.mxu0 %v2855
        %v3184 = vpop.f32.mrf.mxu0
        %v3185 = vadd.f32 %v2903, %v3184
        %v3186 = vpop.f32.mrf.mxu0
        %v3187 = vadd.f32 %v2907, %v3186
        %v3188 = vpop.f32.mrf.mxu0
        %v3189 = vadd.f32 %v2903, %v3188
        %v3190 = vpop.f32.mrf.mxu0
        %v3191 = vadd.f32 %v2907, %v3190
        %3192 = vmatprep.mubr.bf16.mxu0 0
        %3193 = vmatmul.mubr.bf16.gmra.mxu0 %v2856
        %v3194 = vpop.f32.mrf.mxu0
        %v3195 = vadd.f32 %v2903, %v3194
        %v3196 = vpop.f32.mrf.mxu0
        %v3197 = vadd.f32 %v2907, %v3196
        %v3198 = vpop.f32.mrf.mxu0
        %v3199 = vadd.f32 %v2903, %v3198
        %v3200 = vpop.f32.mrf.mxu0
        %v3201 = vadd.f32 %v2907, %v3200
        %3202 = vmatprep.mubr.bf16.mxu0 0
        %3203 = vmatmul.mubr.bf16.gmra.mxu0 %v2857
        %v3204 = vpop.f32.mrf.mxu0
        %v3205 = vadd.f32 %v2903, %v3204
        %v3206 = vpop.f32.mrf.mxu0
        %v3207 = vadd.f32 %v2907, %v3206
        %v3208 = vpop.f32.mrf.mxu0
        %v3209 = vadd.f32 %v2903, %v3208
        %v3210 = vpop.f32.mrf.mxu0
        %v3211 = vadd.f32 %v2907, %v3210
        %3212 = vmatprep.mubr.bf16.mxu0 0
        %3213 = vmatmul.mubr.bf16.gmra.mxu0 %v2858
        %v3214 = vpop.f32.mrf.mxu0
        %v3215 = vadd.f32 %v2903, %v3214
        %v3216 = vpop.f32.mrf.mxu0
        %v3217 = vadd.f32 %v2907, %v3216
        %v3218 = vpop.f32.mrf.mxu0
        %v3219 = vadd.f32 %v2903, %v3218
        %v3220 = vpop.f32.mrf.mxu0
        %v3221 = vadd.f32 %v2907, %v3220
        %3222 = vmatprep.mubr.bf16.mxu0 0
        %3223 = vmatmul.mubr.bf16.gmra.mxu0 %v2859
        %v3224 = vpop.f32.mrf.mxu0
        %v3225 = vadd.f32 %v2903, %v3224
        %v3226 = vpop.f32.mrf.mxu0
        %v3227 = vadd.f32 %v2907, %v3226
        %v3228 = vpop.f32.mrf.mxu0
        %v3229 = vadd.f32 %v2903, %v3228
        %v3230 = vpop.f32.mrf.mxu0
        %v3231 = vadd.f32 %v2907, %v3230
        %3232 = vmatprep.mubr.bf16.mxu0 0
        %3233 = vmatmul.mubr.bf16.gmra.mxu0 %v2860
        %v3234 = vpop.f32.mrf.mxu0
        %v3235 = vadd.f32 %v2903, %v3234
        %v3236 = vpop.f32.mrf.mxu0
        %v3237 = vadd.f32 %v2907, %v3236
        %v3238 = vpop.f32.mrf.mxu0
        %v3239 = vadd.f32 %v2903, %v3238
        %v3240 = vpop.f32.mrf.mxu0
        %v3241 = vadd.f32 %v2907, %v3240
        %3242 = vmatprep.mubr.bf16.mxu0 0
        %3243 = vmatmul.mubr.bf16.gmra.mxu0 %v2861
        %v3244 = vpop.f32.mrf.mxu0
        %v3245 = vadd.f32 %v2903, %v3244
        %v3246 = vpop.f32.mrf.mxu0
        %v3247 = vadd.f32 %v2907, %v3246
        %v3248 = vpop.f32.mrf.mxu0
        %v3249 = vadd.f32 %v2903, %v3248
        %v3250 = vpop.f32.mrf.mxu0
        %v3251 = vadd.f32 %v2907, %v3250
        %3252 = vmatprep.mubr.bf16.mxu0 0
        %3253 = vmatmul.mubr.bf16.gmra.mxu0 %v2862
        %v3254 = vpop.f32.mrf.mxu0
        %v3255 = vadd.f32 %v2903, %v3254
        %v3256 = vpop.f32.mrf.mxu0
        %v3257 = vadd.f32 %v2907, %v3256
        %v3258 = vpop.f32.mrf.mxu0
        %v3259 = vadd.f32 %v2903, %v3258
        %v3260 = vpop.f32.mrf.mxu0
        %v3261 = vadd.f32 %v2907, %v3260
        %3262 = vmatprep.mubr.bf16.mxu0 0
        %3263 = vmatmul.mubr.bf16.gmra.mxu0 %v2863
        %v3264 = vpop.f32.mrf.mxu0
        %v3265 = vadd.f32 %v2903, %v3264
        %v3266 = vpop.f32.mrf.mxu0
        %v3267 = vadd.f32 %v2907, %v3266
        %v3268 = vpop.f32.mrf.mxu0
        %v3269 = vadd.f32 %v2903, %v3268
        %v3270 = vpop.f32.mrf.mxu0
        %v3271 = vadd.f32 %v2907, %v3270
        %3272 = vdwg.mxu0
        %3273 = vmatprep.subr.bf16.mxu0 %v3047
        %3274 = vmatpush1.bf16.msra.mxu0 %v3046
        %3275 = vmatprep.subr.bf16.mxu0 %v3043
        %3276 = vmatpush1.bf16.msra.mxu0 %v3042
        %3277 = vmatprep.subr.bf16.mxu0 %v3039
        %3278 = vmatpush1.bf16.msra.mxu0 %v3038
        %3279 = vmatprep.subr.bf16.mxu0 %v3035
        %3280 = vmatpush1.bf16.msra.mxu0 %v3034
        %3281 = vmatprep.subr.bf16.mxu0 %v3031
        %3282 = vmatpush1.bf16.msra.mxu0 %v3030
        %3283 = vmatprep.subr.bf16.mxu0 %v3027
        %3284 = vmatpush1.bf16.msra.mxu0 %v3026
        %3285 = vmatprep.subr.bf16.mxu0 %v3023
        %3286 = vmatpush1.bf16.msra.mxu0 %v3022
        %3287 = vmatprep.subr.bf16.mxu0 %v3019
        %3288 = vmatpush1.bf16.msra.mxu0 %v3018
        %3289 = vmatprep.subr.bf16.mxu0 0
        %3290 = vmatpush2.bf16.msra.mxu0 0
        %3291 = vmatprep.subr.bf16.mxu0 0
        %3292 = vmatpush2.bf16.msra.mxu0 0
        %3293 = vmatprep.subr.bf16.mxu0 0
        %3294 = vmatpush2.bf16.msra.mxu0 0
        %3295 = vmatprep.subr.bf16.mxu0 0
        %3296 = vmatpush2.bf16.msra.mxu0 0
        %3297 = vmatprep.subr.bf16.mxu0 0
        %3298 = vmatpush2.bf16.msra.mxu0 0
        %3299 = vmatprep.subr.bf16.mxu0 0
        %3300 = vmatpush2.bf16.msra.mxu0 0
        %3301 = vmatprep.subr.bf16.mxu0 0
        %3302 = vmatpush2.bf16.msra.mxu0 0
        %3303 = vmatprep.subr.bf16.mxu0 0
        %3304 = vmatpush2.bf16.msra.mxu0 0
        %3305 = vmatprep.mubr.bf16.mxu0 0
        %3306 = vmatmul.mubr.bf16.gmra.mxu0 %v2848
        %v3307 = vpop.f32.mrf.mxu0
        %v3308 = vadd.f32 %v2911, %v3307
        %v3309 = vpop.f32.mrf.mxu0
        %v3310 = vadd.f32 %v2915, %v3309
        %v3311 = vpop.f32.mrf.mxu0
        %v3312 = vadd.f32 %v2911, %v3311
        %v3313 = vpop.f32.mrf.mxu0
        %v3314 = vadd.f32 %v2915, %v3313
        %3315 = vmatprep.mubr.bf16.mxu0 0
        %3316 = vmatmul.mubr.bf16.gmra.mxu0 %v2849
        %v3317 = vpop.f32.mrf.mxu0
        %v3318 = vadd.f32 %v2911, %v3317
        %v3319 = vpop.f32.mrf.mxu0
        %v3320 = vadd.f32 %v2915, %v3319
        %v3321 = vpop.f32.mrf.mxu0
        %v3322 = vadd.f32 %v2911, %v3321
        %v3323 = vpop.f32.mrf.mxu0
        %v3324 = vadd.f32 %v2915, %v3323
        %3325 = vmatprep.mubr.bf16.mxu0 0
        %3326 = vmatmul.mubr.bf16.gmra.mxu0 %v2850
        %v3327 = vpop.f32.mrf.mxu0
        %v3328 = vadd.f32 %v2911, %v3327
        %v3329 = vpop.f32.mrf.mxu0
        %v3330 = vadd.f32 %v2915, %v3329
        %v3331 = vpop.f32.mrf.mxu0
        %v3332 = vadd.f32 %v2911, %v3331
        %v3333 = vpop.f32.mrf.mxu0
        %v3334 = vadd.f32 %v2915, %v3333
        %3335 = vmatprep.mubr.bf16.mxu0 0
        %3336 = vmatmul.mubr.bf16.gmra.mxu0 %v2851
        %v3337 = vpop.f32.mrf.mxu0
        %v3338 = vadd.f32 %v2911, %v3337
        %v3339 = vpop.f32.mrf.mxu0
        %v3340 = vadd.f32 %v2915, %v3339
        %v3341 = vpop.f32.mrf.mxu0
        %v3342 = vadd.f32 %v2911, %v3341
        %v3343 = vpop.f32.mrf.mxu0
        %v3344 = vadd.f32 %v2915, %v3343
        %3345 = vmatprep.mubr.bf16.mxu0 0
        %3346 = vmatmul.mubr.bf16.gmra.mxu0 %v2852
        %v3347 = vpop.f32.mrf.mxu0
        %v3348 = vadd.f32 %v2911, %v3347
        %v3349 = vpop.f32.mrf.mxu0
        %v3350 = vadd.f32 %v2915, %v3349
        %v3351 = vpop.f32.mrf.mxu0
        %v3352 = vadd.f32 %v2911, %v3351
        %v3353 = vpop.f32.mrf.mxu0
        %v3354 = vadd.f32 %v2915, %v3353
        %3355 = vmatprep.mubr.bf16.mxu0 0
        %3356 = vmatmul.mubr.bf16.gmra.mxu0 %v2853
        %v3357 = vpop.f32.mrf.mxu0
        %v3358 = vadd.f32 %v2911, %v3357
        %v3359 = vpop.f32.mrf.mxu0
        %v3360 = vadd.f32 %v2915, %v3359
        %v3361 = vpop.f32.mrf.mxu0
        %v3362 = vadd.f32 %v2911, %v3361
        %v3363 = vpop.f32.mrf.mxu0
        %v3364 = vadd.f32 %v2915, %v3363
        %3365 = vmatprep.mubr.bf16.mxu0 0
        %3366 = vmatmul.mubr.bf16.gmra.mxu0 %v2854
        %v3367 = vpop.f32.mrf.mxu0
        %v3368 = vadd.f32 %v2911, %v3367
        %v3369 = vpop.f32.mrf.mxu0
        %v3370 = vadd.f32 %v2915, %v3369
        %v3371 = vpop.f32.mrf.mxu0
        %v3372 = vadd.f32 %v2911, %v3371
        %v3373 = vpop.f32.mrf.mxu0
        %v3374 = vadd.f32 %v2915, %v3373
        %3375 = vmatprep.mubr.bf16.mxu0 0
        %3376 = vmatmul.mubr.bf16.gmra.mxu0 %v2855
        %v3377 = vpop.f32.mrf.mxu0
        %v3378 = vadd.f32 %v2911, %v3377
        %v3379 = vpop.f32.mrf.mxu0
        %v3380 = vadd.f32 %v2915, %v3379
        %v3381 = vpop.f32.mrf.mxu0
        %v3382 = vadd.f32 %v2911, %v3381
        %v3383 = vpop.f32.mrf.mxu0
        %v3384 = vadd.f32 %v2915, %v3383
        %3385 = vmatprep.mubr.bf16.mxu0 0
        %3386 = vmatmul.mubr.bf16.gmra.mxu0 %v2856
        %v3387 = vpop.f32.mrf.mxu0
        %v3388 = vadd.f32 %v2911, %v3387
        %v3389 = vpop.f32.mrf.mxu0
        %v3390 = vadd.f32 %v2915, %v3389
        %v3391 = vpop.f32.mrf.mxu0
        %v3392 = vadd.f32 %v2911, %v3391
        %v3393 = vpop.f32.mrf.mxu0
        %v3394 = vadd.f32 %v2915, %v3393
        %3395 = vmatprep.mubr.bf16.mxu0 0
        %3396 = vmatmul.mubr.bf16.gmra.mxu0 %v2857
        %v3397 = vpop.f32.mrf.mxu0
        %v3398 = vadd.f32 %v2911, %v3397
        %v3399 = vpop.f32.mrf.mxu0
        %v3400 = vadd.f32 %v2915, %v3399
        %v3401 = vpop.f32.mrf.mxu0
        %v3402 = vadd.f32 %v2911, %v3401
        %v3403 = vpop.f32.mrf.mxu0
        %v3404 = vadd.f32 %v2915, %v3403
        %3405 = vmatprep.mubr.bf16.mxu0 0
        %3406 = vmatmul.mubr.bf16.gmra.mxu0 %v2858
        %v3407 = vpop.f32.mrf.mxu0
        %v3408 = vadd.f32 %v2911, %v3407
        %v3409 = vpop.f32.mrf.mxu0
        %v3410 = vadd.f32 %v2915, %v3409
        %v3411 = vpop.f32.mrf.mxu0
        %v3412 = vadd.f32 %v2911, %v3411
        %v3413 = vpop.f32.mrf.mxu0
        %v3414 = vadd.f32 %v2915, %v3413
        %3415 = vmatprep.mubr.bf16.mxu0 0
        %3416 = vmatmul.mubr.bf16.gmra.mxu0 %v2859
        %v3417 = vpop.f32.mrf.mxu0
        %v3418 = vadd.f32 %v2911, %v3417
        %v3419 = vpop.f32.mrf.mxu0
        %v3420 = vadd.f32 %v2915, %v3419
        %v3421 = vpop.f32.mrf.mxu0
        %v3422 = vadd.f32 %v2911, %v3421
        %v3423 = vpop.f32.mrf.mxu0
        %v3424 = vadd.f32 %v2915, %v3423
        %3425 = vmatprep.mubr.bf16.mxu0 0
        %3426 = vmatmul.mubr.bf16.gmra.mxu0 %v2860
        %v3427 = vpop.f32.mrf.mxu0
        %v3428 = vadd.f32 %v2911, %v3427
        %v3429 = vpop.f32.mrf.mxu0
        %v3430 = vadd.f32 %v2915, %v3429
        %v3431 = vpop.f32.mrf.mxu0
        %v3432 = vadd.f32 %v2911, %v3431
        %v3433 = vpop.f32.mrf.mxu0
        %v3434 = vadd.f32 %v2915, %v3433
        %3435 = vmatprep.mubr.bf16.mxu0 0
        %3436 = vmatmul.mubr.bf16.gmra.mxu0 %v2861
        %v3437 = vpop.f32.mrf.mxu0
        %v3438 = vadd.f32 %v2911, %v3437
        %v3439 = vpop.f32.mrf.mxu0
        %v3440 = vadd.f32 %v2915, %v3439
        %v3441 = vpop.f32.mrf.mxu0
        %v3442 = vadd.f32 %v2911, %v3441
        %v3443 = vpop.f32.mrf.mxu0
        %v3444 = vadd.f32 %v2915, %v3443
        %3445 = vmatprep.mubr.bf16.mxu0 0
        %3446 = vmatmul.mubr.bf16.gmra.mxu0 %v2862
        %v3447 = vpop.f32.mrf.mxu0
        %v3448 = vadd.f32 %v2911, %v3447
        %v3449 = vpop.f32.mrf.mxu0
        %v3450 = vadd.f32 %v2915, %v3449
        %v3451 = vpop.f32.mrf.mxu0
        %v3452 = vadd.f32 %v2911, %v3451
        %v3453 = vpop.f32.mrf.mxu0
        %v3454 = vadd.f32 %v2915, %v3453
        %3455 = vmatprep.mubr.bf16.mxu0 0
        %3456 = vmatmul.mubr.bf16.gmra.mxu0 %v2863
        %v3457 = vpop.f32.mrf.mxu0
        %v3458 = vadd.f32 %v2911, %v3457
        %v3459 = vpop.f32.mrf.mxu0
        %v3460 = vadd.f32 %v2915, %v3459
        %v3461 = vpop.f32.mrf.mxu0
        %v3462 = vadd.f32 %v2911, %v3461
        %v3463 = vpop.f32.mrf.mxu0
        %v3464 = vadd.f32 %v2915, %v3463
        %3465 = vdwg.mxu0
        %v3466 = vpack.c.bf16 %v3119, %v3115
        %v3467 = vpack.c.bf16 %v3121, %v3117
        %v3468 = vpack.c.bf16 %v3312, %v3308
        %v3469 = vpack.c.bf16 %v3314, %v3310
        %v3470 = vpack.c.bf16 %v3129, %v3125
        %v3471 = vpack.c.bf16 %v3131, %v3127
        %v3472 = vpack.c.bf16 %v3322, %v3318
        %v3473 = vpack.c.bf16 %v3324, %v3320
        %v3474 = vpack.c.bf16 %v3139, %v3135
        %v3475 = vpack.c.bf16 %v3141, %v3137
        %v3476 = vpack.c.bf16 %v3332, %v3328
        %v3477 = vpack.c.bf16 %v3334, %v3330
        %v3478 = vpack.c.bf16 %v3149, %v3145
        %v3479 = vpack.c.bf16 %v3151, %v3147
        %v3480 = vpack.c.bf16 %v3342, %v3338
        %v3481 = vpack.c.bf16 %v3344, %v3340
        %v3482 = vpack.c.bf16 %v3159, %v3155
        %v3483 = vpack.c.bf16 %v3161, %v3157
        %v3484 = vpack.c.bf16 %v3352, %v3348
        %v3485 = vpack.c.bf16 %v3354, %v3350
        %v3486 = vpack.c.bf16 %v3169, %v3165
        %v3487 = vpack.c.bf16 %v3171, %v3167
        %v3488 = vpack.c.bf16 %v3362, %v3358
        %v3489 = vpack.c.bf16 %v3364, %v3360
        %v3490 = vpack.c.bf16 %v3179, %v3175
        %v3491 = vpack.c.bf16 %v3181, %v3177
        %v3492 = vpack.c.bf16 %v3372, %v3368
        %v3493 = vpack.c.bf16 %v3374, %v3370
        %v3494 = vpack.c.bf16 %v3189, %v3185
        %v3495 = vpack.c.bf16 %v3191, %v3187
        %v3496 = vpack.c.bf16 %v3382, %v3378
        %v3497 = vpack.c.bf16 %v3384, %v3380
        %v3498 = vpack.c.bf16 %v3199, %v3195
        %v3499 = vpack.c.bf16 %v3201, %v3197
        %v3500 = vpack.c.bf16 %v3392, %v3388
        %v3501 = vpack.c.bf16 %v3394, %v3390
        %v3502 = vpack.c.bf16 %v3209, %v3205
        %v3503 = vpack.c.bf16 %v3211, %v3207
        %v3504 = vpack.c.bf16 %v3402, %v3398
        %v3505 = vpack.c.bf16 %v3404, %v3400
        %v3506 = vpack.c.bf16 %v3219, %v3215
        %v3507 = vpack.c.bf16 %v3221, %v3217
        %v3508 = vpack.c.bf16 %v3412, %v3408
        %v3509 = vpack.c.bf16 %v3414, %v3410
        %v3510 = vpack.c.bf16 %v3229, %v3225
        %v3511 = vpack.c.bf16 %v3231, %v3227
        %v3512 = vpack.c.bf16 %v3422, %v3418
        %v3513 = vpack.c.bf16 %v3424, %v3420
        %v3514 = vpack.c.bf16 %v3239, %v3235
        %v3515 = vpack.c.bf16 %v3241, %v3237
        %v3516 = vpack.c.bf16 %v3432, %v3428
        %v3517 = vpack.c.bf16 %v3434, %v3430
        %v3518 = vpack.c.bf16 %v3249, %v3245
        %v3519 = vpack.c.bf16 %v3251, %v3247
        %v3520 = vpack.c.bf16 %v3442, %v3438
        %v3521 = vpack.c.bf16 %v3444, %v3440
        %v3522 = vpack.c.bf16 %v3259, %v3255
        %v3523 = vpack.c.bf16 %v3261, %v3257
        %v3524 = vpack.c.bf16 %v3452, %v3448
        %v3525 = vpack.c.bf16 %v3454, %v3450
        %v3526 = vpack.c.bf16 %v3269, %v3265
        %v3527 = vpack.c.bf16 %v3271, %v3267
        %v3528 = vpack.c.bf16 %v3462, %v3458
        %v3529 = vpack.c.bf16 %v3464, %v3460
        %s3530 = scalar_lea.vmem [#allocation11], 256
        %v3531 = vld [vmem:[%s3530] sm:$0xf]
        %v3532 = vld [vmem:[%s3530 + $0x4] sm:$0xf]
        %v3533 = vld [vmem:[%s3530 + $0x8] sm:$0xf]
        %v3534 = vld [vmem:[%s3530 + $0xc] sm:$0xf]
        %v3535 = vld [vmem:[%s3530 + $0x10] sm:$0xf]
        %v3536 = vld [vmem:[%s3530 + $0x14] sm:$0xf]
        %v3537 = vld [vmem:[%s3530 + $0x18] sm:$0xf]
        %v3538 = vld [vmem:[%s3530 + $0x1c] sm:$0xf]
        %v3539 = vld [vmem:[%s3530 + $0x20] sm:$0xf]
        %v3540 = vld [vmem:[%s3530 + $0x24] sm:$0xf]
        %v3541 = vld [vmem:[%s3530 + $0x28] sm:$0xf]
        %v3542 = vld [vmem:[%s3530 + $0x2c] sm:$0xf]
        %v3543 = vld [vmem:[%s3530 + $0x30] sm:$0xf]
        %v3544 = vld [vmem:[%s3530 + $0x34] sm:$0xf]
        %v3545 = vld [vmem:[%s3530 + $0x38] sm:$0xf]
        %v3546 = vld [vmem:[%s3530 + $0x3c] sm:$0xf]
        %v3547 = vld [vmem:[%s3530 + $0x40] sm:$0xf]
        %v3548 = vld [vmem:[%s3530 + $0x44] sm:$0xf]
        %v3549 = vld [vmem:[%s3530 + $0x48] sm:$0xf]
        %v3550 = vld [vmem:[%s3530 + $0x4c] sm:$0xf]
        %v3551 = vld [vmem:[%s3530 + $0x50] sm:$0xf]
        %v3552 = vld [vmem:[%s3530 + $0x54] sm:$0xf]
        %v3553 = vld [vmem:[%s3530 + $0x58] sm:$0xf]
        %v3554 = vld [vmem:[%s3530 + $0x5c] sm:$0xf]
        %v3555 = vld [vmem:[%s3530 + $0x60] sm:$0xf]
        %v3556 = vld [vmem:[%s3530 + $0x64] sm:$0xf]
        %v3557 = vld [vmem:[%s3530 + $0x68] sm:$0xf]
        %v3558 = vld [vmem:[%s3530 + $0x6c] sm:$0xf]
        %v3559 = vld [vmem:[%s3530 + $0x70] sm:$0xf]
        %v3560 = vld [vmem:[%s3530 + $0x74] sm:$0xf]
        %v3561 = vld [vmem:[%s3530 + $0x78] sm:$0xf]
        %v3562 = vld [vmem:[%s3530 + $0x7c] sm:$0xf]
        %v3563 = vld [vmem:[%s3530 + $0x80] sm:$0xf]
        %v3564 = vld [vmem:[%s3530 + $0x84] sm:$0xf]
        %v3565 = vld [vmem:[%s3530 + $0x88] sm:$0xf]
        %v3566 = vld [vmem:[%s3530 + $0x8c] sm:$0xf]
        %v3567 = vld [vmem:[%s3530 + $0x90] sm:$0xf]
        %v3568 = vld [vmem:[%s3530 + $0x94] sm:$0xf]
        %v3569 = vld [vmem:[%s3530 + $0x98] sm:$0xf]
        %v3570 = vld [vmem:[%s3530 + $0x9c] sm:$0xf]
        %v3571 = vld [vmem:[%s3530 + $0xa0] sm:$0xf]
        %v3572 = vld [vmem:[%s3530 + $0xa4] sm:$0xf]
        %v3573 = vld [vmem:[%s3530 + $0xa8] sm:$0xf]
        %v3574 = vld [vmem:[%s3530 + $0xac] sm:$0xf]
        %v3575 = vld [vmem:[%s3530 + $0xb0] sm:$0xf]
        %v3576 = vld [vmem:[%s3530 + $0xb4] sm:$0xf]
        %v3577 = vld [vmem:[%s3530 + $0xb8] sm:$0xf]
        %v3578 = vld [vmem:[%s3530 + $0xbc] sm:$0xf]
        %v3579 = vld [vmem:[%s3530 + $0xc0] sm:$0xf]
        %v3580 = vld [vmem:[%s3530 + $0xc4] sm:$0xf]
        %v3581 = vld [vmem:[%s3530 + $0xc8] sm:$0xf]
        %v3582 = vld [vmem:[%s3530 + $0xcc] sm:$0xf]
        %v3583 = vld [vmem:[%s3530 + $0xd0] sm:$0xf]
        %v3584 = vld [vmem:[%s3530 + $0xd4] sm:$0xf]
        %v3585 = vld [vmem:[%s3530 + $0xd8] sm:$0xf]
        %v3586 = vld [vmem:[%s3530 + $0xdc] sm:$0xf]
        %v3587 = vld [vmem:[%s3530 + $0xe0] sm:$0xf]
        %v3588 = vld [vmem:[%s3530 + $0xe4] sm:$0xf]
        %v3589 = vld [vmem:[%s3530 + $0xe8] sm:$0xf]
        %v3590 = vld [vmem:[%s3530 + $0xec] sm:$0xf]
        %v3591 = vld [vmem:[%s3530 + $0xf0] sm:$0xf]
        %v3592 = vld [vmem:[%s3530 + $0xf4] sm:$0xf]
        %v3593 = vld [vmem:[%s3530 + $0xf8] sm:$0xf]
        %v3594 = vld [vmem:[%s3530 + $0xfc] sm:$0xf]
        %v3595 = vld [vmem:[#allocation7 + $0x5] sm:$0x1]
        %v3596 = vlaneseq
        %v3597 = vshrl.u32 %v3596, 7
        %v3598 = vsub.s32 0, %v3597
        %v3599 = vrot.slane %v3595, %v3598
        %v3664 = vunpack.c.l.b16 %v3531
        %v3665 = vunpack.c.l.b16 %v3532
        %v3666 = vunpack.c.l.b16 %v3533
        %v3667 = vunpack.c.l.b16 %v3534
        %v3668 = vunpack.c.l.b16 %v3535
        %v3669 = vunpack.c.l.b16 %v3536
        %v3670 = vunpack.c.l.b16 %v3537
        %v3671 = vunpack.c.l.b16 %v3538
        %v3672 = vunpack.c.l.b16 %v3539
        %v3673 = vunpack.c.l.b16 %v3540
        %v3674 = vunpack.c.l.b16 %v3541
        %v3675 = vunpack.c.l.b16 %v3542
        %v3676 = vunpack.c.l.b16 %v3543
        %v3677 = vunpack.c.l.b16 %v3544
        %v3678 = vunpack.c.l.b16 %v3545
        %v3679 = vunpack.c.l.b16 %v3546
        %v3680 = vunpack.c.l.b16 %v3547
        %v3681 = vunpack.c.l.b16 %v3548
        %v3682 = vunpack.c.l.b16 %v3549
        %v3683 = vunpack.c.l.b16 %v3550
        %v3684 = vunpack.c.l.b16 %v3551
        %v3685 = vunpack.c.l.b16 %v3552
        %v3686 = vunpack.c.l.b16 %v3553
        %v3687 = vunpack.c.l.b16 %v3554
        %v3688 = vunpack.c.l.b16 %v3555
        %v3689 = vunpack.c.l.b16 %v3556
        %v3690 = vunpack.c.l.b16 %v3557
        %v3691 = vunpack.c.l.b16 %v3558
        %v3692 = vunpack.c.l.b16 %v3559
        %v3693 = vunpack.c.l.b16 %v3560
        %v3694 = vunpack.c.l.b16 %v3561
        %v3695 = vunpack.c.l.b16 %v3562
        %v3696 = vunpack.c.l.b16 %v3563
        %v3697 = vunpack.c.l.b16 %v3564
        %v3698 = vunpack.c.l.b16 %v3565
        %v3699 = vunpack.c.l.b16 %v3566
        %v3700 = vunpack.c.l.b16 %v3567
        %v3701 = vunpack.c.l.b16 %v3568
        %v3702 = vunpack.c.l.b16 %v3569
        %v3703 = vunpack.c.l.b16 %v3570
        %v3704 = vunpack.c.l.b16 %v3571
        %v3705 = vunpack.c.l.b16 %v3572
        %v3706 = vunpack.c.l.b16 %v3573
        %v3707 = vunpack.c.l.b16 %v3574
        %v3708 = vunpack.c.l.b16 %v3575
        %v3709 = vunpack.c.l.b16 %v3576
        %v3710 = vunpack.c.l.b16 %v3577
        %v3711 = vunpack.c.l.b16 %v3578
        %v3712 = vunpack.c.l.b16 %v3579
        %v3713 = vunpack.c.l.b16 %v3580
        %v3714 = vunpack.c.l.b16 %v3581
        %v3715 = vunpack.c.l.b16 %v3582
        %v3716 = vunpack.c.l.b16 %v3583
        %v3717 = vunpack.c.l.b16 %v3584
        %v3718 = vunpack.c.l.b16 %v3585
        %v3719 = vunpack.c.l.b16 %v3586
        %v3720 = vunpack.c.l.b16 %v3587
        %v3721 = vunpack.c.l.b16 %v3588
        %v3722 = vunpack.c.l.b16 %v3589
        %v3723 = vunpack.c.l.b16 %v3590
        %v3724 = vunpack.c.l.b16 %v3591
        %v3725 = vunpack.c.l.b16 %v3592
        %v3726 = vunpack.c.l.b16 %v3593
        %v3727 = vunpack.c.l.b16 %v3594
        %v3728 = vpack.c.b16 %v3665, %v3664
        %v3729 = vpack.c.b16 %v3667, %v3666
        %v3730 = vpack.c.b16 %v3669, %v3668
        %v3731 = vpack.c.b16 %v3671, %v3670
        %v3732 = vpack.c.b16 %v3673, %v3672
        %v3733 = vpack.c.b16 %v3675, %v3674
        %v3734 = vpack.c.b16 %v3677, %v3676
        %v3735 = vpack.c.b16 %v3679, %v3678
        %v3736 = vpack.c.b16 %v3681, %v3680
        %v3737 = vpack.c.b16 %v3683, %v3682
        %v3738 = vpack.c.b16 %v3685, %v3684
        %v3739 = vpack.c.b16 %v3687, %v3686
        %v3740 = vpack.c.b16 %v3689, %v3688
        %v3741 = vpack.c.b16 %v3691, %v3690
        %v3742 = vpack.c.b16 %v3693, %v3692
        %v3743 = vpack.c.b16 %v3695, %v3694
        %v3744 = vpack.c.b16 %v3697, %v3696
        %v3745 = vpack.c.b16 %v3699, %v3698
        %v3746 = vpack.c.b16 %v3701, %v3700
        %v3747 = vpack.c.b16 %v3703, %v3702
        %v3748 = vpack.c.b16 %v3705, %v3704
        %v3749 = vpack.c.b16 %v3707, %v3706
        %v3750 = vpack.c.b16 %v3709, %v3708
        %v3751 = vpack.c.b16 %v3711, %v3710
        %v3752 = vpack.c.b16 %v3713, %v3712
        %v3753 = vpack.c.b16 %v3715, %v3714
        %v3754 = vpack.c.b16 %v3717, %v3716
        %v3755 = vpack.c.b16 %v3719, %v3718
        %v3756 = vpack.c.b16 %v3721, %v3720
        %v3757 = vpack.c.b16 %v3723, %v3722
        %v3758 = vpack.c.b16 %v3725, %v3724
        %v3759 = vpack.c.b16 %v3727, %v3726
        %3792 = vmatprep.subr.bf16.mxu0 0
        %3793 = vmatpush1.bf16.msra.mxu0 %v3735
        %3794 = vmatprep.subr.bf16.mxu0 0
        %3795 = vmatpush1.bf16.msra.mxu0 %v3734
        %3796 = vmatprep.subr.bf16.mxu0 0
        %3797 = vmatpush1.bf16.msra.mxu0 %v3733
        %3798 = vmatprep.subr.bf16.mxu0 0
        %3799 = vmatpush1.bf16.msra.mxu0 %v3732
        %3800 = vmatprep.subr.bf16.mxu0 0
        %3801 = vmatpush1.bf16.msra.mxu0 %v3731
        %3802 = vmatprep.subr.bf16.mxu0 0
        %3803 = vmatpush1.bf16.msra.mxu0 %v3730
        %3804 = vmatprep.subr.bf16.mxu0 0
        %3805 = vmatpush1.bf16.msra.mxu0 %v3729
        %3806 = vmatprep.subr.bf16.mxu0 0
        %3807 = vmatpush1.bf16.msra.mxu0 %v3728
        %3808 = vmatprep.subr.bf16.mxu0 0
        %3809 = vmatpush2.bf16.msra.mxu0 %v3743
        %3810 = vmatprep.subr.bf16.mxu0 0
        %3811 = vmatpush2.bf16.msra.mxu0 %v3742
        %3812 = vmatprep.subr.bf16.mxu0 0
        %3813 = vmatpush2.bf16.msra.mxu0 %v3741
        %3814 = vmatprep.subr.bf16.mxu0 0
        %3815 = vmatpush2.bf16.msra.mxu0 %v3740
        %3816 = vmatprep.subr.bf16.mxu0 0
        %3817 = vmatpush2.bf16.msra.mxu0 %v3739
        %3818 = vmatprep.subr.bf16.mxu0 0
        %3819 = vmatpush2.bf16.msra.mxu0 %v3738
        %3820 = vmatprep.subr.bf16.mxu0 0
        %3821 = vmatpush2.bf16.msra.mxu0 %v3737
        %3822 = vmatprep.subr.bf16.mxu0 0
        %3823 = vmatpush2.bf16.msra.mxu0 %v3736
        %3824 = vmatprep.mubr.bf16.mxu0 %v3467
        %3825 = vmatmul.mubr.bf16.gmra.mxu0 %v3466
        %v3826 = vpop.f32.mrf.mxu0
        %v3827 = vadd.f32 %v3599, %v3826
        %v3828 = vpop.f32.mrf.mxu0
        %v3829 = vpop.f32.mrf.mxu0
        %v3830 = vadd.f32 %v3599, %v3829
        %v3831 = vpop.f32.mrf.mxu0
        %3832 = vmatprep.mubr.bf16.mxu0 %v3471
        %3833 = vmatmul.mubr.bf16.gmra.mxu0 %v3470
        %v3834 = vpop.f32.mrf.mxu0
        %v3835 = vadd.f32 %v3599, %v3834
        %v3836 = vpop.f32.mrf.mxu0
        %v3837 = vpop.f32.mrf.mxu0
        %v3838 = vadd.f32 %v3599, %v3837
        %v3839 = vpop.f32.mrf.mxu0
        %3840 = vmatprep.mubr.bf16.mxu0 %v3475
        %3841 = vmatmul.mubr.bf16.gmra.mxu0 %v3474
        %v3842 = vpop.f32.mrf.mxu0
        %v3843 = vadd.f32 %v3599, %v3842
        %v3844 = vpop.f32.mrf.mxu0
        %v3845 = vpop.f32.mrf.mxu0
        %v3846 = vadd.f32 %v3599, %v3845
        %v3847 = vpop.f32.mrf.mxu0
        %3848 = vmatprep.mubr.bf16.mxu0 %v3479
        %3849 = vmatmul.mubr.bf16.gmra.mxu0 %v3478
        %v3850 = vpop.f32.mrf.mxu0
        %v3851 = vadd.f32 %v3599, %v3850
        %v3852 = vpop.f32.mrf.mxu0
        %v3853 = vpop.f32.mrf.mxu0
        %v3854 = vadd.f32 %v3599, %v3853
        %v3855 = vpop.f32.mrf.mxu0
        %3856 = vmatprep.mubr.bf16.mxu0 %v3483
        %3857 = vmatmul.mubr.bf16.gmra.mxu0 %v3482
        %v3858 = vpop.f32.mrf.mxu0
        %v3859 = vadd.f32 %v3599, %v3858
        %v3860 = vpop.f32.mrf.mxu0
        %v3861 = vpop.f32.mrf.mxu0
        %v3862 = vadd.f32 %v3599, %v3861
        %v3863 = vpop.f32.mrf.mxu0
        %3864 = vmatprep.mubr.bf16.mxu0 %v3487
        %3865 = vmatmul.mubr.bf16.gmra.mxu0 %v3486
        %v3866 = vpop.f32.mrf.mxu0
        %v3867 = vadd.f32 %v3599, %v3866
        %v3868 = vpop.f32.mrf.mxu0
        %v3869 = vpop.f32.mrf.mxu0
        %v3870 = vadd.f32 %v3599, %v3869
        %v3871 = vpop.f32.mrf.mxu0
        %3872 = vmatprep.mubr.bf16.mxu0 %v3491
        %3873 = vmatmul.mubr.bf16.gmra.mxu0 %v3490
        %v3874 = vpop.f32.mrf.mxu0
        %v3875 = vadd.f32 %v3599, %v3874
        %v3876 = vpop.f32.mrf.mxu0
        %v3877 = vpop.f32.mrf.mxu0
        %v3878 = vadd.f32 %v3599, %v3877
        %v3879 = vpop.f32.mrf.mxu0
        %3880 = vmatprep.mubr.bf16.mxu0 %v3495
        %3881 = vmatmul.mubr.bf16.gmra.mxu0 %v3494
        %v3882 = vpop.f32.mrf.mxu0
        %v3883 = vadd.f32 %v3599, %v3882
        %v3884 = vpop.f32.mrf.mxu0
        %v3885 = vpop.f32.mrf.mxu0
        %v3886 = vadd.f32 %v3599, %v3885
        %v3887 = vpop.f32.mrf.mxu0
        %3888 = vmatprep.mubr.bf16.mxu0 %v3499
        %3889 = vmatmul.mubr.bf16.gmra.mxu0 %v3498
        %v3890 = vpop.f32.mrf.mxu0
        %v3891 = vadd.f32 %v3599, %v3890
        %v3892 = vpop.f32.mrf.mxu0
        %v3893 = vpop.f32.mrf.mxu0
        %v3894 = vadd.f32 %v3599, %v3893
        %v3895 = vpop.f32.mrf.mxu0
        %3896 = vmatprep.mubr.bf16.mxu0 %v3503
        %3897 = vmatmul.mubr.bf16.gmra.mxu0 %v3502
        %v3898 = vpop.f32.mrf.mxu0
        %v3899 = vadd.f32 %v3599, %v3898
        %v3900 = vpop.f32.mrf.mxu0
        %v3901 = vpop.f32.mrf.mxu0
        %v3902 = vadd.f32 %v3599, %v3901
        %v3903 = vpop.f32.mrf.mxu0
        %3904 = vmatprep.mubr.bf16.mxu0 %v3507
        %3905 = vmatmul.mubr.bf16.gmra.mxu0 %v3506
        %v3906 = vpop.f32.mrf.mxu0
        %v3907 = vadd.f32 %v3599, %v3906
        %v3908 = vpop.f32.mrf.mxu0
        %v3909 = vpop.f32.mrf.mxu0
        %v3910 = vadd.f32 %v3599, %v3909
        %v3911 = vpop.f32.mrf.mxu0
        %3912 = vmatprep.mubr.bf16.mxu0 %v3511
        %3913 = vmatmul.mubr.bf16.gmra.mxu0 %v3510
        %v3914 = vpop.f32.mrf.mxu0
        %v3915 = vadd.f32 %v3599, %v3914
        %v3916 = vpop.f32.mrf.mxu0
        %v3917 = vpop.f32.mrf.mxu0
        %v3918 = vadd.f32 %v3599, %v3917
        %v3919 = vpop.f32.mrf.mxu0
        %3920 = vmatprep.mubr.bf16.mxu0 %v3515
        %3921 = vmatmul.mubr.bf16.gmra.mxu0 %v3514
        %v3922 = vpop.f32.mrf.mxu0
        %v3923 = vadd.f32 %v3599, %v3922
        %v3924 = vpop.f32.mrf.mxu0
        %v3925 = vpop.f32.mrf.mxu0
        %v3926 = vadd.f32 %v3599, %v3925
        %v3927 = vpop.f32.mrf.mxu0
        %3928 = vmatprep.mubr.bf16.mxu0 %v3519
        %3929 = vmatmul.mubr.bf16.gmra.mxu0 %v3518
        %v3930 = vpop.f32.mrf.mxu0
        %v3931 = vadd.f32 %v3599, %v3930
        %v3932 = vpop.f32.mrf.mxu0
        %v3933 = vpop.f32.mrf.mxu0
        %v3934 = vadd.f32 %v3599, %v3933
        %v3935 = vpop.f32.mrf.mxu0
        %3936 = vmatprep.mubr.bf16.mxu0 %v3523
        %3937 = vmatmul.mubr.bf16.gmra.mxu0 %v3522
        %v3938 = vpop.f32.mrf.mxu0
        %v3939 = vadd.f32 %v3599, %v3938
        %v3940 = vpop.f32.mrf.mxu0
        %v3941 = vpop.f32.mrf.mxu0
        %v3942 = vadd.f32 %v3599, %v3941
        %v3943 = vpop.f32.mrf.mxu0
        %3944 = vmatprep.mubr.bf16.mxu0 %v3527
        %3945 = vmatmul.mubr.bf16.gmra.mxu0 %v3526
        %v3946 = vpop.f32.mrf.mxu0
        %v3947 = vadd.f32 %v3599, %v3946
        %v3948 = vpop.f32.mrf.mxu0
        %v3949 = vpop.f32.mrf.mxu0
        %v3950 = vadd.f32 %v3599, %v3949
        %v3951 = vpop.f32.mrf.mxu0
        %3952 = vdwg.mxu0
        %3953 = vmatprep.subr.bf16.mxu0 0
        %3954 = vmatpush1.bf16.msra.mxu0 %v3751
        %3955 = vmatprep.subr.bf16.mxu0 0
        %3956 = vmatpush1.bf16.msra.mxu0 %v3750
        %3957 = vmatprep.subr.bf16.mxu0 0
        %3958 = vmatpush1.bf16.msra.mxu0 %v3749
        %3959 = vmatprep.subr.bf16.mxu0 0
        %3960 = vmatpush1.bf16.msra.mxu0 %v3748
        %3961 = vmatprep.subr.bf16.mxu0 0
        %3962 = vmatpush1.bf16.msra.mxu0 %v3747
        %3963 = vmatprep.subr.bf16.mxu0 0
        %3964 = vmatpush1.bf16.msra.mxu0 %v3746
        %3965 = vmatprep.subr.bf16.mxu0 0
        %3966 = vmatpush1.bf16.msra.mxu0 %v3745
        %3967 = vmatprep.subr.bf16.mxu0 0
        %3968 = vmatpush1.bf16.msra.mxu0 %v3744
        %3969 = vmatprep.subr.bf16.mxu0 0
        %3970 = vmatpush2.bf16.msra.mxu0 %v3759
        %3971 = vmatprep.subr.bf16.mxu0 0
        %3972 = vmatpush2.bf16.msra.mxu0 %v3758
        %3973 = vmatprep.subr.bf16.mxu0 0
        %3974 = vmatpush2.bf16.msra.mxu0 %v3757
        %3975 = vmatprep.subr.bf16.mxu0 0
        %3976 = vmatpush2.bf16.msra.mxu0 %v3756
        %3977 = vmatprep.subr.bf16.mxu0 0
        %3978 = vmatpush2.bf16.msra.mxu0 %v3755
        %3979 = vmatprep.subr.bf16.mxu0 0
        %3980 = vmatpush2.bf16.msra.mxu0 %v3754
        %3981 = vmatprep.subr.bf16.mxu0 0
        %3982 = vmatpush2.bf16.msra.mxu0 %v3753
        %3983 = vmatprep.subr.bf16.mxu0 0
        %3984 = vmatpush2.bf16.msra.mxu0 %v3752
        %3985 = vmatprep.mubr.bf16.mxu0 %v3469
        %3986 = vmatmul.mubr.bf16.gmra.mxu0 %v3468
        %v3987 = vpop.f32.mrf.mxu0
        %v3988 = vadd.f32 %v3827, %v3987
        %v3989 = vpop.f32.mrf.mxu0
        %v3990 = vpop.f32.mrf.mxu0
        %v3991 = vadd.f32 %v3830, %v3990
        %v3992 = vpop.f32.mrf.mxu0
        %3993 = vmatprep.mubr.bf16.mxu0 %v3473
        %3994 = vmatmul.mubr.bf16.gmra.mxu0 %v3472
        %v3995 = vpop.f32.mrf.mxu0
        %v3996 = vadd.f32 %v3835, %v3995
        %v3997 = vpop.f32.mrf.mxu0
        %v3998 = vpop.f32.mrf.mxu0
        %v3999 = vadd.f32 %v3838, %v3998
        %v4000 = vpop.f32.mrf.mxu0
        %4001 = vmatprep.mubr.bf16.mxu0 %v3477
        %4002 = vmatmul.mubr.bf16.gmra.mxu0 %v3476
        %v4003 = vpop.f32.mrf.mxu0
        %v4004 = vadd.f32 %v3843, %v4003
        %v4005 = vpop.f32.mrf.mxu0
        %v4006 = vpop.f32.mrf.mxu0
        %v4007 = vadd.f32 %v3846, %v4006
        %v4008 = vpop.f32.mrf.mxu0
        %4009 = vmatprep.mubr.bf16.mxu0 %v3481
        %4010 = vmatmul.mubr.bf16.gmra.mxu0 %v3480
        %v4011 = vpop.f32.mrf.mxu0
        %v4012 = vadd.f32 %v3851, %v4011
        %v4013 = vpop.f32.mrf.mxu0
        %v4014 = vpop.f32.mrf.mxu0
        %v4015 = vadd.f32 %v3854, %v4014
        %v4016 = vpop.f32.mrf.mxu0
        %4017 = vmatprep.mubr.bf16.mxu0 %v3485
        %4018 = vmatmul.mubr.bf16.gmra.mxu0 %v3484
        %v4019 = vpop.f32.mrf.mxu0
        %v4020 = vadd.f32 %v3859, %v4019
        %v4021 = vpop.f32.mrf.mxu0
        %v4022 = vpop.f32.mrf.mxu0
        %v4023 = vadd.f32 %v3862, %v4022
        %v4024 = vpop.f32.mrf.mxu0
        %4025 = vmatprep.mubr.bf16.mxu0 %v3489
        %4026 = vmatmul.mubr.bf16.gmra.mxu0 %v3488
        %v4027 = vpop.f32.mrf.mxu0
        %v4028 = vadd.f32 %v3867, %v4027
        %v4029 = vpop.f32.mrf.mxu0
        %v4030 = vpop.f32.mrf.mxu0
        %v4031 = vadd.f32 %v3870, %v4030
        %v4032 = vpop.f32.mrf.mxu0
        %4033 = vmatprep.mubr.bf16.mxu0 %v3493
        %4034 = vmatmul.mubr.bf16.gmra.mxu0 %v3492
        %v4035 = vpop.f32.mrf.mxu0
        %v4036 = vadd.f32 %v3875, %v4035
        %v4037 = vpop.f32.mrf.mxu0
        %v4038 = vpop.f32.mrf.mxu0
        %v4039 = vadd.f32 %v3878, %v4038
        %v4040 = vpop.f32.mrf.mxu0
        %4041 = vmatprep.mubr.bf16.mxu0 %v3497
        %4042 = vmatmul.mubr.bf16.gmra.mxu0 %v3496
        %v4043 = vpop.f32.mrf.mxu0
        %v4044 = vadd.f32 %v3883, %v4043
        %v4045 = vpop.f32.mrf.mxu0
        %v4046 = vpop.f32.mrf.mxu0
        %v4047 = vadd.f32 %v3886, %v4046
        %v4048 = vpop.f32.mrf.mxu0
        %4049 = vmatprep.mubr.bf16.mxu0 %v3501
        %4050 = vmatmul.mubr.bf16.gmra.mxu0 %v3500
        %v4051 = vpop.f32.mrf.mxu0
        %v4052 = vadd.f32 %v3891, %v4051
        %v4053 = vpop.f32.mrf.mxu0
        %v4054 = vpop.f32.mrf.mxu0
        %v4055 = vadd.f32 %v3894, %v4054
        %v4056 = vpop.f32.mrf.mxu0
        %4057 = vmatprep.mubr.bf16.mxu0 %v3505
        %4058 = vmatmul.mubr.bf16.gmra.mxu0 %v3504
        %v4059 = vpop.f32.mrf.mxu0
        %v4060 = vadd.f32 %v3899, %v4059
        %v4061 = vpop.f32.mrf.mxu0
        %v4062 = vpop.f32.mrf.mxu0
        %v4063 = vadd.f32 %v3902, %v4062
        %v4064 = vpop.f32.mrf.mxu0
        %4065 = vmatprep.mubr.bf16.mxu0 %v3509
        %4066 = vmatmul.mubr.bf16.gmra.mxu0 %v3508
        %v4067 = vpop.f32.mrf.mxu0
        %v4068 = vadd.f32 %v3907, %v4067
        %v4069 = vpop.f32.mrf.mxu0
        %v4070 = vpop.f32.mrf.mxu0
        %v4071 = vadd.f32 %v3910, %v4070
        %v4072 = vpop.f32.mrf.mxu0
        %4073 = vmatprep.mubr.bf16.mxu0 %v3513
        %4074 = vmatmul.mubr.bf16.gmra.mxu0 %v3512
        %v4075 = vpop.f32.mrf.mxu0
        %v4076 = vadd.f32 %v3915, %v4075
        %v4077 = vpop.f32.mrf.mxu0
        %v4078 = vpop.f32.mrf.mxu0
        %v4079 = vadd.f32 %v3918, %v4078
        %v4080 = vpop.f32.mrf.mxu0
        %4081 = vmatprep.mubr.bf16.mxu0 %v3517
        %4082 = vmatmul.mubr.bf16.gmra.mxu0 %v3516
        %v4083 = vpop.f32.mrf.mxu0
        %v4084 = vadd.f32 %v3923, %v4083
        %v4085 = vpop.f32.mrf.mxu0
        %v4086 = vpop.f32.mrf.mxu0
        %v4087 = vadd.f32 %v3926, %v4086
        %v4088 = vpop.f32.mrf.mxu0
        %4089 = vmatprep.mubr.bf16.mxu0 %v3521
        %4090 = vmatmul.mubr.bf16.gmra.mxu0 %v3520
        %v4091 = vpop.f32.mrf.mxu0
        %v4092 = vadd.f32 %v3931, %v4091
        %v4093 = vpop.f32.mrf.mxu0
        %v4094 = vpop.f32.mrf.mxu0
        %v4095 = vadd.f32 %v3934, %v4094
        %v4096 = vpop.f32.mrf.mxu0
        %4097 = vmatprep.mubr.bf16.mxu0 %v3525
        %4098 = vmatmul.mubr.bf16.gmra.mxu0 %v3524
        %v4099 = vpop.f32.mrf.mxu0
        %v4100 = vadd.f32 %v3939, %v4099
        %v4101 = vpop.f32.mrf.mxu0
        %v4102 = vpop.f32.mrf.mxu0
        %v4103 = vadd.f32 %v3942, %v4102
        %v4104 = vpop.f32.mrf.mxu0
        %4105 = vmatprep.mubr.bf16.mxu0 %v3529
        %4106 = vmatmul.mubr.bf16.gmra.mxu0 %v3528
        %v4107 = vpop.f32.mrf.mxu0
        %v4108 = vadd.f32 %v3947, %v4107
        %v4109 = vpop.f32.mrf.mxu0
        %v4110 = vpop.f32.mrf.mxu0
        %v4111 = vadd.f32 %v3950, %v4110
        %v4112 = vpop.f32.mrf.mxu0
        %4113 = vdwg.mxu0
        %s4114 = scalar_lea.vmem %s338, 256 [#allocation13]
        %4115 = vst [vmem:[%s4114] sm:$0xff] %v3988
        %4116 = vst [vmem:[%s4114 + $0x8] sm:$0xff] %v3991
        %4117 = vst [vmem:[%s4114 + $0x10] sm:$0xff] %v3996
        %4118 = vst [vmem:[%s4114 + $0x18] sm:$0xff] %v3999
        %4119 = vst [vmem:[%s4114 + $0x20] sm:$0xff] %v4004
        %4120 = vst [vmem:[%s4114 + $0x28] sm:$0xff] %v4007
        %4121 = vst [vmem:[%s4114 + $0x30] sm:$0xff] %v4012
        %4122 = vst [vmem:[%s4114 + $0x38] sm:$0xff] %v4015
        %4123 = vst [vmem:[%s4114 + $0x40] sm:$0xff] %v4020
        %4124 = vst [vmem:[%s4114 + $0x48] sm:$0xff] %v4023
        %4125 = vst [vmem:[%s4114 + $0x50] sm:$0xff] %v4028
        %4126 = vst [vmem:[%s4114 + $0x58] sm:$0xff] %v4031
        %4127 = vst [vmem:[%s4114 + $0x60] sm:$0xff] %v4036
        %4128 = vst [vmem:[%s4114 + $0x68] sm:$0xff] %v4039
        %4129 = vst [vmem:[%s4114 + $0x70] sm:$0xff] %v4044
        %4130 = vst [vmem:[%s4114 + $0x78] sm:$0xff] %v4047
        %4131 = vst [vmem:[%s4114 + $0x80] sm:$0xff] %v4052
        %4132 = vst [vmem:[%s4114 + $0x88] sm:$0xff] %v4055
        %4133 = vst [vmem:[%s4114 + $0x90] sm:$0xff] %v4060
        %4134 = vst [vmem:[%s4114 + $0x98] sm:$0xff] %v4063
        %4135 = vst [vmem:[%s4114 + $0xa0] sm:$0xff] %v4068
        %4136 = vst [vmem:[%s4114 + $0xa8] sm:$0xff] %v4071
        %4137 = vst [vmem:[%s4114 + $0xb0] sm:$0xff] %v4076
        %4138 = vst [vmem:[%s4114 + $0xb8] sm:$0xff] %v4079
        %4139 = vst [vmem:[%s4114 + $0xc0] sm:$0xff] %v4084
        %4140 = vst [vmem:[%s4114 + $0xc8] sm:$0xff] %v4087
        %4141 = vst [vmem:[%s4114 + $0xd0] sm:$0xff] %v4092
        %4142 = vst [vmem:[%s4114 + $0xd8] sm:$0xff] %v4095
        %4143 = vst [vmem:[%s4114 + $0xe0] sm:$0xff] %v4100
        %4144 = vst [vmem:[%s4114 + $0xe8] sm:$0xff] %v4103
        %4145 = vst [vmem:[%s4114 + $0xf0] sm:$0xff] %v4108
        %4146 = vst [vmem:[%s4114 + $0xf8] sm:$0xff] %v4111
        %s4147 = scalar_lea.vmem [#allocation5], 256
        %v4148 = vld [vmem:[%s4147] sm:$0xf]
        %v4149 = vld [vmem:[%s4147 + $0x4] sm:$0xf]
        %v4150 = vld [vmem:[%s4147 + $0x8] sm:$0xf]
        %v4151 = vld [vmem:[%s4147 + $0xc] sm:$0xf]
        %v4152 = vld [vmem:[%s4147 + $0x10] sm:$0xf]
        %v4153 = vld [vmem:[%s4147 + $0x14] sm:$0xf]
        %v4154 = vld [vmem:[%s4147 + $0x18] sm:$0xf]
        %v4155 = vld [vmem:[%s4147 + $0x1c] sm:$0xf]
        %v4156 = vld [vmem:[%s4147 + $0x20] sm:$0xf]
        %v4157 = vld [vmem:[%s4147 + $0x24] sm:$0xf]
        %v4158 = vld [vmem:[%s4147 + $0x28] sm:$0xf]
        %v4159 = vld [vmem:[%s4147 + $0x2c] sm:$0xf]
        %v4160 = vld [vmem:[%s4147 + $0x30] sm:$0xf]
        %v4161 = vld [vmem:[%s4147 + $0x34] sm:$0xf]
        %v4162 = vld [vmem:[%s4147 + $0x38] sm:$0xf]
        %v4163 = vld [vmem:[%s4147 + $0x3c] sm:$0xf]
        %v4164 = vld [vmem:[#allocation7 + $0x6] sm:$0x1]
        %v4165 = vlaneseq
        %v4166 = vshrl.u32 %v4165, 7
        %v4167 = vsub.s32 0, %v4166
        %v4168 = vrot.slane %v4164, %v4167
        %v4185 = vunpack.c.l.b16 %v4148
        %v4186 = vunpack.c.l.b16 %v4149
        %v4187 = vunpack.c.l.b16 %v4150
        %v4188 = vunpack.c.l.b16 %v4151
        %v4189 = vunpack.c.l.b16 %v4152
        %v4190 = vunpack.c.l.b16 %v4153
        %v4191 = vunpack.c.l.b16 %v4154
        %v4192 = vunpack.c.l.b16 %v4155
        %v4193 = vunpack.c.l.b16 %v4156
        %v4194 = vunpack.c.l.b16 %v4157
        %v4195 = vunpack.c.l.b16 %v4158
        %v4196 = vunpack.c.l.b16 %v4159
        %v4197 = vunpack.c.l.b16 %v4160
        %v4198 = vunpack.c.l.b16 %v4161
        %v4199 = vunpack.c.l.b16 %v4162
        %v4200 = vunpack.c.l.b16 %v4163
        %v4201 = vpack.c.b16 %v4186, %v4185
        %v4202 = vpack.c.b16 %v4188, %v4187
        %v4203 = vpack.c.b16 %v4190, %v4189
        %v4204 = vpack.c.b16 %v4192, %v4191
        %v4205 = vpack.c.b16 %v4194, %v4193
        %v4206 = vpack.c.b16 %v4196, %v4195
        %v4207 = vpack.c.b16 %v4198, %v4197
        %v4208 = vpack.c.b16 %v4200, %v4199
        %4217 = vmatprep.subr.bf16.mxu0 0
        %4218 = vmatpush1.bf16.msra.mxu0 %v4208
        %4219 = vmatprep.subr.bf16.mxu0 0
        %4220 = vmatpush1.bf16.msra.mxu0 %v4207
        %4221 = vmatprep.subr.bf16.mxu0 0
        %4222 = vmatpush1.bf16.msra.mxu0 %v4206
        %4223 = vmatprep.subr.bf16.mxu0 0
        %4224 = vmatpush1.bf16.msra.mxu0 %v4205
        %4225 = vmatprep.subr.bf16.mxu0 0
        %4226 = vmatpush1.bf16.msra.mxu0 %v4204
        %4227 = vmatprep.subr.bf16.mxu0 0
        %4228 = vmatpush1.bf16.msra.mxu0 %v4203
        %4229 = vmatprep.subr.bf16.mxu0 0
        %4230 = vmatpush1.bf16.msra.mxu0 %v4202
        %4231 = vmatprep.subr.bf16.mxu0 0
        %4232 = vmatpush1.bf16.msra.mxu0 %v4201
        %4233 = vmatprep.subr.bf16.mxu0 0
        %4234 = vmatpush2.bf16.msra.mxu0 0
        %4235 = vmatprep.subr.bf16.mxu0 0
        %4236 = vmatpush2.bf16.msra.mxu0 0
        %4237 = vmatprep.subr.bf16.mxu0 0
        %4238 = vmatpush2.bf16.msra.mxu0 0
        %4239 = vmatprep.subr.bf16.mxu0 0
        %4240 = vmatpush2.bf16.msra.mxu0 0
        %4241 = vmatprep.subr.bf16.mxu0 0
        %4242 = vmatpush2.bf16.msra.mxu0 0
        %4243 = vmatprep.subr.bf16.mxu0 0
        %4244 = vmatpush2.bf16.msra.mxu0 0
        %4245 = vmatprep.subr.bf16.mxu0 0
        %4246 = vmatpush2.bf16.msra.mxu0 0
        %4247 = vmatprep.subr.bf16.mxu0 0
        %4248 = vmatpush2.bf16.msra.mxu0 0
        %4249 = vmatprep.mubr.bf16.mxu0 0
        %4250 = vmatmul.mubr.bf16.gmra.mxu0 %v2848
        %v4251 = vpop.f32.mrf.mxu0
        %v4252 = vadd.f32 %v4168, %v4251
        %v4253 = vpop.f32.mrf.mxu0
        %v4254 = vpop.f32.mrf.mxu0
        %v4255 = vadd.f32 %v4168, %v4254
        %v4256 = vpop.f32.mrf.mxu0
        %4257 = vmatprep.mubr.bf16.mxu0 0
        %4258 = vmatmul.mubr.bf16.gmra.mxu0 %v2849
        %v4259 = vpop.f32.mrf.mxu0
        %v4260 = vadd.f32 %v4168, %v4259
        %v4261 = vpop.f32.mrf.mxu0
        %v4262 = vpop.f32.mrf.mxu0
        %v4263 = vadd.f32 %v4168, %v4262
        %v4264 = vpop.f32.mrf.mxu0
        %4265 = vmatprep.mubr.bf16.mxu0 0
        %4266 = vmatmul.mubr.bf16.gmra.mxu0 %v2850
        %v4267 = vpop.f32.mrf.mxu0
        %v4268 = vadd.f32 %v4168, %v4267
        %v4269 = vpop.f32.mrf.mxu0
        %v4270 = vpop.f32.mrf.mxu0
        %v4271 = vadd.f32 %v4168, %v4270
        %v4272 = vpop.f32.mrf.mxu0
        %4273 = vmatprep.mubr.bf16.mxu0 0
        %4274 = vmatmul.mubr.bf16.gmra.mxu0 %v2851
        %v4275 = vpop.f32.mrf.mxu0
        %v4276 = vadd.f32 %v4168, %v4275
        %v4277 = vpop.f32.mrf.mxu0
        %v4278 = vpop.f32.mrf.mxu0
        %v4279 = vadd.f32 %v4168, %v4278
        %v4280 = vpop.f32.mrf.mxu0
        %4281 = vmatprep.mubr.bf16.mxu0 0
        %4282 = vmatmul.mubr.bf16.gmra.mxu0 %v2852
        %v4283 = vpop.f32.mrf.mxu0
        %v4284 = vadd.f32 %v4168, %v4283
        %v4285 = vpop.f32.mrf.mxu0
        %v4286 = vpop.f32.mrf.mxu0
        %v4287 = vadd.f32 %v4168, %v4286
        %v4288 = vpop.f32.mrf.mxu0
        %4289 = vmatprep.mubr.bf16.mxu0 0
        %4290 = vmatmul.mubr.bf16.gmra.mxu0 %v2853
        %v4291 = vpop.f32.mrf.mxu0
        %v4292 = vadd.f32 %v4168, %v4291
        %v4293 = vpop.f32.mrf.mxu0
        %v4294 = vpop.f32.mrf.mxu0
        %v4295 = vadd.f32 %v4168, %v4294
        %v4296 = vpop.f32.mrf.mxu0
        %4297 = vmatprep.mubr.bf16.mxu0 0
        %4298 = vmatmul.mubr.bf16.gmra.mxu0 %v2854
        %v4299 = vpop.f32.mrf.mxu0
        %v4300 = vadd.f32 %v4168, %v4299
        %v4301 = vpop.f32.mrf.mxu0
        %v4302 = vpop.f32.mrf.mxu0
        %v4303 = vadd.f32 %v4168, %v4302
        %v4304 = vpop.f32.mrf.mxu0
        %4305 = vmatprep.mubr.bf16.mxu0 0
        %4306 = vmatmul.mubr.bf16.gmra.mxu0 %v2855
        %v4307 = vpop.f32.mrf.mxu0
        %v4308 = vadd.f32 %v4168, %v4307
        %v4309 = vpop.f32.mrf.mxu0
        %v4310 = vpop.f32.mrf.mxu0
        %v4311 = vadd.f32 %v4168, %v4310
        %v4312 = vpop.f32.mrf.mxu0
        %4313 = vmatprep.mubr.bf16.mxu0 0
        %4314 = vmatmul.mubr.bf16.gmra.mxu0 %v2856
        %v4315 = vpop.f32.mrf.mxu0
        %v4316 = vadd.f32 %v4168, %v4315
        %v4317 = vpop.f32.mrf.mxu0
        %v4318 = vpop.f32.mrf.mxu0
        %v4319 = vadd.f32 %v4168, %v4318
        %v4320 = vpop.f32.mrf.mxu0
        %4321 = vmatprep.mubr.bf16.mxu0 0
        %4322 = vmatmul.mubr.bf16.gmra.mxu0 %v2857
        %v4323 = vpop.f32.mrf.mxu0
        %v4324 = vadd.f32 %v4168, %v4323
        %v4325 = vpop.f32.mrf.mxu0
        %v4326 = vpop.f32.mrf.mxu0
        %v4327 = vadd.f32 %v4168, %v4326
        %v4328 = vpop.f32.mrf.mxu0
        %4329 = vmatprep.mubr.bf16.mxu0 0
        %4330 = vmatmul.mubr.bf16.gmra.mxu0 %v2858
        %v4331 = vpop.f32.mrf.mxu0
        %v4332 = vadd.f32 %v4168, %v4331
        %v4333 = vpop.f32.mrf.mxu0
        %v4334 = vpop.f32.mrf.mxu0
        %v4335 = vadd.f32 %v4168, %v4334
        %v4336 = vpop.f32.mrf.mxu0
        %4337 = vmatprep.mubr.bf16.mxu0 0
        %4338 = vmatmul.mubr.bf16.gmra.mxu0 %v2859
        %v4339 = vpop.f32.mrf.mxu0
        %v4340 = vadd.f32 %v4168, %v4339
        %v4341 = vpop.f32.mrf.mxu0
        %v4342 = vpop.f32.mrf.mxu0
        %v4343 = vadd.f32 %v4168, %v4342
        %v4344 = vpop.f32.mrf.mxu0
        %4345 = vmatprep.mubr.bf16.mxu0 0
        %4346 = vmatmul.mubr.bf16.gmra.mxu0 %v2860
        %v4347 = vpop.f32.mrf.mxu0
        %v4348 = vadd.f32 %v4168, %v4347
        %v4349 = vpop.f32.mrf.mxu0
        %v4350 = vpop.f32.mrf.mxu0
        %v4351 = vadd.f32 %v4168, %v4350
        %v4352 = vpop.f32.mrf.mxu0
        %4353 = vmatprep.mubr.bf16.mxu0 0
        %4354 = vmatmul.mubr.bf16.gmra.mxu0 %v2861
        %v4355 = vpop.f32.mrf.mxu0
        %v4356 = vadd.f32 %v4168, %v4355
        %v4357 = vpop.f32.mrf.mxu0
        %v4358 = vpop.f32.mrf.mxu0
        %v4359 = vadd.f32 %v4168, %v4358
        %v4360 = vpop.f32.mrf.mxu0
        %4361 = vmatprep.mubr.bf16.mxu0 0
        %4362 = vmatmul.mubr.bf16.gmra.mxu0 %v2862
        %v4363 = vpop.f32.mrf.mxu0
        %v4364 = vadd.f32 %v4168, %v4363
        %v4365 = vpop.f32.mrf.mxu0
        %v4366 = vpop.f32.mrf.mxu0
        %v4367 = vadd.f32 %v4168, %v4366
        %v4368 = vpop.f32.mrf.mxu0
        %4369 = vmatprep.mubr.bf16.mxu0 0
        %4370 = vmatmul.mubr.bf16.gmra.mxu0 %v2863
        %v4371 = vpop.f32.mrf.mxu0
        %v4372 = vadd.f32 %v4168, %v4371
        %v4373 = vpop.f32.mrf.mxu0
        %v4374 = vpop.f32.mrf.mxu0
        %v4375 = vadd.f32 %v4168, %v4374
        %v4376 = vpop.f32.mrf.mxu0
        %4377 = vdwg.mxu0
        %v4378 = vpack.c.bf16 %v4255, %v4252
        %v4379 = vpack.c.bf16 %v4263, %v4260
        %v4380 = vpack.c.bf16 %v4271, %v4268
        %v4381 = vpack.c.bf16 %v4279, %v4276
        %v4382 = vpack.c.bf16 %v4287, %v4284
        %v4383 = vpack.c.bf16 %v4295, %v4292
        %v4384 = vpack.c.bf16 %v4303, %v4300
        %v4385 = vpack.c.bf16 %v4311, %v4308
        %v4386 = vpack.c.bf16 %v4319, %v4316
        %v4387 = vpack.c.bf16 %v4327, %v4324
        %v4388 = vpack.c.bf16 %v4335, %v4332
        %v4389 = vpack.c.bf16 %v4343, %v4340
        %v4390 = vpack.c.bf16 %v4351, %v4348
        %v4391 = vpack.c.bf16 %v4359, %v4356
        %v4392 = vpack.c.bf16 %v4367, %v4364
        %v4393 = vpack.c.bf16 %v4375, %v4372
        %s4394 = scalar_lea.vmem [#allocation8], 512
        %v4395 = vld [vmem:[%s4394] sm:$0xff]
        %v4396 = vld [vmem:[%s4394 + $0x8] sm:$0xff]
        %v4397 = vld [vmem:[%s4394 + $0x10] sm:$0xff]
        %v4398 = vld [vmem:[%s4394 + $0x18] sm:$0xff]
        %v4399 = vld [vmem:[%s4394 + $0x20] sm:$0xff]
        %v4400 = vld [vmem:[%s4394 + $0x28] sm:$0xff]
        %v4401 = vld [vmem:[%s4394 + $0x30] sm:$0xff]
        %v4402 = vld [vmem:[%s4394 + $0x38] sm:$0xff]
        %v4403 = vld [vmem:[%s4394 + $0x40] sm:$0xff]
        %v4404 = vld [vmem:[%s4394 + $0x48] sm:$0xff]
        %v4405 = vld [vmem:[%s4394 + $0x50] sm:$0xff]
        %v4406 = vld [vmem:[%s4394 + $0x58] sm:$0xff]
        %v4407 = vld [vmem:[%s4394 + $0x60] sm:$0xff]
        %v4408 = vld [vmem:[%s4394 + $0x68] sm:$0xff]
        %v4409 = vld [vmem:[%s4394 + $0x70] sm:$0xff]
        %v4410 = vld [vmem:[%s4394 + $0x78] sm:$0xff]
        %v4411 = vld [vmem:[%s4394 + $0x80] sm:$0xff]
        %v4412 = vld [vmem:[%s4394 + $0x88] sm:$0xff]
        %v4413 = vld [vmem:[%s4394 + $0x90] sm:$0xff]
        %v4414 = vld [vmem:[%s4394 + $0x98] sm:$0xff]
        %v4415 = vld [vmem:[%s4394 + $0xa0] sm:$0xff]
        %v4416 = vld [vmem:[%s4394 + $0xa8] sm:$0xff]
        %v4417 = vld [vmem:[%s4394 + $0xb0] sm:$0xff]
        %v4418 = vld [vmem:[%s4394 + $0xb8] sm:$0xff]
        %v4419 = vld [vmem:[%s4394 + $0xc0] sm:$0xff]
        %v4420 = vld [vmem:[%s4394 + $0xc8] sm:$0xff]
        %v4421 = vld [vmem:[%s4394 + $0xd0] sm:$0xff]
        %v4422 = vld [vmem:[%s4394 + $0xd8] sm:$0xff]
        %v4423 = vld [vmem:[%s4394 + $0xe0] sm:$0xff]
        %v4424 = vld [vmem:[%s4394 + $0xe8] sm:$0xff]
        %v4425 = vld [vmem:[%s4394 + $0xf0] sm:$0xff]
        %v4426 = vld [vmem:[%s4394 + $0xf8] sm:$0xff]
        %s4427 = scalar_lea.vmem [#allocation10], 2
        %v4428 = vld [vmem:[%s4427] ss:$4 sm:$0xf]
        %v4430 = vlaneseq
        %v4431 = vshrl.u32 %v4430, 7
        %v4432 = vsub.s32 0, %v4431
        %v4433 = vrot.slane %v4428, %v4432
        %v4434 = vlaneseq
        %v4435 = vshrl.u32 %v4434, 7
        %v4436 = vsub.s32 1, %v4435
        %v4437 = vrot.slane %v4428, %v4436
        %v4438 = vlaneseq
        %v4439 = vshrl.u32 %v4438, 7
        %v4440 = vsub.s32 2, %v4439
        %v4441 = vrot.slane %v4428, %v4440
        %v4442 = vlaneseq
        %v4443 = vshrl.u32 %v4442, 7
        %v4444 = vsub.s32 3, %v4443
        %v4445 = vrot.slane %v4428, %v4444
        %v4482 = vunpack.c.l.b16 %v4395
        %v4483 = vunpack.c.h.b16 %v4395
        %v4484 = vunpack.c.l.b16 %v4396
        %v4485 = vunpack.c.h.b16 %v4396
        %v4486 = vunpack.c.l.b16 %v4397
        %v4487 = vunpack.c.h.b16 %v4397
        %v4488 = vunpack.c.l.b16 %v4398
        %v4489 = vunpack.c.h.b16 %v4398
        %v4490 = vunpack.c.l.b16 %v4399
        %v4491 = vunpack.c.h.b16 %v4399
        %v4492 = vunpack.c.l.b16 %v4400
        %v4493 = vunpack.c.h.b16 %v4400
        %v4494 = vunpack.c.l.b16 %v4401
        %v4495 = vunpack.c.h.b16 %v4401
        %v4496 = vunpack.c.l.b16 %v4402
        %v4497 = vunpack.c.h.b16 %v4402
        %v4498 = vunpack.c.l.b16 %v4403
        %v4499 = vunpack.c.h.b16 %v4403
        %v4500 = vunpack.c.l.b16 %v4404
        %v4501 = vunpack.c.h.b16 %v4404
        %v4502 = vunpack.c.l.b16 %v4405
        %v4503 = vunpack.c.h.b16 %v4405
        %v4504 = vunpack.c.l.b16 %v4406
        %v4505 = vunpack.c.h.b16 %v4406
        %v4506 = vunpack.c.l.b16 %v4407
        %v4507 = vunpack.c.h.b16 %v4407
        %v4508 = vunpack.c.l.b16 %v4408
        %v4509 = vunpack.c.h.b16 %v4408
        %v4510 = vunpack.c.l.b16 %v4409
        %v4511 = vunpack.c.h.b16 %v4409
        %v4512 = vunpack.c.l.b16 %v4410
        %v4513 = vunpack.c.h.b16 %v4410
        %v4514 = vunpack.c.l.b16 %v4411
        %v4515 = vunpack.c.h.b16 %v4411
        %v4516 = vunpack.c.l.b16 %v4412
        %v4517 = vunpack.c.h.b16 %v4412
        %v4518 = vunpack.c.l.b16 %v4413
        %v4519 = vunpack.c.h.b16 %v4413
        %v4520 = vunpack.c.l.b16 %v4414
        %v4521 = vunpack.c.h.b16 %v4414
        %v4522 = vunpack.c.l.b16 %v4415
        %v4523 = vunpack.c.h.b16 %v4415
        %v4524 = vunpack.c.l.b16 %v4416
        %v4525 = vunpack.c.h.b16 %v4416
        %v4526 = vunpack.c.l.b16 %v4417
        %v4527 = vunpack.c.h.b16 %v4417
        %v4528 = vunpack.c.l.b16 %v4418
        %v4529 = vunpack.c.h.b16 %v4418
        %v4530 = vunpack.c.l.b16 %v4419
        %v4531 = vunpack.c.h.b16 %v4419
        %v4532 = vunpack.c.l.b16 %v4420
        %v4533 = vunpack.c.h.b16 %v4420
        %v4534 = vunpack.c.l.b16 %v4421
        %v4535 = vunpack.c.h.b16 %v4421
        %v4536 = vunpack.c.l.b16 %v4422
        %v4537 = vunpack.c.h.b16 %v4422
        %v4538 = vunpack.c.l.b16 %v4423
        %v4539 = vunpack.c.h.b16 %v4423
        %v4540 = vunpack.c.l.b16 %v4424
        %v4541 = vunpack.c.h.b16 %v4424
        %v4542 = vunpack.c.l.b16 %v4425
        %v4543 = vunpack.c.h.b16 %v4425
        %v4544 = vunpack.c.l.b16 %v4426
        %v4545 = vunpack.c.h.b16 %v4426
        %v4546 = vpack.c.b16 %v4486, %v4482
        %v4547 = vpack.c.b16 %v4487, %v4483
        %v4548 = vpack.c.b16 %v4488, %v4484
        %v4549 = vpack.c.b16 %v4489, %v4485
        %v4550 = vpack.c.b16 %v4494, %v4490
        %v4551 = vpack.c.b16 %v4495, %v4491
        %v4552 = vpack.c.b16 %v4496, %v4492
        %v4553 = vpack.c.b16 %v4497, %v4493
        %v4554 = vpack.c.b16 %v4502, %v4498
        %v4555 = vpack.c.b16 %v4503, %v4499
        %v4556 = vpack.c.b16 %v4504, %v4500
        %v4557 = vpack.c.b16 %v4505, %v4501
        %v4558 = vpack.c.b16 %v4510, %v4506
        %v4559 = vpack.c.b16 %v4511, %v4507
        %v4560 = vpack.c.b16 %v4512, %v4508
        %v4561 = vpack.c.b16 %v4513, %v4509
        %v4562 = vpack.c.b16 %v4518, %v4514
        %v4563 = vpack.c.b16 %v4519, %v4515
        %v4564 = vpack.c.b16 %v4520, %v4516
        %v4565 = vpack.c.b16 %v4521, %v4517
        %v4566 = vpack.c.b16 %v4526, %v4522
        %v4567 = vpack.c.b16 %v4527, %v4523
        %v4568 = vpack.c.b16 %v4528, %v4524
        %v4569 = vpack.c.b16 %v4529, %v4525
        %v4570 = vpack.c.b16 %v4534, %v4530
        %v4571 = vpack.c.b16 %v4535, %v4531
        %v4572 = vpack.c.b16 %v4536, %v4532
        %v4573 = vpack.c.b16 %v4537, %v4533
        %v4574 = vpack.c.b16 %v4542, %v4538
        %v4575 = vpack.c.b16 %v4543, %v4539
        %v4576 = vpack.c.b16 %v4544, %v4540
        %v4577 = vpack.c.b16 %v4545, %v4541
        %4610 = vmatprep.subr.bf16.mxu0 %v4575
        %4611 = vmatpush1.bf16.msra.mxu0 %v4574
        %4612 = vmatprep.subr.bf16.mxu0 %v4571
        %4613 = vmatpush1.bf16.msra.mxu0 %v4570
        %4614 = vmatprep.subr.bf16.mxu0 %v4567
        %4615 = vmatpush1.bf16.msra.mxu0 %v4566
        %4616 = vmatprep.subr.bf16.mxu0 %v4563
        %4617 = vmatpush1.bf16.msra.mxu0 %v4562
        %4618 = vmatprep.subr.bf16.mxu0 %v4559
        %4619 = vmatpush1.bf16.msra.mxu0 %v4558
        %4620 = vmatprep.subr.bf16.mxu0 %v4555
        %4621 = vmatpush1.bf16.msra.mxu0 %v4554
        %4622 = vmatprep.subr.bf16.mxu0 %v4551
        %4623 = vmatpush1.bf16.msra.mxu0 %v4550
        %4624 = vmatprep.subr.bf16.mxu0 %v4547
        %4625 = vmatpush1.bf16.msra.mxu0 %v4546
        %4626 = vmatprep.subr.bf16.mxu0 0
        %4627 = vmatpush2.bf16.msra.mxu0 0
        %4628 = vmatprep.subr.bf16.mxu0 0
        %4629 = vmatpush2.bf16.msra.mxu0 0
        %4630 = vmatprep.subr.bf16.mxu0 0
        %4631 = vmatpush2.bf16.msra.mxu0 0
        %4632 = vmatprep.subr.bf16.mxu0 0
        %4633 = vmatpush2.bf16.msra.mxu0 0
        %4634 = vmatprep.subr.bf16.mxu0 0
        %4635 = vmatpush2.bf16.msra.mxu0 0
        %4636 = vmatprep.subr.bf16.mxu0 0
        %4637 = vmatpush2.bf16.msra.mxu0 0
        %4638 = vmatprep.subr.bf16.mxu0 0
        %4639 = vmatpush2.bf16.msra.mxu0 0
        %4640 = vmatprep.subr.bf16.mxu0 0
        %4641 = vmatpush2.bf16.msra.mxu0 0
        %4642 = vmatprep.mubr.bf16.mxu0 0
        %4643 = vmatmul.mubr.bf16.gmra.mxu0 %v4378
        %v4644 = vpop.f32.mrf.mxu0
        %v4645 = vadd.f32 %v4433, %v4644
        %v4646 = vpop.f32.mrf.mxu0
        %v4647 = vadd.f32 %v4437, %v4646
        %v4648 = vpop.f32.mrf.mxu0
        %v4649 = vadd.f32 %v4433, %v4648
        %v4650 = vpop.f32.mrf.mxu0
        %v4651 = vadd.f32 %v4437, %v4650
        %4652 = vmatprep.mubr.bf16.mxu0 0
        %4653 = vmatmul.mubr.bf16.gmra.mxu0 %v4379
        %v4654 = vpop.f32.mrf.mxu0
        %v4655 = vadd.f32 %v4433, %v4654
        %v4656 = vpop.f32.mrf.mxu0
        %v4657 = vadd.f32 %v4437, %v4656
        %v4658 = vpop.f32.mrf.mxu0
        %v4659 = vadd.f32 %v4433, %v4658
        %v4660 = vpop.f32.mrf.mxu0
        %v4661 = vadd.f32 %v4437, %v4660
        %4662 = vmatprep.mubr.bf16.mxu0 0
        %4663 = vmatmul.mubr.bf16.gmra.mxu0 %v4380
        %v4664 = vpop.f32.mrf.mxu0
        %v4665 = vadd.f32 %v4433, %v4664
        %v4666 = vpop.f32.mrf.mxu0
        %v4667 = vadd.f32 %v4437, %v4666
        %v4668 = vpop.f32.mrf.mxu0
        %v4669 = vadd.f32 %v4433, %v4668
        %v4670 = vpop.f32.mrf.mxu0
        %v4671 = vadd.f32 %v4437, %v4670
        %4672 = vmatprep.mubr.bf16.mxu0 0
        %4673 = vmatmul.mubr.bf16.gmra.mxu0 %v4381
        %v4674 = vpop.f32.mrf.mxu0
        %v4675 = vadd.f32 %v4433, %v4674
        %v4676 = vpop.f32.mrf.mxu0
        %v4677 = vadd.f32 %v4437, %v4676
        %v4678 = vpop.f32.mrf.mxu0
        %v4679 = vadd.f32 %v4433, %v4678
        %v4680 = vpop.f32.mrf.mxu0
        %v4681 = vadd.f32 %v4437, %v4680
        %4682 = vmatprep.mubr.bf16.mxu0 0
        %4683 = vmatmul.mubr.bf16.gmra.mxu0 %v4382
        %v4684 = vpop.f32.mrf.mxu0
        %v4685 = vadd.f32 %v4433, %v4684
        %v4686 = vpop.f32.mrf.mxu0
        %v4687 = vadd.f32 %v4437, %v4686
        %v4688 = vpop.f32.mrf.mxu0
        %v4689 = vadd.f32 %v4433, %v4688
        %v4690 = vpop.f32.mrf.mxu0
        %v4691 = vadd.f32 %v4437, %v4690
        %4692 = vmatprep.mubr.bf16.mxu0 0
        %4693 = vmatmul.mubr.bf16.gmra.mxu0 %v4383
        %v4694 = vpop.f32.mrf.mxu0
        %v4695 = vadd.f32 %v4433, %v4694
        %v4696 = vpop.f32.mrf.mxu0
        %v4697 = vadd.f32 %v4437, %v4696
        %v4698 = vpop.f32.mrf.mxu0
        %v4699 = vadd.f32 %v4433, %v4698
        %v4700 = vpop.f32.mrf.mxu0
        %v4701 = vadd.f32 %v4437, %v4700
        %4702 = vmatprep.mubr.bf16.mxu0 0
        %4703 = vmatmul.mubr.bf16.gmra.mxu0 %v4384
        %v4704 = vpop.f32.mrf.mxu0
        %v4705 = vadd.f32 %v4433, %v4704
        %v4706 = vpop.f32.mrf.mxu0
        %v4707 = vadd.f32 %v4437, %v4706
        %v4708 = vpop.f32.mrf.mxu0
        %v4709 = vadd.f32 %v4433, %v4708
        %v4710 = vpop.f32.mrf.mxu0
        %v4711 = vadd.f32 %v4437, %v4710
        %4712 = vmatprep.mubr.bf16.mxu0 0
        %4713 = vmatmul.mubr.bf16.gmra.mxu0 %v4385
        %v4714 = vpop.f32.mrf.mxu0
        %v4715 = vadd.f32 %v4433, %v4714
        %v4716 = vpop.f32.mrf.mxu0
        %v4717 = vadd.f32 %v4437, %v4716
        %v4718 = vpop.f32.mrf.mxu0
        %v4719 = vadd.f32 %v4433, %v4718
        %v4720 = vpop.f32.mrf.mxu0
        %v4721 = vadd.f32 %v4437, %v4720
        %4722 = vmatprep.mubr.bf16.mxu0 0
        %4723 = vmatmul.mubr.bf16.gmra.mxu0 %v4386
        %v4724 = vpop.f32.mrf.mxu0
        %v4725 = vadd.f32 %v4433, %v4724
        %v4726 = vpop.f32.mrf.mxu0
        %v4727 = vadd.f32 %v4437, %v4726
        %v4728 = vpop.f32.mrf.mxu0
        %v4729 = vadd.f32 %v4433, %v4728
        %v4730 = vpop.f32.mrf.mxu0
        %v4731 = vadd.f32 %v4437, %v4730
        %4732 = vmatprep.mubr.bf16.mxu0 0
        %4733 = vmatmul.mubr.bf16.gmra.mxu0 %v4387
        %v4734 = vpop.f32.mrf.mxu0
        %v4735 = vadd.f32 %v4433, %v4734
        %v4736 = vpop.f32.mrf.mxu0
        %v4737 = vadd.f32 %v4437, %v4736
        %v4738 = vpop.f32.mrf.mxu0
        %v4739 = vadd.f32 %v4433, %v4738
        %v4740 = vpop.f32.mrf.mxu0
        %v4741 = vadd.f32 %v4437, %v4740
        %4742 = vmatprep.mubr.bf16.mxu0 0
        %4743 = vmatmul.mubr.bf16.gmra.mxu0 %v4388
        %v4744 = vpop.f32.mrf.mxu0
        %v4745 = vadd.f32 %v4433, %v4744
        %v4746 = vpop.f32.mrf.mxu0
        %v4747 = vadd.f32 %v4437, %v4746
        %v4748 = vpop.f32.mrf.mxu0
        %v4749 = vadd.f32 %v4433, %v4748
        %v4750 = vpop.f32.mrf.mxu0
        %v4751 = vadd.f32 %v4437, %v4750
        %4752 = vmatprep.mubr.bf16.mxu0 0
        %4753 = vmatmul.mubr.bf16.gmra.mxu0 %v4389
        %v4754 = vpop.f32.mrf.mxu0
        %v4755 = vadd.f32 %v4433, %v4754
        %v4756 = vpop.f32.mrf.mxu0
        %v4757 = vadd.f32 %v4437, %v4756
        %v4758 = vpop.f32.mrf.mxu0
        %v4759 = vadd.f32 %v4433, %v4758
        %v4760 = vpop.f32.mrf.mxu0
        %v4761 = vadd.f32 %v4437, %v4760
        %4762 = vmatprep.mubr.bf16.mxu0 0
        %4763 = vmatmul.mubr.bf16.gmra.mxu0 %v4390
        %v4764 = vpop.f32.mrf.mxu0
        %v4765 = vadd.f32 %v4433, %v4764
        %v4766 = vpop.f32.mrf.mxu0
        %v4767 = vadd.f32 %v4437, %v4766
        %v4768 = vpop.f32.mrf.mxu0
        %v4769 = vadd.f32 %v4433, %v4768
        %v4770 = vpop.f32.mrf.mxu0
        %v4771 = vadd.f32 %v4437, %v4770
        %4772 = vmatprep.mubr.bf16.mxu0 0
        %4773 = vmatmul.mubr.bf16.gmra.mxu0 %v4391
        %v4774 = vpop.f32.mrf.mxu0
        %v4775 = vadd.f32 %v4433, %v4774
        %v4776 = vpop.f32.mrf.mxu0
        %v4777 = vadd.f32 %v4437, %v4776
        %v4778 = vpop.f32.mrf.mxu0
        %v4779 = vadd.f32 %v4433, %v4778
        %v4780 = vpop.f32.mrf.mxu0
        %v4781 = vadd.f32 %v4437, %v4780
        %4782 = vmatprep.mubr.bf16.mxu0 0
        %4783 = vmatmul.mubr.bf16.gmra.mxu0 %v4392
        %v4784 = vpop.f32.mrf.mxu0
        %v4785 = vadd.f32 %v4433, %v4784
        %v4786 = vpop.f32.mrf.mxu0
        %v4787 = vadd.f32 %v4437, %v4786
        %v4788 = vpop.f32.mrf.mxu0
        %v4789 = vadd.f32 %v4433, %v4788
        %v4790 = vpop.f32.mrf.mxu0
        %v4791 = vadd.f32 %v4437, %v4790
        %4792 = vmatprep.mubr.bf16.mxu0 0
        %4793 = vmatmul.mubr.bf16.gmra.mxu0 %v4393
        %v4794 = vpop.f32.mrf.mxu0
        %v4795 = vadd.f32 %v4433, %v4794
        %v4796 = vpop.f32.mrf.mxu0
        %v4797 = vadd.f32 %v4437, %v4796
        %v4798 = vpop.f32.mrf.mxu0
        %v4799 = vadd.f32 %v4433, %v4798
        %v4800 = vpop.f32.mrf.mxu0
        %v4801 = vadd.f32 %v4437, %v4800
        %4802 = vdwg.mxu0
        %4803 = vmatprep.subr.bf16.mxu0 %v4577
        %4804 = vmatpush1.bf16.msra.mxu0 %v4576
        %4805 = vmatprep.subr.bf16.mxu0 %v4573
        %4806 = vmatpush1.bf16.msra.mxu0 %v4572
        %4807 = vmatprep.subr.bf16.mxu0 %v4569
        %4808 = vmatpush1.bf16.msra.mxu0 %v4568
        %4809 = vmatprep.subr.bf16.mxu0 %v4565
        %4810 = vmatpush1.bf16.msra.mxu0 %v4564
        %4811 = vmatprep.subr.bf16.mxu0 %v4561
        %4812 = vmatpush1.bf16.msra.mxu0 %v4560
        %4813 = vmatprep.subr.bf16.mxu0 %v4557
        %4814 = vmatpush1.bf16.msra.mxu0 %v4556
        %4815 = vmatprep.subr.bf16.mxu0 %v4553
        %4816 = vmatpush1.bf16.msra.mxu0 %v4552
        %4817 = vmatprep.subr.bf16.mxu0 %v4549
        %4818 = vmatpush1.bf16.msra.mxu0 %v4548
        %4819 = vmatprep.subr.bf16.mxu0 0
        %4820 = vmatpush2.bf16.msra.mxu0 0
        %4821 = vmatprep.subr.bf16.mxu0 0
        %4822 = vmatpush2.bf16.msra.mxu0 0
        %4823 = vmatprep.subr.bf16.mxu0 0
        %4824 = vmatpush2.bf16.msra.mxu0 0
        %4825 = vmatprep.subr.bf16.mxu0 0
        %4826 = vmatpush2.bf16.msra.mxu0 0
        %4827 = vmatprep.subr.bf16.mxu0 0
        %4828 = vmatpush2.bf16.msra.mxu0 0
        %4829 = vmatprep.subr.bf16.mxu0 0
        %4830 = vmatpush2.bf16.msra.mxu0 0
        %4831 = vmatprep.subr.bf16.mxu0 0
        %4832 = vmatpush2.bf16.msra.mxu0 0
        %4833 = vmatprep.subr.bf16.mxu0 0
        %4834 = vmatpush2.bf16.msra.mxu0 0
        %4835 = vmatprep.mubr.bf16.mxu0 0
        %4836 = vmatmul.mubr.bf16.gmra.mxu0 %v4378
        %v4837 = vpop.f32.mrf.mxu0
        %v4838 = vadd.f32 %v4441, %v4837
        %v4839 = vpop.f32.mrf.mxu0
        %v4840 = vadd.f32 %v4445, %v4839
        %v4841 = vpop.f32.mrf.mxu0
        %v4842 = vadd.f32 %v4441, %v4841
        %v4843 = vpop.f32.mrf.mxu0
        %v4844 = vadd.f32 %v4445, %v4843
        %4845 = vmatprep.mubr.bf16.mxu0 0
        %4846 = vmatmul.mubr.bf16.gmra.mxu0 %v4379
        %v4847 = vpop.f32.mrf.mxu0
        %v4848 = vadd.f32 %v4441, %v4847
        %v4849 = vpop.f32.mrf.mxu0
        %v4850 = vadd.f32 %v4445, %v4849
        %v4851 = vpop.f32.mrf.mxu0
        %v4852 = vadd.f32 %v4441, %v4851
        %v4853 = vpop.f32.mrf.mxu0
        %v4854 = vadd.f32 %v4445, %v4853
        %4855 = vmatprep.mubr.bf16.mxu0 0
        %4856 = vmatmul.mubr.bf16.gmra.mxu0 %v4380
        %v4857 = vpop.f32.mrf.mxu0
        %v4858 = vadd.f32 %v4441, %v4857
        %v4859 = vpop.f32.mrf.mxu0
        %v4860 = vadd.f32 %v4445, %v4859
        %v4861 = vpop.f32.mrf.mxu0
        %v4862 = vadd.f32 %v4441, %v4861
        %v4863 = vpop.f32.mrf.mxu0
        %v4864 = vadd.f32 %v4445, %v4863
        %4865 = vmatprep.mubr.bf16.mxu0 0
        %4866 = vmatmul.mubr.bf16.gmra.mxu0 %v4381
        %v4867 = vpop.f32.mrf.mxu0
        %v4868 = vadd.f32 %v4441, %v4867
        %v4869 = vpop.f32.mrf.mxu0
        %v4870 = vadd.f32 %v4445, %v4869
        %v4871 = vpop.f32.mrf.mxu0
        %v4872 = vadd.f32 %v4441, %v4871
        %v4873 = vpop.f32.mrf.mxu0
        %v4874 = vadd.f32 %v4445, %v4873
        %4875 = vmatprep.mubr.bf16.mxu0 0
        %4876 = vmatmul.mubr.bf16.gmra.mxu0 %v4382
        %v4877 = vpop.f32.mrf.mxu0
        %v4878 = vadd.f32 %v4441, %v4877
        %v4879 = vpop.f32.mrf.mxu0
        %v4880 = vadd.f32 %v4445, %v4879
        %v4881 = vpop.f32.mrf.mxu0
        %v4882 = vadd.f32 %v4441, %v4881
        %v4883 = vpop.f32.mrf.mxu0
        %v4884 = vadd.f32 %v4445, %v4883
        %4885 = vmatprep.mubr.bf16.mxu0 0
        %4886 = vmatmul.mubr.bf16.gmra.mxu0 %v4383
        %v4887 = vpop.f32.mrf.mxu0
        %v4888 = vadd.f32 %v4441, %v4887
        %v4889 = vpop.f32.mrf.mxu0
        %v4890 = vadd.f32 %v4445, %v4889
        %v4891 = vpop.f32.mrf.mxu0
        %v4892 = vadd.f32 %v4441, %v4891
        %v4893 = vpop.f32.mrf.mxu0
        %v4894 = vadd.f32 %v4445, %v4893
        %4895 = vmatprep.mubr.bf16.mxu0 0
        %4896 = vmatmul.mubr.bf16.gmra.mxu0 %v4384
        %v4897 = vpop.f32.mrf.mxu0
        %v4898 = vadd.f32 %v4441, %v4897
        %v4899 = vpop.f32.mrf.mxu0
        %v4900 = vadd.f32 %v4445, %v4899
        %v4901 = vpop.f32.mrf.mxu0
        %v4902 = vadd.f32 %v4441, %v4901
        %v4903 = vpop.f32.mrf.mxu0
        %v4904 = vadd.f32 %v4445, %v4903
        %4905 = vmatprep.mubr.bf16.mxu0 0
        %4906 = vmatmul.mubr.bf16.gmra.mxu0 %v4385
        %v4907 = vpop.f32.mrf.mxu0
        %v4908 = vadd.f32 %v4441, %v4907
        %v4909 = vpop.f32.mrf.mxu0
        %v4910 = vadd.f32 %v4445, %v4909
        %v4911 = vpop.f32.mrf.mxu0
        %v4912 = vadd.f32 %v4441, %v4911
        %v4913 = vpop.f32.mrf.mxu0
        %v4914 = vadd.f32 %v4445, %v4913
        %4915 = vmatprep.mubr.bf16.mxu0 0
        %4916 = vmatmul.mubr.bf16.gmra.mxu0 %v4386
        %v4917 = vpop.f32.mrf.mxu0
        %v4918 = vadd.f32 %v4441, %v4917
        %v4919 = vpop.f32.mrf.mxu0
        %v4920 = vadd.f32 %v4445, %v4919
        %v4921 = vpop.f32.mrf.mxu0
        %v4922 = vadd.f32 %v4441, %v4921
        %v4923 = vpop.f32.mrf.mxu0
        %v4924 = vadd.f32 %v4445, %v4923
        %4925 = vmatprep.mubr.bf16.mxu0 0
        %4926 = vmatmul.mubr.bf16.gmra.mxu0 %v4387
        %v4927 = vpop.f32.mrf.mxu0
        %v4928 = vadd.f32 %v4441, %v4927
        %v4929 = vpop.f32.mrf.mxu0
        %v4930 = vadd.f32 %v4445, %v4929
        %v4931 = vpop.f32.mrf.mxu0
        %v4932 = vadd.f32 %v4441, %v4931
        %v4933 = vpop.f32.mrf.mxu0
        %v4934 = vadd.f32 %v4445, %v4933
        %4935 = vmatprep.mubr.bf16.mxu0 0
        %4936 = vmatmul.mubr.bf16.gmra.mxu0 %v4388
        %v4937 = vpop.f32.mrf.mxu0
        %v4938 = vadd.f32 %v4441, %v4937
        %v4939 = vpop.f32.mrf.mxu0
        %v4940 = vadd.f32 %v4445, %v4939
        %v4941 = vpop.f32.mrf.mxu0
        %v4942 = vadd.f32 %v4441, %v4941
        %v4943 = vpop.f32.mrf.mxu0
        %v4944 = vadd.f32 %v4445, %v4943
        %4945 = vmatprep.mubr.bf16.mxu0 0
        %4946 = vmatmul.mubr.bf16.gmra.mxu0 %v4389
        %v4947 = vpop.f32.mrf.mxu0
        %v4948 = vadd.f32 %v4441, %v4947
        %v4949 = vpop.f32.mrf.mxu0
        %v4950 = vadd.f32 %v4445, %v4949
        %v4951 = vpop.f32.mrf.mxu0
        %v4952 = vadd.f32 %v4441, %v4951
        %v4953 = vpop.f32.mrf.mxu0
        %v4954 = vadd.f32 %v4445, %v4953
        %4955 = vmatprep.mubr.bf16.mxu0 0
        %4956 = vmatmul.mubr.bf16.gmra.mxu0 %v4390
        %v4957 = vpop.f32.mrf.mxu0
        %v4958 = vadd.f32 %v4441, %v4957
        %v4959 = vpop.f32.mrf.mxu0
        %v4960 = vadd.f32 %v4445, %v4959
        %v4961 = vpop.f32.mrf.mxu0
        %v4962 = vadd.f32 %v4441, %v4961
        %v4963 = vpop.f32.mrf.mxu0
        %v4964 = vadd.f32 %v4445, %v4963
        %4965 = vmatprep.mubr.bf16.mxu0 0
        %4966 = vmatmul.mubr.bf16.gmra.mxu0 %v4391
        %v4967 = vpop.f32.mrf.mxu0
        %v4968 = vadd.f32 %v4441, %v4967
        %v4969 = vpop.f32.mrf.mxu0
        %v4970 = vadd.f32 %v4445, %v4969
        %v4971 = vpop.f32.mrf.mxu0
        %v4972 = vadd.f32 %v4441, %v4971
        %v4973 = vpop.f32.mrf.mxu0
        %v4974 = vadd.f32 %v4445, %v4973
        %4975 = vmatprep.mubr.bf16.mxu0 0
        %4976 = vmatmul.mubr.bf16.gmra.mxu0 %v4392
        %v4977 = vpop.f32.mrf.mxu0
        %v4978 = vadd.f32 %v4441, %v4977
        %v4979 = vpop.f32.mrf.mxu0
        %v4980 = vadd.f32 %v4445, %v4979
        %v4981 = vpop.f32.mrf.mxu0
        %v4982 = vadd.f32 %v4441, %v4981
        %v4983 = vpop.f32.mrf.mxu0
        %v4984 = vadd.f32 %v4445, %v4983
        %4985 = vmatprep.mubr.bf16.mxu0 0
        %4986 = vmatmul.mubr.bf16.gmra.mxu0 %v4393
        %v4987 = vpop.f32.mrf.mxu0
        %v4988 = vadd.f32 %v4441, %v4987
        %v4989 = vpop.f32.mrf.mxu0
        %v4990 = vadd.f32 %v4445, %v4989
        %v4991 = vpop.f32.mrf.mxu0
        %v4992 = vadd.f32 %v4441, %v4991
        %v4993 = vpop.f32.mrf.mxu0
        %v4994 = vadd.f32 %v4445, %v4993
        %4995 = vdwg.mxu0
        %v4996 = vpack.c.bf16 %v4649, %v4645
        %v4997 = vpack.c.bf16 %v4651, %v4647
        %v4998 = vpack.c.bf16 %v4842, %v4838
        %v4999 = vpack.c.bf16 %v4844, %v4840
        %v5000 = vpack.c.bf16 %v4659, %v4655
        %v5001 = vpack.c.bf16 %v4661, %v4657
        %v5002 = vpack.c.bf16 %v4852, %v4848
        %v5003 = vpack.c.bf16 %v4854, %v4850
        %v5004 = vpack.c.bf16 %v4669, %v4665
        %v5005 = vpack.c.bf16 %v4671, %v4667
        %v5006 = vpack.c.bf16 %v4862, %v4858
        %v5007 = vpack.c.bf16 %v4864, %v4860
        %v5008 = vpack.c.bf16 %v4679, %v4675
        %v5009 = vpack.c.bf16 %v4681, %v4677
        %v5010 = vpack.c.bf16 %v4872, %v4868
        %v5011 = vpack.c.bf16 %v4874, %v4870
        %v5012 = vpack.c.bf16 %v4689, %v4685
        %v5013 = vpack.c.bf16 %v4691, %v4687
        %v5014 = vpack.c.bf16 %v4882, %v4878
        %v5015 = vpack.c.bf16 %v4884, %v4880
        %v5016 = vpack.c.bf16 %v4699, %v4695
        %v5017 = vpack.c.bf16 %v4701, %v4697
        %v5018 = vpack.c.bf16 %v4892, %v4888
        %v5019 = vpack.c.bf16 %v4894, %v4890
        %v5020 = vpack.c.bf16 %v4709, %v4705
        %v5021 = vpack.c.bf16 %v4711, %v4707
        %v5022 = vpack.c.bf16 %v4902, %v4898
        %v5023 = vpack.c.bf16 %v4904, %v4900
        %v5024 = vpack.c.bf16 %v4719, %v4715
        %v5025 = vpack.c.bf16 %v4721, %v4717
        %v5026 = vpack.c.bf16 %v4912, %v4908
        %v5027 = vpack.c.bf16 %v4914, %v4910
        %v5028 = vpack.c.bf16 %v4729, %v4725
        %v5029 = vpack.c.bf16 %v4731, %v4727
        %v5030 = vpack.c.bf16 %v4922, %v4918
        %v5031 = vpack.c.bf16 %v4924, %v4920
        %v5032 = vpack.c.bf16 %v4739, %v4735
        %v5033 = vpack.c.bf16 %v4741, %v4737
        %v5034 = vpack.c.bf16 %v4932, %v4928
        %v5035 = vpack.c.bf16 %v4934, %v4930
        %v5036 = vpack.c.bf16 %v4749, %v4745
        %v5037 = vpack.c.bf16 %v4751, %v4747
        %v5038 = vpack.c.bf16 %v4942, %v4938
        %v5039 = vpack.c.bf16 %v4944, %v4940
        %v5040 = vpack.c.bf16 %v4759, %v4755
        %v5041 = vpack.c.bf16 %v4761, %v4757
        %v5042 = vpack.c.bf16 %v4952, %v4948
        %v5043 = vpack.c.bf16 %v4954, %v4950
        %v5044 = vpack.c.bf16 %v4769, %v4765
        %v5045 = vpack.c.bf16 %v4771, %v4767
        %v5046 = vpack.c.bf16 %v4962, %v4958
        %v5047 = vpack.c.bf16 %v4964, %v4960
        %v5048 = vpack.c.bf16 %v4779, %v4775
        %v5049 = vpack.c.bf16 %v4781, %v4777
        %v5050 = vpack.c.bf16 %v4972, %v4968
        %v5051 = vpack.c.bf16 %v4974, %v4970
        %v5052 = vpack.c.bf16 %v4789, %v4785
        %v5053 = vpack.c.bf16 %v4791, %v4787
        %v5054 = vpack.c.bf16 %v4982, %v4978
        %v5055 = vpack.c.bf16 %v4984, %v4980
        %v5056 = vpack.c.bf16 %v4799, %v4795
        %v5057 = vpack.c.bf16 %v4801, %v4797
        %v5058 = vpack.c.bf16 %v4992, %v4988
        %v5059 = vpack.c.bf16 %v4994, %v4990
        %s5060 = scalar_lea.vmem [#allocation11], 512
        %v5061 = vld [vmem:[%s5060] sm:$0xf]
        %v5062 = vld [vmem:[%s5060 + $0x4] sm:$0xf]
        %v5063 = vld [vmem:[%s5060 + $0x8] sm:$0xf]
        %v5064 = vld [vmem:[%s5060 + $0xc] sm:$0xf]
        %v5065 = vld [vmem:[%s5060 + $0x10] sm:$0xf]
        %v5066 = vld [vmem:[%s5060 + $0x14] sm:$0xf]
        %v5067 = vld [vmem:[%s5060 + $0x18] sm:$0xf]
        %v5068 = vld [vmem:[%s5060 + $0x1c] sm:$0xf]
        %v5069 = vld [vmem:[%s5060 + $0x20] sm:$0xf]
        %v5070 = vld [vmem:[%s5060 + $0x24] sm:$0xf]
        %v5071 = vld [vmem:[%s5060 + $0x28] sm:$0xf]
        %v5072 = vld [vmem:[%s5060 + $0x2c] sm:$0xf]
        %v5073 = vld [vmem:[%s5060 + $0x30] sm:$0xf]
        %v5074 = vld [vmem:[%s5060 + $0x34] sm:$0xf]
        %v5075 = vld [vmem:[%s5060 + $0x38] sm:$0xf]
        %v5076 = vld [vmem:[%s5060 + $0x3c] sm:$0xf]
        %v5077 = vld [vmem:[%s5060 + $0x40] sm:$0xf]
        %v5078 = vld [vmem:[%s5060 + $0x44] sm:$0xf]
        %v5079 = vld [vmem:[%s5060 + $0x48] sm:$0xf]
        %v5080 = vld [vmem:[%s5060 + $0x4c] sm:$0xf]
        %v5081 = vld [vmem:[%s5060 + $0x50] sm:$0xf]
        %v5082 = vld [vmem:[%s5060 + $0x54] sm:$0xf]
        %v5083 = vld [vmem:[%s5060 + $0x58] sm:$0xf]
        %v5084 = vld [vmem:[%s5060 + $0x5c] sm:$0xf]
        %v5085 = vld [vmem:[%s5060 + $0x60] sm:$0xf]
        %v5086 = vld [vmem:[%s5060 + $0x64] sm:$0xf]
        %v5087 = vld [vmem:[%s5060 + $0x68] sm:$0xf]
        %v5088 = vld [vmem:[%s5060 + $0x6c] sm:$0xf]
        %v5089 = vld [vmem:[%s5060 + $0x70] sm:$0xf]
        %v5090 = vld [vmem:[%s5060 + $0x74] sm:$0xf]
        %v5091 = vld [vmem:[%s5060 + $0x78] sm:$0xf]
        %v5092 = vld [vmem:[%s5060 + $0x7c] sm:$0xf]
        %v5093 = vld [vmem:[%s5060 + $0x80] sm:$0xf]
        %v5094 = vld [vmem:[%s5060 + $0x84] sm:$0xf]
        %v5095 = vld [vmem:[%s5060 + $0x88] sm:$0xf]
        %v5096 = vld [vmem:[%s5060 + $0x8c] sm:$0xf]
        %v5097 = vld [vmem:[%s5060 + $0x90] sm:$0xf]
        %v5098 = vld [vmem:[%s5060 + $0x94] sm:$0xf]
        %v5099 = vld [vmem:[%s5060 + $0x98] sm:$0xf]
        %v5100 = vld [vmem:[%s5060 + $0x9c] sm:$0xf]
        %v5101 = vld [vmem:[%s5060 + $0xa0] sm:$0xf]
        %v5102 = vld [vmem:[%s5060 + $0xa4] sm:$0xf]
        %v5103 = vld [vmem:[%s5060 + $0xa8] sm:$0xf]
        %v5104 = vld [vmem:[%s5060 + $0xac] sm:$0xf]
        %v5105 = vld [vmem:[%s5060 + $0xb0] sm:$0xf]
        %v5106 = vld [vmem:[%s5060 + $0xb4] sm:$0xf]
        %v5107 = vld [vmem:[%s5060 + $0xb8] sm:$0xf]
        %v5108 = vld [vmem:[%s5060 + $0xbc] sm:$0xf]
        %v5109 = vld [vmem:[%s5060 + $0xc0] sm:$0xf]
        %v5110 = vld [vmem:[%s5060 + $0xc4] sm:$0xf]
        %v5111 = vld [vmem:[%s5060 + $0xc8] sm:$0xf]
        %v5112 = vld [vmem:[%s5060 + $0xcc] sm:$0xf]
        %v5113 = vld [vmem:[%s5060 + $0xd0] sm:$0xf]
        %v5114 = vld [vmem:[%s5060 + $0xd4] sm:$0xf]
        %v5115 = vld [vmem:[%s5060 + $0xd8] sm:$0xf]
        %v5116 = vld [vmem:[%s5060 + $0xdc] sm:$0xf]
        %v5117 = vld [vmem:[%s5060 + $0xe0] sm:$0xf]
        %v5118 = vld [vmem:[%s5060 + $0xe4] sm:$0xf]
        %v5119 = vld [vmem:[%s5060 + $0xe8] sm:$0xf]
        %v5120 = vld [vmem:[%s5060 + $0xec] sm:$0xf]
        %v5121 = vld [vmem:[%s5060 + $0xf0] sm:$0xf]
        %v5122 = vld [vmem:[%s5060 + $0xf4] sm:$0xf]
        %v5123 = vld [vmem:[%s5060 + $0xf8] sm:$0xf]
        %v5124 = vld [vmem:[%s5060 + $0xfc] sm:$0xf]
        %v5125 = vld [vmem:[#allocation7 + $0x7] sm:$0x1]
        %v5126 = vlaneseq
        %v5127 = vshrl.u32 %v5126, 7
        %v5128 = vsub.s32 0, %v5127
        %v5129 = vrot.slane %v5125, %v5128
        %v5194 = vunpack.c.l.b16 %v5061
        %v5195 = vunpack.c.l.b16 %v5062
        %v5196 = vunpack.c.l.b16 %v5063
        %v5197 = vunpack.c.l.b16 %v5064
        %v5198 = vunpack.c.l.b16 %v5065
        %v5199 = vunpack.c.l.b16 %v5066
        %v5200 = vunpack.c.l.b16 %v5067
        %v5201 = vunpack.c.l.b16 %v5068
        %v5202 = vunpack.c.l.b16 %v5069
        %v5203 = vunpack.c.l.b16 %v5070
        %v5204 = vunpack.c.l.b16 %v5071
        %v5205 = vunpack.c.l.b16 %v5072
        %v5206 = vunpack.c.l.b16 %v5073
        %v5207 = vunpack.c.l.b16 %v5074
        %v5208 = vunpack.c.l.b16 %v5075
        %v5209 = vunpack.c.l.b16 %v5076
        %v5210 = vunpack.c.l.b16 %v5077
        %v5211 = vunpack.c.l.b16 %v5078
        %v5212 = vunpack.c.l.b16 %v5079
        %v5213 = vunpack.c.l.b16 %v5080
        %v5214 = vunpack.c.l.b16 %v5081
        %v5215 = vunpack.c.l.b16 %v5082
        %v5216 = vunpack.c.l.b16 %v5083
        %v5217 = vunpack.c.l.b16 %v5084
        %v5218 = vunpack.c.l.b16 %v5085
        %v5219 = vunpack.c.l.b16 %v5086
        %v5220 = vunpack.c.l.b16 %v5087
        %v5221 = vunpack.c.l.b16 %v5088
        %v5222 = vunpack.c.l.b16 %v5089
        %v5223 = vunpack.c.l.b16 %v5090
        %v5224 = vunpack.c.l.b16 %v5091
        %v5225 = vunpack.c.l.b16 %v5092
        %v5226 = vunpack.c.l.b16 %v5093
        %v5227 = vunpack.c.l.b16 %v5094
        %v5228 = vunpack.c.l.b16 %v5095
        %v5229 = vunpack.c.l.b16 %v5096
        %v5230 = vunpack.c.l.b16 %v5097
        %v5231 = vunpack.c.l.b16 %v5098
        %v5232 = vunpack.c.l.b16 %v5099
        %v5233 = vunpack.c.l.b16 %v5100
        %v5234 = vunpack.c.l.b16 %v5101
        %v5235 = vunpack.c.l.b16 %v5102
        %v5236 = vunpack.c.l.b16 %v5103
        %v5237 = vunpack.c.l.b16 %v5104
        %v5238 = vunpack.c.l.b16 %v5105
        %v5239 = vunpack.c.l.b16 %v5106
        %v5240 = vunpack.c.l.b16 %v5107
        %v5241 = vunpack.c.l.b16 %v5108
        %v5242 = vunpack.c.l.b16 %v5109
        %v5243 = vunpack.c.l.b16 %v5110
        %v5244 = vunpack.c.l.b16 %v5111
        %v5245 = vunpack.c.l.b16 %v5112
        %v5246 = vunpack.c.l.b16 %v5113
        %v5247 = vunpack.c.l.b16 %v5114
        %v5248 = vunpack.c.l.b16 %v5115
        %v5249 = vunpack.c.l.b16 %v5116
        %v5250 = vunpack.c.l.b16 %v5117
        %v5251 = vunpack.c.l.b16 %v5118
        %v5252 = vunpack.c.l.b16 %v5119
        %v5253 = vunpack.c.l.b16 %v5120
        %v5254 = vunpack.c.l.b16 %v5121
        %v5255 = vunpack.c.l.b16 %v5122
        %v5256 = vunpack.c.l.b16 %v5123
        %v5257 = vunpack.c.l.b16 %v5124
        %v5258 = vpack.c.b16 %v5195, %v5194
        %v5259 = vpack.c.b16 %v5197, %v5196
        %v5260 = vpack.c.b16 %v5199, %v5198
        %v5261 = vpack.c.b16 %v5201, %v5200
        %v5262 = vpack.c.b16 %v5203, %v5202
        %v5263 = vpack.c.b16 %v5205, %v5204
        %v5264 = vpack.c.b16 %v5207, %v5206
        %v5265 = vpack.c.b16 %v5209, %v5208
        %v5266 = vpack.c.b16 %v5211, %v5210
        %v5267 = vpack.c.b16 %v5213, %v5212
        %v5268 = vpack.c.b16 %v5215, %v5214
        %v5269 = vpack.c.b16 %v5217, %v5216
        %v5270 = vpack.c.b16 %v5219, %v5218
        %v5271 = vpack.c.b16 %v5221, %v5220
        %v5272 = vpack.c.b16 %v5223, %v5222
        %v5273 = vpack.c.b16 %v5225, %v5224
        %v5274 = vpack.c.b16 %v5227, %v5226
        %v5275 = vpack.c.b16 %v5229, %v5228
        %v5276 = vpack.c.b16 %v5231, %v5230
        %v5277 = vpack.c.b16 %v5233, %v5232
        %v5278 = vpack.c.b16 %v5235, %v5234
        %v5279 = vpack.c.b16 %v5237, %v5236
        %v5280 = vpack.c.b16 %v5239, %v5238
        %v5281 = vpack.c.b16 %v5241, %v5240
        %v5282 = vpack.c.b16 %v5243, %v5242
        %v5283 = vpack.c.b16 %v5245, %v5244
        %v5284 = vpack.c.b16 %v5247, %v5246
        %v5285 = vpack.c.b16 %v5249, %v5248
        %v5286 = vpack.c.b16 %v5251, %v5250
        %v5287 = vpack.c.b16 %v5253, %v5252
        %v5288 = vpack.c.b16 %v5255, %v5254
        %v5289 = vpack.c.b16 %v5257, %v5256
        %5322 = vmatprep.subr.bf16.mxu0 0
        %5323 = vmatpush1.bf16.msra.mxu0 %v5265
        %5324 = vmatprep.subr.bf16.mxu0 0
        %5325 = vmatpush1.bf16.msra.mxu0 %v5264
        %5326 = vmatprep.subr.bf16.mxu0 0
        %5327 = vmatpush1.bf16.msra.mxu0 %v5263
        %5328 = vmatprep.subr.bf16.mxu0 0
        %5329 = vmatpush1.bf16.msra.mxu0 %v5262
        %5330 = vmatprep.subr.bf16.mxu0 0
        %5331 = vmatpush1.bf16.msra.mxu0 %v5261
        %5332 = vmatprep.subr.bf16.mxu0 0
        %5333 = vmatpush1.bf16.msra.mxu0 %v5260
        %5334 = vmatprep.subr.bf16.mxu0 0
        %5335 = vmatpush1.bf16.msra.mxu0 %v5259
        %5336 = vmatprep.subr.bf16.mxu0 0
        %5337 = vmatpush1.bf16.msra.mxu0 %v5258
        %5338 = vmatprep.subr.bf16.mxu0 0
        %5339 = vmatpush2.bf16.msra.mxu0 %v5273
        %5340 = vmatprep.subr.bf16.mxu0 0
        %5341 = vmatpush2.bf16.msra.mxu0 %v5272
        %5342 = vmatprep.subr.bf16.mxu0 0
        %5343 = vmatpush2.bf16.msra.mxu0 %v5271
        %5344 = vmatprep.subr.bf16.mxu0 0
        %5345 = vmatpush2.bf16.msra.mxu0 %v5270
        %5346 = vmatprep.subr.bf16.mxu0 0
        %5347 = vmatpush2.bf16.msra.mxu0 %v5269
        %5348 = vmatprep.subr.bf16.mxu0 0
        %5349 = vmatpush2.bf16.msra.mxu0 %v5268
        %5350 = vmatprep.subr.bf16.mxu0 0
        %5351 = vmatpush2.bf16.msra.mxu0 %v5267
        %5352 = vmatprep.subr.bf16.mxu0 0
        %5353 = vmatpush2.bf16.msra.mxu0 %v5266
        %5354 = vmatprep.mubr.bf16.mxu0 %v4997
        %5355 = vmatmul.mubr.bf16.gmra.mxu0 %v4996
        %v5356 = vpop.f32.mrf.mxu0
        %v5357 = vadd.f32 %v5129, %v5356
        %v5358 = vpop.f32.mrf.mxu0
        %v5359 = vpop.f32.mrf.mxu0
        %v5360 = vadd.f32 %v5129, %v5359
        %v5361 = vpop.f32.mrf.mxu0
        %5362 = vmatprep.mubr.bf16.mxu0 %v5001
        %5363 = vmatmul.mubr.bf16.gmra.mxu0 %v5000
        %v5364 = vpop.f32.mrf.mxu0
        %v5365 = vadd.f32 %v5129, %v5364
        %v5366 = vpop.f32.mrf.mxu0
        %v5367 = vpop.f32.mrf.mxu0
        %v5368 = vadd.f32 %v5129, %v5367
        %v5369 = vpop.f32.mrf.mxu0
        %5370 = vmatprep.mubr.bf16.mxu0 %v5005
        %5371 = vmatmul.mubr.bf16.gmra.mxu0 %v5004
        %v5372 = vpop.f32.mrf.mxu0
        %v5373 = vadd.f32 %v5129, %v5372
        %v5374 = vpop.f32.mrf.mxu0
        %v5375 = vpop.f32.mrf.mxu0
        %v5376 = vadd.f32 %v5129, %v5375
        %v5377 = vpop.f32.mrf.mxu0
        %5378 = vmatprep.mubr.bf16.mxu0 %v5009
        %5379 = vmatmul.mubr.bf16.gmra.mxu0 %v5008
        %v5380 = vpop.f32.mrf.mxu0
        %v5381 = vadd.f32 %v5129, %v5380
        %v5382 = vpop.f32.mrf.mxu0
        %v5383 = vpop.f32.mrf.mxu0
        %v5384 = vadd.f32 %v5129, %v5383
        %v5385 = vpop.f32.mrf.mxu0
        %5386 = vmatprep.mubr.bf16.mxu0 %v5013
        %5387 = vmatmul.mubr.bf16.gmra.mxu0 %v5012
        %v5388 = vpop.f32.mrf.mxu0
        %v5389 = vadd.f32 %v5129, %v5388
        %v5390 = vpop.f32.mrf.mxu0
        %v5391 = vpop.f32.mrf.mxu0
        %v5392 = vadd.f32 %v5129, %v5391
        %v5393 = vpop.f32.mrf.mxu0
        %5394 = vmatprep.mubr.bf16.mxu0 %v5017
        %5395 = vmatmul.mubr.bf16.gmra.mxu0 %v5016
        %v5396 = vpop.f32.mrf.mxu0
        %v5397 = vadd.f32 %v5129, %v5396
        %v5398 = vpop.f32.mrf.mxu0
        %v5399 = vpop.f32.mrf.mxu0
        %v5400 = vadd.f32 %v5129, %v5399
        %v5401 = vpop.f32.mrf.mxu0
        %5402 = vmatprep.mubr.bf16.mxu0 %v5021
        %5403 = vmatmul.mubr.bf16.gmra.mxu0 %v5020
        %v5404 = vpop.f32.mrf.mxu0
        %v5405 = vadd.f32 %v5129, %v5404
        %v5406 = vpop.f32.mrf.mxu0
        %v5407 = vpop.f32.mrf.mxu0
        %v5408 = vadd.f32 %v5129, %v5407
        %v5409 = vpop.f32.mrf.mxu0
        %5410 = vmatprep.mubr.bf16.mxu0 %v5025
        %5411 = vmatmul.mubr.bf16.gmra.mxu0 %v5024
        %v5412 = vpop.f32.mrf.mxu0
        %v5413 = vadd.f32 %v5129, %v5412
        %v5414 = vpop.f32.mrf.mxu0
        %v5415 = vpop.f32.mrf.mxu0
        %v5416 = vadd.f32 %v5129, %v5415
        %v5417 = vpop.f32.mrf.mxu0
        %5418 = vmatprep.mubr.bf16.mxu0 %v5029
        %5419 = vmatmul.mubr.bf16.gmra.mxu0 %v5028
        %v5420 = vpop.f32.mrf.mxu0
        %v5421 = vadd.f32 %v5129, %v5420
        %v5422 = vpop.f32.mrf.mxu0
        %v5423 = vpop.f32.mrf.mxu0
        %v5424 = vadd.f32 %v5129, %v5423
        %v5425 = vpop.f32.mrf.mxu0
        %5426 = vmatprep.mubr.bf16.mxu0 %v5033
        %5427 = vmatmul.mubr.bf16.gmra.mxu0 %v5032
        %v5428 = vpop.f32.mrf.mxu0
        %v5429 = vadd.f32 %v5129, %v5428
        %v5430 = vpop.f32.mrf.mxu0
        %v5431 = vpop.f32.mrf.mxu0
        %v5432 = vadd.f32 %v5129, %v5431
        %v5433 = vpop.f32.mrf.mxu0
        %5434 = vmatprep.mubr.bf16.mxu0 %v5037
        %5435 = vmatmul.mubr.bf16.gmra.mxu0 %v5036
        %v5436 = vpop.f32.mrf.mxu0
        %v5437 = vadd.f32 %v5129, %v5436
        %v5438 = vpop.f32.mrf.mxu0
        %v5439 = vpop.f32.mrf.mxu0
        %v5440 = vadd.f32 %v5129, %v5439
        %v5441 = vpop.f32.mrf.mxu0
        %5442 = vmatprep.mubr.bf16.mxu0 %v5041
        %5443 = vmatmul.mubr.bf16.gmra.mxu0 %v5040
        %v5444 = vpop.f32.mrf.mxu0
        %v5445 = vadd.f32 %v5129, %v5444
        %v5446 = vpop.f32.mrf.mxu0
        %v5447 = vpop.f32.mrf.mxu0
        %v5448 = vadd.f32 %v5129, %v5447
        %v5449 = vpop.f32.mrf.mxu0
        %5450 = vmatprep.mubr.bf16.mxu0 %v5045
        %5451 = vmatmul.mubr.bf16.gmra.mxu0 %v5044
        %v5452 = vpop.f32.mrf.mxu0
        %v5453 = vadd.f32 %v5129, %v5452
        %v5454 = vpop.f32.mrf.mxu0
        %v5455 = vpop.f32.mrf.mxu0
        %v5456 = vadd.f32 %v5129, %v5455
        %v5457 = vpop.f32.mrf.mxu0
        %5458 = vmatprep.mubr.bf16.mxu0 %v5049
        %5459 = vmatmul.mubr.bf16.gmra.mxu0 %v5048
        %v5460 = vpop.f32.mrf.mxu0
        %v5461 = vadd.f32 %v5129, %v5460
        %v5462 = vpop.f32.mrf.mxu0
        %v5463 = vpop.f32.mrf.mxu0
        %v5464 = vadd.f32 %v5129, %v5463
        %v5465 = vpop.f32.mrf.mxu0
        %5466 = vmatprep.mubr.bf16.mxu0 %v5053
        %5467 = vmatmul.mubr.bf16.gmra.mxu0 %v5052
        %v5468 = vpop.f32.mrf.mxu0
        %v5469 = vadd.f32 %v5129, %v5468
        %v5470 = vpop.f32.mrf.mxu0
        %v5471 = vpop.f32.mrf.mxu0
        %v5472 = vadd.f32 %v5129, %v5471
        %v5473 = vpop.f32.mrf.mxu0
        %5474 = vmatprep.mubr.bf16.mxu0 %v5057
        %5475 = vmatmul.mubr.bf16.gmra.mxu0 %v5056
        %v5476 = vpop.f32.mrf.mxu0
        %v5477 = vadd.f32 %v5129, %v5476
        %v5478 = vpop.f32.mrf.mxu0
        %v5479 = vpop.f32.mrf.mxu0
        %v5480 = vadd.f32 %v5129, %v5479
        %v5481 = vpop.f32.mrf.mxu0
        %5482 = vdwg.mxu0
        %5483 = vmatprep.subr.bf16.mxu0 0
        %5484 = vmatpush1.bf16.msra.mxu0 %v5281
        %5485 = vmatprep.subr.bf16.mxu0 0
        %5486 = vmatpush1.bf16.msra.mxu0 %v5280
        %5487 = vmatprep.subr.bf16.mxu0 0
        %5488 = vmatpush1.bf16.msra.mxu0 %v5279
        %5489 = vmatprep.subr.bf16.mxu0 0
        %5490 = vmatpush1.bf16.msra.mxu0 %v5278
        %5491 = vmatprep.subr.bf16.mxu0 0
        %5492 = vmatpush1.bf16.msra.mxu0 %v5277
        %5493 = vmatprep.subr.bf16.mxu0 0
        %5494 = vmatpush1.bf16.msra.mxu0 %v5276
        %5495 = vmatprep.subr.bf16.mxu0 0
        %5496 = vmatpush1.bf16.msra.mxu0 %v5275
        %5497 = vmatprep.subr.bf16.mxu0 0
        %5498 = vmatpush1.bf16.msra.mxu0 %v5274
        %5499 = vmatprep.subr.bf16.mxu0 0
        %5500 = vmatpush2.bf16.msra.mxu0 %v5289
        %5501 = vmatprep.subr.bf16.mxu0 0
        %5502 = vmatpush2.bf16.msra.mxu0 %v5288
        %5503 = vmatprep.subr.bf16.mxu0 0
        %5504 = vmatpush2.bf16.msra.mxu0 %v5287
        %5505 = vmatprep.subr.bf16.mxu0 0
        %5506 = vmatpush2.bf16.msra.mxu0 %v5286
        %5507 = vmatprep.subr.bf16.mxu0 0
        %5508 = vmatpush2.bf16.msra.mxu0 %v5285
        %5509 = vmatprep.subr.bf16.mxu0 0
        %5510 = vmatpush2.bf16.msra.mxu0 %v5284
        %5511 = vmatprep.subr.bf16.mxu0 0
        %5512 = vmatpush2.bf16.msra.mxu0 %v5283
        %5513 = vmatprep.subr.bf16.mxu0 0
        %5514 = vmatpush2.bf16.msra.mxu0 %v5282
        %5515 = vmatprep.mubr.bf16.mxu0 %v4999
        %5516 = vmatmul.mubr.bf16.gmra.mxu0 %v4998
        %v5517 = vpop.f32.mrf.mxu0
        %v5518 = vadd.f32 %v5357, %v5517
        %v5519 = vpop.f32.mrf.mxu0
        %v5520 = vpop.f32.mrf.mxu0
        %v5521 = vadd.f32 %v5360, %v5520
        %v5522 = vpop.f32.mrf.mxu0
        %5523 = vmatprep.mubr.bf16.mxu0 %v5003
        %5524 = vmatmul.mubr.bf16.gmra.mxu0 %v5002
        %v5525 = vpop.f32.mrf.mxu0
        %v5526 = vadd.f32 %v5365, %v5525
        %v5527 = vpop.f32.mrf.mxu0
        %v5528 = vpop.f32.mrf.mxu0
        %v5529 = vadd.f32 %v5368, %v5528
        %v5530 = vpop.f32.mrf.mxu0
        %5531 = vmatprep.mubr.bf16.mxu0 %v5007
        %5532 = vmatmul.mubr.bf16.gmra.mxu0 %v5006
        %v5533 = vpop.f32.mrf.mxu0
        %v5534 = vadd.f32 %v5373, %v5533
        %v5535 = vpop.f32.mrf.mxu0
        %v5536 = vpop.f32.mrf.mxu0
        %v5537 = vadd.f32 %v5376, %v5536
        %v5538 = vpop.f32.mrf.mxu0
        %5539 = vmatprep.mubr.bf16.mxu0 %v5011
        %5540 = vmatmul.mubr.bf16.gmra.mxu0 %v5010
        %v5541 = vpop.f32.mrf.mxu0
        %v5542 = vadd.f32 %v5381, %v5541
        %v5543 = vpop.f32.mrf.mxu0
        %v5544 = vpop.f32.mrf.mxu0
        %v5545 = vadd.f32 %v5384, %v5544
        %v5546 = vpop.f32.mrf.mxu0
        %5547 = vmatprep.mubr.bf16.mxu0 %v5015
        %5548 = vmatmul.mubr.bf16.gmra.mxu0 %v5014
        %v5549 = vpop.f32.mrf.mxu0
        %v5550 = vadd.f32 %v5389, %v5549
        %v5551 = vpop.f32.mrf.mxu0
        %v5552 = vpop.f32.mrf.mxu0
        %v5553 = vadd.f32 %v5392, %v5552
        %v5554 = vpop.f32.mrf.mxu0
        %5555 = vmatprep.mubr.bf16.mxu0 %v5019
        %5556 = vmatmul.mubr.bf16.gmra.mxu0 %v5018
        %v5557 = vpop.f32.mrf.mxu0
        %v5558 = vadd.f32 %v5397, %v5557
        %v5559 = vpop.f32.mrf.mxu0
        %v5560 = vpop.f32.mrf.mxu0
        %v5561 = vadd.f32 %v5400, %v5560
        %v5562 = vpop.f32.mrf.mxu0
        %5563 = vmatprep.mubr.bf16.mxu0 %v5023
        %5564 = vmatmul.mubr.bf16.gmra.mxu0 %v5022
        %v5565 = vpop.f32.mrf.mxu0
        %v5566 = vadd.f32 %v5405, %v5565
        %v5567 = vpop.f32.mrf.mxu0
        %v5568 = vpop.f32.mrf.mxu0
        %v5569 = vadd.f32 %v5408, %v5568
        %v5570 = vpop.f32.mrf.mxu0
        %5571 = vmatprep.mubr.bf16.mxu0 %v5027
        %5572 = vmatmul.mubr.bf16.gmra.mxu0 %v5026
        %v5573 = vpop.f32.mrf.mxu0
        %v5574 = vadd.f32 %v5413, %v5573
        %v5575 = vpop.f32.mrf.mxu0
        %v5576 = vpop.f32.mrf.mxu0
        %v5577 = vadd.f32 %v5416, %v5576
        %v5578 = vpop.f32.mrf.mxu0
        %5579 = vmatprep.mubr.bf16.mxu0 %v5031
        %5580 = vmatmul.mubr.bf16.gmra.mxu0 %v5030
        %v5581 = vpop.f32.mrf.mxu0
        %v5582 = vadd.f32 %v5421, %v5581
        %v5583 = vpop.f32.mrf.mxu0
        %v5584 = vpop.f32.mrf.mxu0
        %v5585 = vadd.f32 %v5424, %v5584
        %v5586 = vpop.f32.mrf.mxu0
        %5587 = vmatprep.mubr.bf16.mxu0 %v5035
        %5588 = vmatmul.mubr.bf16.gmra.mxu0 %v5034
        %v5589 = vpop.f32.mrf.mxu0
        %v5590 = vadd.f32 %v5429, %v5589
        %v5591 = vpop.f32.mrf.mxu0
        %v5592 = vpop.f32.mrf.mxu0
        %v5593 = vadd.f32 %v5432, %v5592
        %v5594 = vpop.f32.mrf.mxu0
        %5595 = vmatprep.mubr.bf16.mxu0 %v5039
        %5596 = vmatmul.mubr.bf16.gmra.mxu0 %v5038
        %v5597 = vpop.f32.mrf.mxu0
        %v5598 = vadd.f32 %v5437, %v5597
        %v5599 = vpop.f32.mrf.mxu0
        %v5600 = vpop.f32.mrf.mxu0
        %v5601 = vadd.f32 %v5440, %v5600
        %v5602 = vpop.f32.mrf.mxu0
        %5603 = vmatprep.mubr.bf16.mxu0 %v5043
        %5604 = vmatmul.mubr.bf16.gmra.mxu0 %v5042
        %v5605 = vpop.f32.mrf.mxu0
        %v5606 = vadd.f32 %v5445, %v5605
        %v5607 = vpop.f32.mrf.mxu0
        %v5608 = vpop.f32.mrf.mxu0
        %v5609 = vadd.f32 %v5448, %v5608
        %v5610 = vpop.f32.mrf.mxu0
        %5611 = vmatprep.mubr.bf16.mxu0 %v5047
        %5612 = vmatmul.mubr.bf16.gmra.mxu0 %v5046
        %v5613 = vpop.f32.mrf.mxu0
        %v5614 = vadd.f32 %v5453, %v5613
        %v5615 = vpop.f32.mrf.mxu0
        %v5616 = vpop.f32.mrf.mxu0
        %v5617 = vadd.f32 %v5456, %v5616
        %v5618 = vpop.f32.mrf.mxu0
        %5619 = vmatprep.mubr.bf16.mxu0 %v5051
        %5620 = vmatmul.mubr.bf16.gmra.mxu0 %v5050
        %v5621 = vpop.f32.mrf.mxu0
        %v5622 = vadd.f32 %v5461, %v5621
        %v5623 = vpop.f32.mrf.mxu0
        %v5624 = vpop.f32.mrf.mxu0
        %v5625 = vadd.f32 %v5464, %v5624
        %v5626 = vpop.f32.mrf.mxu0
        %5627 = vmatprep.mubr.bf16.mxu0 %v5055
        %5628 = vmatmul.mubr.bf16.gmra.mxu0 %v5054
        %v5629 = vpop.f32.mrf.mxu0
        %v5630 = vadd.f32 %v5469, %v5629
        %v5631 = vpop.f32.mrf.mxu0
        %v5632 = vpop.f32.mrf.mxu0
        %v5633 = vadd.f32 %v5472, %v5632
        %v5634 = vpop.f32.mrf.mxu0
        %5635 = vmatprep.mubr.bf16.mxu0 %v5059
        %5636 = vmatmul.mubr.bf16.gmra.mxu0 %v5058
        %v5637 = vpop.f32.mrf.mxu0
        %v5638 = vadd.f32 %v5477, %v5637
        %v5639 = vpop.f32.mrf.mxu0
        %v5640 = vpop.f32.mrf.mxu0
        %v5641 = vadd.f32 %v5480, %v5640
        %v5642 = vpop.f32.mrf.mxu0
        %5643 = vdwg.mxu0
        %s5644 = scalar_lea.vmem %s338, 512 [#allocation13]
        %5645 = vst [vmem:[%s5644] sm:$0xff] %v5518
        %5646 = vst [vmem:[%s5644 + $0x8] sm:$0xff] %v5521
        %5647 = vst [vmem:[%s5644 + $0x10] sm:$0xff] %v5526
        %5648 = vst [vmem:[%s5644 + $0x18] sm:$0xff] %v5529
        %5649 = vst [vmem:[%s5644 + $0x20] sm:$0xff] %v5534
        %5650 = vst [vmem:[%s5644 + $0x28] sm:$0xff] %v5537
        %5651 = vst [vmem:[%s5644 + $0x30] sm:$0xff] %v5542
        %5652 = vst [vmem:[%s5644 + $0x38] sm:$0xff] %v5545
        %5653 = vst [vmem:[%s5644 + $0x40] sm:$0xff] %v5550
        %5654 = vst [vmem:[%s5644 + $0x48] sm:$0xff] %v5553
        %5655 = vst [vmem:[%s5644 + $0x50] sm:$0xff] %v5558
        %5656 = vst [vmem:[%s5644 + $0x58] sm:$0xff] %v5561
        %5657 = vst [vmem:[%s5644 + $0x60] sm:$0xff] %v5566
        %5658 = vst [vmem:[%s5644 + $0x68] sm:$0xff] %v5569
        %5659 = vst [vmem:[%s5644 + $0x70] sm:$0xff] %v5574
        %5660 = vst [vmem:[%s5644 + $0x78] sm:$0xff] %v5577
        %5661 = vst [vmem:[%s5644 + $0x80] sm:$0xff] %v5582
        %5662 = vst [vmem:[%s5644 + $0x88] sm:$0xff] %v5585
        %5663 = vst [vmem:[%s5644 + $0x90] sm:$0xff] %v5590
        %5664 = vst [vmem:[%s5644 + $0x98] sm:$0xff] %v5593
        %5665 = vst [vmem:[%s5644 + $0xa0] sm:$0xff] %v5598
        %5666 = vst [vmem:[%s5644 + $0xa8] sm:$0xff] %v5601
        %5667 = vst [vmem:[%s5644 + $0xb0] sm:$0xff] %v5606
        %5668 = vst [vmem:[%s5644 + $0xb8] sm:$0xff] %v5609
        %5669 = vst [vmem:[%s5644 + $0xc0] sm:$0xff] %v5614
        %5670 = vst [vmem:[%s5644 + $0xc8] sm:$0xff] %v5617
        %5671 = vst [vmem:[%s5644 + $0xd0] sm:$0xff] %v5622
        %5672 = vst [vmem:[%s5644 + $0xd8] sm:$0xff] %v5625
        %5673 = vst [vmem:[%s5644 + $0xe0] sm:$0xff] %v5630
        %5674 = vst [vmem:[%s5644 + $0xe8] sm:$0xff] %v5633
        %5675 = vst [vmem:[%s5644 + $0xf0] sm:$0xff] %v5638
        %5676 = vst [vmem:[%s5644 + $0xf8] sm:$0xff] %v5641
        %s5677 = sand.u32 %s165, 1
        %s5678 = scalar_lea.sflag [#allocation4], %s5677
        %s5679 = sand.u32 %s165, 1
        %s5680 = smul.addr %s5679, 768
        %s5681 = scalar_lea.vmem [#allocation13], %s5680
        // Predicated region
        $region69: #{tpu_custom_call.1} parent=43 // pred_check
          %p5682 = pneg %p175
        $region70: #{tpu_custom_call.1} parent=43 // pred_check_branch
          %5684 = sbr.rel (%p5682) target = $region72
        $region71: #{tpu_custom_call.1} parent=43 // pred_region
          #allocation15 [shape = 'u32[6]{0}', space=smem, size = 0x18, scoped, tag = 'DMA stride descriptor']
          %s5685 = smul.u32 32, %s26
          %s5687 = ssub.s32 12288, 12288
          %5688 = vsyncadd %s5678, %s5687
          %s5689 = smul.addr %s5685, 128
          %s5690 = scalar_lea.hbm %s6, %s5689
          %s5692 = sshll.u32 1, 14
          %s5693 = sxor.u32 4294967295, %s5692
          %s5696 = sshll.u32 7, 18
          %s5697 = sxor.u32 4294967295, %s5696
          %s5698 = sand.u32 0, %s5697
          %s5700 = sor.u32 %s5698, 0
          %s5701 = sshll.u32 %s5681, 4
          %s5702 = int_to_ptr.vmem [resolvable:$true] %s5701
          %5708 = sst [smem:[#allocation15]] 4096
          %s5709 = scalar_lea.smem [#allocation15], 1
          %5710 = sst [smem:[%s5709]] 8192
          %s5711 = scalar_lea.smem [#allocation15], 2
          %5712 = sst [smem:[%s5711]] 32
          %s5713 = scalar_lea.smem [#allocation15], 3
          %5714 = sst [smem:[%s5713]] 128
          %s5715 = scalar_lea.smem [#allocation15], 4
          %5716 = sst [smem:[%s5715]] 128
          %s5717 = scalar_lea.smem [#allocation15], 5
          %5718 = sst [smem:[%s5717]] 8
          %5720 = dma.general %s5702, 12288, %s5690, %s5678, 131072, [#allocation15], %s5700, 0
        $region72: #{tpu_custom_call.1} parent=43 // pred_fallthru
          _
      $region44: #{tpu_custom_call.1} parent=5 // pred_fallthru
        _
      %p5721 = scmp.le.s32.totalorder 2, %s21
      // Predicated region
      $region73: #{tpu_custom_call.1} parent=5 // pred_check
        %p5722 = pneg %p5721
      $region74: #{tpu_custom_call.1} parent=5 // pred_check_branch
        %5724 = sbr.rel (%p5722) target = $region76
      $region75: #{tpu_custom_call.1} parent=5 // pred_region
        %s5725 = ssub.s32 %s21, 2
        // Predicated region
        $region77: #{tpu_custom_call.1} parent=75 // pred_check
          %p5726 = pneg %p181
        $region78: #{tpu_custom_call.1} parent=75 // pred_check_branch
          %5728 = sbr.rel (%p5726) target = $region80
        $region79: #{tpu_custom_call.1} parent=75 // pred_region
          %s5729 = sand.u32 %s166, 1
          %s5730 = scalar_lea.sflag [#allocation4], %s5729
          %s5731 = sand.u32 %s166, 1
          %s5732 = smul.addr %s5731, 768
          %s5733 = scalar_lea.vmem [#allocation13], %s5732
          %5734 = dma.done %s5730, 12288
        $region80: #{tpu_custom_call.1} parent=75 // pred_fallthru
          _
      $region76: #{tpu_custom_call.1} parent=5 // pred_fallthru
        _
    $region6: #{tpu_custom_call.1} parent=1 // loop_footer
      %s25 = sadd.s32 1, %s21
    $region7: #{tpu_custom_call.1} parent=1 // loop_footer_branch
      %20 = sbr.rel target = $region3
    $region8: #{tpu_custom_call.1} parent=1 // loop_exit
      _
    %5735 = vsyncpa [#allocation3], 1
    %s5736 = scalar_lea.sflag [#allocation3], 1
    %5737 = vsyncpa %s5736, 1
    %5738 = vsyncpa [#allocation6], 1
    %5739 = vsyncpa [#allocation9], 1
    %5740 = vsyncpa [#allocation12], 1
    %5741 = vsyncpa [#allocation4], 1
    %s5742 = scalar_lea.sflag [#allocation4], 1
    %5743 = vsyncpa %s5742, 1

</llo_original>
